<compile_context>
chip_gen: v7x
topology: tpu7x:2x2x1
jax: 0.10.0
libtpu: 0.0.40
codegen_flags: <defaults>
</compile_context>

<pallas_src>
import jax
import jax.numpy as jnp
from jax.experimental import pallas as pl
from jax.experimental.pallas import tpu as pltpu

LN_EPS = 1e-5     # torch.nn.LayerNorm default eps
SA_EPS = 1e-8     # SlotAttention eps


# ----------------------------------------------------------------------------
# grid (positional) helper -- identical math to build_grid() in the reference
# ----------------------------------------------------------------------------
def build_grid_jax(resolution):
    ranges = [jnp.linspace(0.0, 1.0, r) for r in resolution]
    gy, gx = jnp.meshgrid(*ranges, indexing="ij")
    grid = jnp.stack([gy, gx], axis=-1)                      # (H, W, 2)
    grid = grid.reshape(resolution[0], resolution[1], -1)[None]
    return jnp.concatenate([grid, 1.0 - grid], axis=-1)      # (1, H, W, 4)


def _ln_lastdim(x, g, b):
    m = jnp.mean(x, axis=-1, keepdims=True)
    v = jnp.mean((x - m) ** 2, axis=-1, keepdims=True)
    return (x - m) * jax.lax.rsqrt(v + LN_EPS) * g + b


# ----------------------------------------------------------------------------
# Fused kernel: encoder + SlotAttention step, grid = (B, T)
# ----------------------------------------------------------------------------
def slot_video_kernel(x_ref, pos_ref, lng_ref, lnb_ref, w1_ref, b1_ref,
                      w2_ref, b2_ref, slots0_ref,
                      lni_g, lni_b, wkv, bkv,
                      lns_g, lns_b, wq, bq,
                      w_ih, b_ih, w_hh, b_hh,
                      lnp_g, lnp_b, wf1, bf1, wf2, bf2,
                      slots_sum_ref, attn_ref,
                      slots_carry):
    t = pl.program_id(1)
    D = slots_carry.shape[-1]
    scale = D ** (-0.5)

    # ------------- encoder: pos add + joint LN([N, C]) + fc1/ReLU + fc2 ------
    x = x_ref[0, 0] + pos_ref[...]                           # (N, C)
    mean = jnp.mean(x)
    var = jnp.mean((x - mean) ** 2)
    xn = (x - mean) * jax.lax.rsqrt(var + LN_EPS)
    xn = xn * lng_ref[...] + lnb_ref[...]
    h = jnp.dot(xn, w1_ref[...], preferred_element_type=jnp.float32) + b1_ref[...]
    h = jnp.maximum(h, 0.0)
    feats = (jnp.dot(h, w2_ref[...], preferred_element_type=jnp.float32)
             + b2_ref[...])                                  # (N, D)

    # ------------- per-frame k / v (fused wk|wv matmul, lane-dense) ----------
    fn = _ln_lastdim(feats, lni_g[...], lni_b[...])
    kv = jnp.dot(fn, wkv[...], preferred_element_type=jnp.float32) + bkv[...]  # (N, 2D)
    k = kv[:, :D]
    v = kv[:, D:]

    def slot_update(slots_prev):
        # norm_slots + q projection
        sn = _ln_lastdim(slots_prev, lns_g[...], lns_b[...])
        q = jnp.dot(sn, wq[...], preferred_element_type=jnp.float32) + bq[...]  # (S, D)

        # dots[i, j] = q[i, :] . k[j, :]   -> (S, N)
        dots = jax.lax.dot_general(q, k, (((1,), (1,)), ((), ())),
                                   preferred_element_type=jnp.float32) * scale

        # softmax over the SLOT axis (torch: dots.softmax(dim=1)), + eps
        mx = jnp.max(dots, axis=0, keepdims=True)
        ex = jnp.exp(dots - mx)
        attn_ori = ex / jnp.sum(ex, axis=0, keepdims=True) + SA_EPS
        # renormalize over input positions
        attn = attn_ori / jnp.sum(attn_ori, axis=-1, keepdims=True)

        updates = jnp.dot(attn, v, preferred_element_type=jnp.float32)          # (S, D)

        # GRUCell with fused [r|z|n] gate matmuls (x = updates, h = slots_prev)
        gi = jnp.dot(updates, w_ih[...], preferred_element_type=jnp.float32) + b_ih[...]
        gh = jnp.dot(slots_prev, w_hh[...], preferred_element_type=jnp.float32) + b_hh[...]
        r = jax.nn.sigmoid(gi[:, :D] + gh[:, :D])
        z = jax.nn.sigmoid(gi[:, D:2 * D] + gh[:, D:2 * D])
        n = jnp.tanh(gi[:, 2 * D:] + r * gh[:, 2 * D:])
        slots_new = (1.0 - z) * n + z * slots_prev

        # residual MLP: slots + fc2(relu(fc1(LN(slots))))
        sp = _ln_lastdim(slots_new, lnp_g[...], lnp_b[...])
        hh = jnp.maximum(
            jnp.dot(sp, wf1[...], preferred_element_type=jnp.float32) + bf1[...], 0.0)
        slots_new = slots_new + (jnp.dot(hh, wf2[...],
                                         preferred_element_type=jnp.float32) + bf2[...])
        return slots_new, attn_ori

    # t == 0: zero the per-b accumulator and run the reference's warm-start
    # step on frame 0 starting from the learned slot init.
    @pl.when(t == 0)
    def _():
        warm, _ = slot_update(slots0_ref[...])
        slots_carry[...] = warm
        slots_sum_ref[0] = jnp.zeros(slots_carry.shape, slots_carry.dtype)

    slots_new, attn_ori = slot_update(slots_carry[...])
    slots_carry[...] = slots_new
    slots_sum_ref[0] = slots_sum_ref[0] + slots_new          # resident accumulator
    attn_ref[0, 0] = attn_ori


# ----------------------------------------------------------------------------
# Full SLOT_VIDEO forward (post-backbone part)
# ----------------------------------------------------------------------------
def slot_video_forward(x, params):
    # x: (B, C, T, H, W) backbone features
    B, C, T, H, W = x.shape
    N = H * W
    xt = jnp.transpose(x, (0, 2, 3, 4, 1)).reshape(B, T, N, C)

    # positional embedding (tiny glue, same for every frame)
    grid_pos = build_grid_jax((H, W)).reshape(N, 4)
    pos = grid_pos @ params["w_emb"] + params["b_emb"]       # (N, C)

    # fuse weight matrices so matmul outputs are lane-dense
    wkv = jnp.concatenate([params["wk"], params["wv"]], axis=1)
    bkv = jnp.concatenate([params["bk"], params["bv"]], axis=1)
    w_ih = jnp.concatenate([params["wir"], params["wiz"], params["win"]], axis=1)
    b_ih = jnp.concatenate([params["bir"], params["biz"], params["bin"]], axis=1)
    w_hh = jnp.concatenate([params["whr"], params["whz"], params["whn"]], axis=1)
    b_hh = jnp.concatenate([params["bhr"], params["bhz"], params["bhn"]], axis=1)

    slots0 = params["slots_init"][0]                         # (S, D2)
    S, D2 = slots0.shape

    weight_args = [pos, params["ln_g"], params["ln_b"],
                   params["w1"], params["b1"], params["w2"], params["b2"],
                   slots0,
                   params["lni_g"], params["lni_b"], wkv, bkv,
                   params["lns_g"], params["lns_b"], params["wq"], params["bq"],
                   w_ih, b_ih, w_hh, b_hh,
                   params["lnp_g"], params["lnp_b"],
                   params["wf1"], params["bf1"], params["wf2"], params["bf2"]]

    in_specs = ([pl.BlockSpec((1, 1, N, C), lambda b, t: (b, t, 0, 0))]
                + [pl.BlockSpec(a.shape, lambda b, t: (0, 0)) for a in weight_args])

    out_shapes = (jax.ShapeDtypeStruct((B, S, D2), jnp.float32),
                  jax.ShapeDtypeStruct((B, T, S, N), jnp.float32))
    out_specs = (pl.BlockSpec((1, S, D2), lambda b, t: (b, 0, 0)),     # revisited over T
                 pl.BlockSpec((1, 1, S, N), lambda b, t: (b, t, 0, 0)))

    slots_sum, attns = pl.pallas_call(
        slot_video_kernel,
        out_shape=out_shapes,
        grid=(B, T),
        in_specs=in_specs,
        out_specs=out_specs,
        scratch_shapes=[pltpu.VMEM((S, D2), jnp.float32)],   # carried slot state
        compiler_params=pltpu.CompilerParams(
            dimension_semantics=("parallel", "arbitrary")),
    )(xt, *weight_args)

    # TODO(synk): Dropout (identity in eval) and Head module omitted (not provided).
    return slots_sum, attns


slot_video_forward_jit = jax.jit(slot_video_forward)


# ----------------------------------------------------------------------------
# Pure-JAX reference (for correctness check of the Pallas kernel)
# ----------------------------------------------------------------------------
def _ref_ln(x, g, b, axes):
    m = jnp.mean(x, axis=axes, keepdims=True)
    v = jnp.mean((x - m) ** 2, axis=axes, keepdims=True)
    return (x - m) / jnp.sqrt(v + LN_EPS) * g + b


def ref_slot_step(inputs, slots, p):
    D = slots.shape[-1]
    scale = D ** (-0.5)
    xn = _ref_ln(inputs, p["lni_g"], p["lni_b"], -1)
    k = xn @ p["wk"] + p["bk"]
    v = xn @ p["wv"] + p["bv"]
    sn = _ref_ln(slots, p["lns_g"], p["lns_b"], -1)
    q = sn @ p["wq"] + p["bq"]
    dots = jnp.einsum("bid,bjd->bij", q, k) * scale
    attn_ori = jax.nn.softmax(dots, axis=1) + SA_EPS
    attn = attn_ori / jnp.sum(attn_ori, axis=-1, keepdims=True)
    updates = jnp.einsum("bjd,bij->bid", v, attn)
    r = jax.nn.sigmoid(updates @ p["wir"] + p["bir"] + slots @ p["whr"] + p["bhr"])
    z = jax.nn.sigmoid(updates @ p["wiz"] + p["biz"] + slots @ p["whz"] + p["bhz"])
    n = jnp.tanh(updates @ p["win"] + p["bin"] + r * (slots @ p["whn"] + p["bhn"]))
    new = (1.0 - z) * n + z * slots
    sp = _ref_ln(new, p["lnp_g"], p["lnp_b"], -1)
    new = new + jnp.maximum(sp @ p["wf1"] + p["bf1"], 0.0) @ p["wf2"] + p["bf2"]
    return new, attn_ori


def ref_forward(x, p):
    B, C, T, H, W = x.shape
    N = H * W
    xt = jnp.transpose(x, (0, 2, 3, 4, 1)).reshape(B * T, N, C)
    grid = build_grid_jax((H, W)).reshape(N, 4)
    pos = grid @ p["w_emb"] + p["b_emb"]
    y = xt + pos
    y = _ref_ln(y, p["ln_g"], p["ln_b"], (-2, -1))
    y = jnp.maximum(y @ p["w1"] + p["b1"], 0.0) @ p["w2"] + p["b2"]
    D2 = y.shape[-1]
    feats = y.reshape(B, T, N, D2)
    S = p["slots_init"].shape[1]
    slots = jnp.broadcast_to(p["slots_init"], (B, S, D2))
    slots, _ = ref_slot_step(feats[:, 0], slots, p)
    s_list, a_list = [], []
    for f in range(T):
        slots, attn = ref_slot_step(feats[:, f], slots, p)
        s_list.append(slots)
        a_list.append(attn)
    slots_out = jnp.stack(s_list, axis=1)
    attns = jnp.stack(a_list, axis=1)
    return jnp.sum(slots_out, axis=1), attns


# ----------------------------------------------------------------------------
# Deterministic parameter init (shapes follow the module __init__, scaled down)
# ----------------------------------------------------------------------------
def init_params(key, C, D1, D2, S, N, Hff):
    keys = iter(jax.random.split(key, 48))

    def nrm(shape, scale=0.1):
        return (scale * jax.random.normal(next(keys), shape)).astype(jnp.float32)

    p = {}
    # SoftPositionEmbed: Linear(4, C)
    p["w_emb"] = nrm((4, C))
    p["b_emb"] = nrm((C,))
    # LN over [N, C]
    p["ln_g"] = jnp.ones((N, C), jnp.float32)
    p["ln_b"] = jnp.zeros((N, C), jnp.float32)
    # fc1: C -> D1, fc2: D1 -> D2
    p["w1"] = nrm((C, D1)); p["b1"] = nrm((1, D1))
    p["w2"] = nrm((D1, D2)); p["b2"] = nrm((1, D2))
    # SlotAttention slots buffer: normal(mu, |sigma|)
    mu = nrm((1, 1, D2), 1.0)
    sigma = jnp.abs(nrm((1, 1, D2), 1.0))
    noise = jax.random.normal(next(keys), (1, S, D2))
    p["slots_init"] = (mu + sigma * noise).astype(jnp.float32)
    # LayerNorms (input / slots / pre-FF)
    for nm in ("lni", "lns", "lnp"):
        p[nm + "_g"] = jnp.ones((1, D2), jnp.float32)
        p[nm + "_b"] = jnp.zeros((1, D2), jnp.float32)
    # q/k/v and GRU weight matrices (stored as (in, out) for x @ W)
    for nm in ("wq", "wk", "wv", "wir", "wiz", "win", "whr", "whz", "whn"):
        p[nm] = nrm((D2, D2))
    for nm in ("bq", "bk", "bv", "bir", "biz", "bin", "bhr", "bhz", "bhn"):
        p[nm] = nrm((1, D2))
    # slot MLP: fc1 D2 -> Hff, fc2 Hff -> D2 (Hff = max(dim, hidden_dim))
    p["wf1"] = nrm((D2, Hff)); p["bf1"] = nrm((1, Hff))
    p["wf2"] = nrm((Hff, D2)); p["bf2"] = nrm((1, D2))
    return p


if __name__ == "__main__":
    # Small shapes consistent with the module (scaled-down in_c / dims / slots)
    B, C, T, H, W = 2, 32, 4, 8, 16      # backbone features, NCTHW
    N = H * W                            # 128 spatial tokens per frame
    D1, D2 = 64, 32                      # hidden_dim, hidden_dim2 (scaled down)
    S = 8                                # num_slots (scaled down from 21)
    Hff = max(D2, D2)                    # slot-attention MLP hidden = dim

    key = jax.random.PRNGKey(0)
    kx, kp = jax.random.split(key)
    x = jax.random.normal(kx, (B, C, T, H, W), dtype=jnp.float32)
    params = init_params(kp, C, D1, D2, S, N, Hff)

    out, attns = slot_video_forward_jit(x, params)
    out = jax.block_until_ready(out)
    attns = jax.block_until_ready(attns)

    # validate against pure-JAX reference
    ref_out, ref_attns = ref_forward(x, params)
    assert out.shape == (B, S, D2) and attns.shape == (B, T, S, N)
    assert jnp.allclose(out, ref_out, atol=5e-4, rtol=5e-4), "slots mismatch"
    assert jnp.allclose(attns, ref_attns, atol=1e-5, rtol=1e-4), "attn mismatch"

    print("KERNEL_OK")
</pallas_src>

<mosaic_0001>
module attributes {stable_mosaic.version = 11 : i64} {
  func.func @slot_video_kernel(%arg0: i32, %arg1: i32, %arg2: memref<1x1x128x32xf32, #tpu.memory_space<vmem>>, %arg3: memref<128x32xf32, #tpu.memory_space<vmem>>, %arg4: memref<128x32xf32, #tpu.memory_space<vmem>>, %arg5: memref<128x32xf32, #tpu.memory_space<vmem>>, %arg6: memref<32x64xf32, #tpu.memory_space<vmem>>, %arg7: memref<1x64xf32, #tpu.memory_space<vmem>>, %arg8: memref<64x32xf32, #tpu.memory_space<vmem>>, %arg9: memref<1x32xf32, #tpu.memory_space<vmem>>, %arg10: memref<8x32xf32, #tpu.memory_space<vmem>>, %arg11: memref<1x32xf32, #tpu.memory_space<vmem>>, %arg12: memref<1x32xf32, #tpu.memory_space<vmem>>, %arg13: memref<32x64xf32, #tpu.memory_space<vmem>>, %arg14: memref<1x64xf32, #tpu.memory_space<vmem>>, %arg15: memref<1x32xf32, #tpu.memory_space<vmem>>, %arg16: memref<1x32xf32, #tpu.memory_space<vmem>>, %arg17: memref<32x32xf32, #tpu.memory_space<vmem>>, %arg18: memref<1x32xf32, #tpu.memory_space<vmem>>, %arg19: memref<32x96xf32, #tpu.memory_space<vmem>>, %arg20: memref<1x96xf32, #tpu.memory_space<vmem>>, %arg21: memref<32x96xf32, #tpu.memory_space<vmem>>, %arg22: memref<1x96xf32, #tpu.memory_space<vmem>>, %arg23: memref<1x32xf32, #tpu.memory_space<vmem>>, %arg24: memref<1x32xf32, #tpu.memory_space<vmem>>, %arg25: memref<32x32xf32, #tpu.memory_space<vmem>>, %arg26: memref<1x32xf32, #tpu.memory_space<vmem>>, %arg27: memref<32x32xf32, #tpu.memory_space<vmem>>, %arg28: memref<1x32xf32, #tpu.memory_space<vmem>>, %arg29: memref<1x8x32xf32, #tpu.memory_space<vmem>>, %arg30: memref<1x1x8x128xf32, #tpu.memory_space<vmem>>, %arg31: memref<8x32xf32, #tpu.memory_space<vmem>>) attributes {dimension_semantics = [#tpu.dimension_semantics<parallel>, #tpu.dimension_semantics<arbitrary>], iteration_bounds = array<i64: 2, 4>, scalar_prefetch = 0 : i64, scratch_operands = 1 : i64, tpu.core_type = #tpu.core_type<tc>, window_params = [{transform_indices = @transform_0, window_bounds = array<i64: 1, 1, 128, 32>}, {pipeline_mode = #tpu.pipeline_mode<synchronous>, transform_indices = @transform_1, window_bounds = array<i64: 128, 32>}, {pipeline_mode = #tpu.pipeline_mode<synchronous>, transform_indices = @transform_2, window_bounds = array<i64: 128, 32>}, {pipeline_mode = #tpu.pipeline_mode<synchronous>, transform_indices = @transform_3, window_bounds = array<i64: 128, 32>}, {pipeline_mode = #tpu.pipeline_mode<synchronous>, transform_indices = @transform_4, window_bounds = array<i64: 32, 64>}, {pipeline_mode = #tpu.pipeline_mode<synchronous>, transform_indices = @transform_5, window_bounds = array<i64: 1, 64>}, {pipeline_mode = #tpu.pipeline_mode<synchronous>, transform_indices = @transform_6, window_bounds = array<i64: 64, 32>}, {pipeline_mode = #tpu.pipeline_mode<synchronous>, transform_indices = @transform_7, window_bounds = array<i64: 1, 32>}, {pipeline_mode = #tpu.pipeline_mode<synchronous>, transform_indices = @transform_8, window_bounds = array<i64: 8, 32>}, {pipeline_mode = #tpu.pipeline_mode<synchronous>, transform_indices = @transform_9, window_bounds = array<i64: 1, 32>}, {pipeline_mode = #tpu.pipeline_mode<synchronous>, transform_indices = @transform_10, window_bounds = array<i64: 1, 32>}, {pipeline_mode = #tpu.pipeline_mode<synchronous>, transform_indices = @transform_11, window_bounds = array<i64: 32, 64>}, {pipeline_mode = #tpu.pipeline_mode<synchronous>, transform_indices = @transform_12, window_bounds = array<i64: 1, 64>}, {pipeline_mode = #tpu.pipeline_mode<synchronous>, transform_indices = @transform_13, window_bounds = array<i64: 1, 32>}, {pipeline_mode = #tpu.pipeline_mode<synchronous>, transform_indices = @transform_14, window_bounds = array<i64: 1, 32>}, {pipeline_mode = #tpu.pipeline_mode<synchronous>, transform_indices = @transform_15, window_bounds = array<i64: 32, 32>}, {pipeline_mode = #tpu.pipeline_mode<synchronous>, transform_indices = @transform_16, window_bounds = array<i64: 1, 32>}, {pipeline_mode = #tpu.pipeline_mode<synchronous>, transform_indices = @transform_17, window_bounds = array<i64: 32, 96>}, {pipeline_mode = #tpu.pipeline_mode<synchronous>, transform_indices = @transform_18, window_bounds = array<i64: 1, 96>}, {pipeline_mode = #tpu.pipeline_mode<synchronous>, transform_indices = @transform_19, window_bounds = array<i64: 32, 96>}, {pipeline_mode = #tpu.pipeline_mode<synchronous>, transform_indices = @transform_20, window_bounds = array<i64: 1, 96>}, {pipeline_mode = #tpu.pipeline_mode<synchronous>, transform_indices = @transform_21, window_bounds = array<i64: 1, 32>}, {pipeline_mode = #tpu.pipeline_mode<synchronous>, transform_indices = @transform_22, window_bounds = array<i64: 1, 32>}, {pipeline_mode = #tpu.pipeline_mode<synchronous>, transform_indices = @transform_23, window_bounds = array<i64: 32, 32>}, {pipeline_mode = #tpu.pipeline_mode<synchronous>, transform_indices = @transform_24, window_bounds = array<i64: 1, 32>}, {pipeline_mode = #tpu.pipeline_mode<synchronous>, transform_indices = @transform_25, window_bounds = array<i64: 32, 32>}, {pipeline_mode = #tpu.pipeline_mode<synchronous>, transform_indices = @transform_26, window_bounds = array<i64: 1, 32>}, {transform_indices = @transform_27, window_bounds = array<i64: 1, 8, 32>}, {transform_indices = @transform_28, window_bounds = array<i64: 1, 1, 8, 128>}]} {
    %c0 = arith.constant 0 : index
    %c0_0 = arith.constant 0 : index
    %c0_1 = arith.constant 0 : index
    %c0_2 = arith.constant 0 : index
    %0 = vector.load %arg2[%c0, %c0_0, %c0_1, %c0_2] : memref<1x1x128x32xf32, #tpu.memory_space<vmem>>, vector<1x1x128x32xf32>
    %1 = vector.shape_cast %0 : vector<1x1x128x32xf32> to vector<128x32xf32>
    %c0_3 = arith.constant 0 : index
    %c0_4 = arith.constant 0 : index
    %2 = vector.load %arg3[%c0_3, %c0_4] : memref<128x32xf32, #tpu.memory_space<vmem>>, vector<128x32xf32>
    %3 = arith.addf %1, %2 : vector<128x32xf32>
    %4 = vector.shape_cast %3 : vector<128x32xf32> to vector<1x128x32xf32>
    %cst = arith.constant dense<0.000000e+00> : vector<1xf32>
    %5 = vector.multi_reduction <add>, %4, %cst [1, 2] : vector<1x128x32xf32> to vector<1xf32>
    %6 = vector.shape_cast %5 : vector<1xf32> to vector<1x1x1xf32>
    %7 = vector.extract %6[0, 0, 0] : f32 from vector<1x1x1xf32>
    %cst_5 = arith.constant 4.096000e+03 : f32
    %8 = arith.divf %7, %cst_5 : f32
    %9 = vector.broadcast %8 : f32 to vector<128x32xf32>
    %10 = arith.subf %3, %9 : vector<128x32xf32>
    %11 = arith.mulf %10, %10 : vector<128x32xf32>
    %12 = vector.shape_cast %11 : vector<128x32xf32> to vector<1x128x32xf32>
    %cst_6 = arith.constant dense<0.000000e+00> : vector<1xf32>
    %13 = vector.multi_reduction <add>, %12, %cst_6 [1, 2] : vector<1x128x32xf32> to vector<1xf32>
    %14 = vector.shape_cast %13 : vector<1xf32> to vector<1x1x1xf32>
    %15 = vector.extract %14[0, 0, 0] : f32 from vector<1x1x1xf32>
    %cst_7 = arith.constant 4.096000e+03 : f32
    %16 = arith.divf %15, %cst_7 : f32
    %17 = vector.broadcast %8 : f32 to vector<128x32xf32>
    %18 = arith.subf %3, %17 : vector<128x32xf32>
    %cst_8 = arith.constant 9.99999974E-6 : f32
    %19 = arith.addf %16, %cst_8 : f32
    %20 = math.rsqrt %19 : f32
    %21 = vector.broadcast %20 : f32 to vector<128x32xf32>
    %22 = arith.mulf %18, %21 : vector<128x32xf32>
    %c0_9 = arith.constant 0 : index
    %c0_10 = arith.constant 0 : index
    %23 = vector.load %arg4[%c0_9, %c0_10] : memref<128x32xf32, #tpu.memory_space<vmem>>, vector<128x32xf32>
    %24 = arith.mulf %22, %23 : vector<128x32xf32>
    %c0_11 = arith.constant 0 : index
    %c0_12 = arith.constant 0 : index
    %25 = vector.load %arg5[%c0_11, %c0_12] : memref<128x32xf32, #tpu.memory_space<vmem>>, vector<128x32xf32>
    %26 = arith.addf %24, %25 : vector<128x32xf32>
    %c0_13 = arith.constant 0 : index
    %c0_14 = arith.constant 0 : index
    %27 = vector.load %arg6[%c0_13, %c0_14] : memref<32x64xf32, #tpu.memory_space<vmem>>, vector<32x64xf32>
    %cst_15 = arith.constant dense<0.000000e+00> : vector<128x64xf32>
    %28 = tpu.matmul %26, %27, %cst_15 {dimension_numbers = #tpu.dot_dimension_numbers<[1], [0], [0], [1], [0, 0, 1, 1], [], []>} : vector<128x32xf32>, vector<32x64xf32>, vector<128x64xf32> -> vector<128x64xf32>
    %c0_16 = arith.constant 0 : index
    %c0_17 = arith.constant 0 : index
    %29 = vector.load %arg7[%c0_16, %c0_17] : memref<1x64xf32, #tpu.memory_space<vmem>>, vector<1x64xf32>
    %30 = vector.broadcast %29 : vector<1x64xf32> to vector<128x64xf32>
    %31 = arith.addf %28, %30 : vector<128x64xf32>
    %cst_18 = arith.constant 0.000000e+00 : f32
    %32 = vector.broadcast %cst_18 : f32 to vector<128x64xf32>
    %33 = arith.maximumf %31, %32 : vector<128x64xf32>
    %c0_19 = arith.constant 0 : index
    %c0_20 = arith.constant 0 : index
    %34 = vector.load %arg8[%c0_19, %c0_20] : memref<64x32xf32, #tpu.memory_space<vmem>>, vector<64x32xf32>
    %cst_21 = arith.constant dense<0.000000e+00> : vector<128x32xf32>
    %35 = tpu.matmul %33, %34, %cst_21 {dimension_numbers = #tpu.dot_dimension_numbers<[1], [0], [0], [1], [0, 0, 1, 1], [], []>} : vector<128x64xf32>, vector<64x32xf32>, vector<128x32xf32> -> vector<128x32xf32>
    %c0_22 = arith.constant 0 : index
    %c0_23 = arith.constant 0 : index
    %36 = vector.load %arg9[%c0_22, %c0_23] : memref<1x32xf32, #tpu.memory_space<vmem>>, vector<1x32xf32>
    %37 = vector.broadcast %36 : vector<1x32xf32> to vector<128x32xf32>
    %38 = arith.addf %35, %37 : vector<128x32xf32>
    %c0_24 = arith.constant 0 : index
    %c0_25 = arith.constant 0 : index
    %39 = vector.load %arg11[%c0_24, %c0_25] : memref<1x32xf32, #tpu.memory_space<vmem>>, vector<1x32xf32>
    %c0_26 = arith.constant 0 : index
    %c0_27 = arith.constant 0 : index
    %40 = vector.load %arg12[%c0_26, %c0_27] : memref<1x32xf32, #tpu.memory_space<vmem>>, vector<1x32xf32>
    %cst_28 = arith.constant dense<0.000000e+00> : vector<128xf32>
    %41 = vector.multi_reduction <add>, %38, %cst_28 [1] : vector<128x32xf32> to vector<128xf32>
    %42 = vector.shape_cast %41 : vector<128xf32> to vector<128x1xf32>
    %cst_29 = arith.constant 3.200000e+01 : f32
    %43 = vector.broadcast %cst_29 : f32 to vector<128x1xf32>
    %44 = arith.divf %42, %43 : vector<128x1xf32>
    %45 = vector.broadcast %44 : vector<128x1xf32> to vector<128x32xf32>
    %46 = arith.subf %38, %45 : vector<128x32xf32>
    %47 = arith.mulf %46, %46 : vector<128x32xf32>
    %cst_30 = arith.constant dense<0.000000e+00> : vector<128xf32>
    %48 = vector.multi_reduction <add>, %47, %cst_30 [1] : vector<128x32xf32> to vector<128xf32>
    %49 = vector.shape_cast %48 : vector<128xf32> to vector<128x1xf32>
    %cst_31 = arith.constant 3.200000e+01 : f32
    %50 = vector.broadcast %cst_31 : f32 to vector<128x1xf32>
    %51 = arith.divf %49, %50 : vector<128x1xf32>
    %52 = vector.broadcast %44 : vector<128x1xf32> to vector<128x32xf32>
    %53 = arith.subf %38, %52 : vector<128x32xf32>
    %cst_32 = arith.constant 9.99999974E-6 : f32
    %54 = vector.broadcast %cst_32 : f32 to vector<128x1xf32>
    %55 = arith.addf %51, %54 : vector<128x1xf32>
    %56 = math.rsqrt %55 : vector<128x1xf32>
    %57 = vector.broadcast %56 : vector<128x1xf32> to vector<128x32xf32>
    %58 = arith.mulf %53, %57 : vector<128x32xf32>
    %59 = vector.broadcast %39 : vector<1x32xf32> to vector<128x32xf32>
    %60 = arith.mulf %58, %59 : vector<128x32xf32>
    %61 = vector.broadcast %40 : vector<1x32xf32> to vector<128x32xf32>
    %62 = arith.addf %60, %61 : vector<128x32xf32>
    %c0_33 = arith.constant 0 : index
    %c0_34 = arith.constant 0 : index
    %63 = vector.load %arg13[%c0_33, %c0_34] : memref<32x64xf32, #tpu.memory_space<vmem>>, vector<32x64xf32>
    %cst_35 = arith.constant dense<0.000000e+00> : vector<128x64xf32>
    %64 = tpu.matmul %62, %63, %cst_35 {dimension_numbers = #tpu.dot_dimension_numbers<[1], [0], [0], [1], [0, 0, 1, 1], [], []>} : vector<128x32xf32>, vector<32x64xf32>, vector<128x64xf32> -> vector<128x64xf32>
    %c0_36 = arith.constant 0 : index
    %c0_37 = arith.constant 0 : index
    %65 = vector.load %arg14[%c0_36, %c0_37] : memref<1x64xf32, #tpu.memory_space<vmem>>, vector<1x64xf32>
    %66 = vector.broadcast %65 : vector<1x64xf32> to vector<128x64xf32>
    %67 = arith.addf %64, %66 : vector<128x64xf32>
    %68 = vector.extract_strided_slice %67 {offsets = [0, 0], sizes = [128, 32], strides = [1, 1]} : vector<128x64xf32> to vector<128x32xf32>
    %69 = vector.extract_strided_slice %67 {offsets = [0, 32], sizes = [128, 32], strides = [1, 1]} : vector<128x64xf32> to vector<128x32xf32>
    %c0_i32 = arith.constant 0 : i32
    %70 = arith.cmpi eq, %arg1, %c0_i32 : i32
    %71 = arith.extui %70 : i1 to i32
    %c0_i32_38 = arith.constant 0 : i32
    %72 = arith.cmpi ne, %71, %c0_i32_38 : i32
    scf.if %72 {
      %c0_107 = arith.constant 0 : index
      %c0_108 = arith.constant 0 : index
      %205 = vector.load %arg10[%c0_107, %c0_108] : memref<8x32xf32, #tpu.memory_space<vmem>>, vector<8x32xf32>
      %c0_109 = arith.constant 0 : index
      %c0_110 = arith.constant 0 : index
      %206 = vector.load %arg15[%c0_109, %c0_110] : memref<1x32xf32, #tpu.memory_space<vmem>>, vector<1x32xf32>
      %c0_111 = arith.constant 0 : index
      %c0_112 = arith.constant 0 : index
      %207 = vector.load %arg16[%c0_111, %c0_112] : memref<1x32xf32, #tpu.memory_space<vmem>>, vector<1x32xf32>
      %cst_113 = arith.constant dense<0.000000e+00> : vector<8xf32>
      %208 = vector.multi_reduction <add>, %205, %cst_113 [1] : vector<8x32xf32> to vector<8xf32>
      %209 = vector.shape_cast %208 : vector<8xf32> to vector<8x1xf32>
      %cst_114 = arith.constant 3.200000e+01 : f32
      %210 = vector.broadcast %cst_114 : f32 to vector<8x1xf32>
      %211 = arith.divf %209, %210 : vector<8x1xf32>
      %212 = vector.broadcast %211 : vector<8x1xf32> to vector<8x32xf32>
      %213 = arith.subf %205, %212 : vector<8x32xf32>
      %214 = arith.mulf %213, %213 : vector<8x32xf32>
      %cst_115 = arith.constant dense<0.000000e+00> : vector<8xf32>
      %215 = vector.multi_reduction <add>, %214, %cst_115 [1] : vector<8x32xf32> to vector<8xf32>
      %216 = vector.shape_cast %215 : vector<8xf32> to vector<8x1xf32>
      %cst_116 = arith.constant 3.200000e+01 : f32
      %217 = vector.broadcast %cst_116 : f32 to vector<8x1xf32>
      %218 = arith.divf %216, %217 : vector<8x1xf32>
      %219 = vector.broadcast %211 : vector<8x1xf32> to vector<8x32xf32>
      %220 = arith.subf %205, %219 : vector<8x32xf32>
      %cst_117 = arith.constant 9.99999974E-6 : f32
      %221 = vector.broadcast %cst_117 : f32 to vector<8x1xf32>
      %222 = arith.addf %218, %221 : vector<8x1xf32>
      %223 = math.rsqrt %222 : vector<8x1xf32>
      %224 = vector.broadcast %223 : vector<8x1xf32> to vector<8x32xf32>
      %225 = arith.mulf %220, %224 : vector<8x32xf32>
      %226 = vector.broadcast %206 : vector<1x32xf32> to vector<8x32xf32>
      %227 = arith.mulf %225, %226 : vector<8x32xf32>
      %228 = vector.broadcast %207 : vector<1x32xf32> to vector<8x32xf32>
      %229 = arith.addf %227, %228 : vector<8x32xf32>
      %c0_118 = arith.constant 0 : index
      %c0_119 = arith.constant 0 : index
      %230 = vector.load %arg17[%c0_118, %c0_119] : memref<32x32xf32, #tpu.memory_space<vmem>>, vector<32x32xf32>
      %cst_120 = arith.constant dense<0.000000e+00> : vector<8x32xf32>
      %231 = tpu.matmul %229, %230, %cst_120 {dimension_numbers = #tpu.dot_dimension_numbers<[1], [0], [0], [1], [0, 0, 1, 1], [], []>} : vector<8x32xf32>, vector<32x32xf32>, vector<8x32xf32> -> vector<8x32xf32>
      %c0_121 = arith.constant 0 : index
      %c0_122 = arith.constant 0 : index
      %232 = vector.load %arg18[%c0_121, %c0_122] : memref<1x32xf32, #tpu.memory_space<vmem>>, vector<1x32xf32>
      %233 = vector.broadcast %232 : vector<1x32xf32> to vector<8x32xf32>
      %234 = arith.addf %231, %233 : vector<8x32xf32>
      %cst_123 = arith.constant dense<0.000000e+00> : vector<8x128xf32>
      %235 = tpu.matmul %234, %68, %cst_123 {dimension_numbers = #tpu.dot_dimension_numbers<[1], [1], [0], [0], [0, 0, 1, 0], [], []>} : vector<8x32xf32>, vector<128x32xf32>, vector<8x128xf32> -> vector<8x128xf32>
      %cst_124 = arith.constant 0.176776692 : f32
      %236 = vector.broadcast %cst_124 : f32 to vector<8x128xf32>
      %237 = arith.mulf %235, %236 : vector<8x128xf32>
      %cst_125 = arith.constant dense<0xFF800000> : vector<128xf32>
      %238 = vector.multi_reduction <maximumf>, %237, %cst_125 [0] : vector<8x128xf32> to vector<128xf32>
      %239 = vector.shape_cast %238 : vector<128xf32> to vector<1x128xf32>
      %240 = vector.broadcast %239 : vector<1x128xf32> to vector<8x128xf32>
      %241 = arith.subf %237, %240 : vector<8x128xf32>
      %242 = math.exp %241 : vector<8x128xf32>
      %cst_126 = arith.constant dense<0.000000e+00> : vector<128xf32>
      %243 = vector.multi_reduction <add>, %242, %cst_126 [0] : vector<8x128xf32> to vector<128xf32>
      %244 = vector.shape_cast %243 : vector<128xf32> to vector<1x128xf32>
      %245 = vector.broadcast %244 : vector<1x128xf32> to vector<8x128xf32>
      %246 = arith.divf %242, %245 : vector<8x128xf32>
      %cst_127 = arith.constant 9.99999993E-9 : f32
      %247 = vector.broadcast %cst_127 : f32 to vector<8x128xf32>
      %248 = arith.addf %246, %247 : vector<8x128xf32>
      %cst_128 = arith.constant dense<0.000000e+00> : vector<8xf32>
      %249 = vector.multi_reduction <add>, %248, %cst_128 [1] : vector<8x128xf32> to vector<8xf32>
      %250 = vector.shape_cast %249 : vector<8xf32> to vector<8x1xf32>
      %251 = vector.broadcast %250 : vector<8x1xf32> to vector<8x128xf32>
      %252 = arith.divf %248, %251 : vector<8x128xf32>
      %cst_129 = arith.constant dense<0.000000e+00> : vector<8x32xf32>
      %253 = tpu.matmul %252, %69, %cst_129 {dimension_numbers = #tpu.dot_dimension_numbers<[1], [0], [0], [1], [0, 0, 1, 1], [], []>} : vector<8x128xf32>, vector<128x32xf32>, vector<8x32xf32> -> vector<8x32xf32>
      %c0_130 = arith.constant 0 : index
      %c0_131 = arith.constant 0 : index
      %254 = vector.load %arg19[%c0_130, %c0_131] : memref<32x96xf32, #tpu.memory_space<vmem>>, vector<32x96xf32>
      %cst_132 = arith.constant dense<0.000000e+00> : vector<8x96xf32>
      %255 = tpu.matmul %253, %254, %cst_132 {dimension_numbers = #tpu.dot_dimension_numbers<[1], [0], [0], [1], [0, 0, 1, 1], [], []>} : vector<8x32xf32>, vector<32x96xf32>, vector<8x96xf32> -> vector<8x96xf32>
      %c0_133 = arith.constant 0 : index
      %c0_134 = arith.constant 0 : index
      %256 = vector.load %arg20[%c0_133, %c0_134] : memref<1x96xf32, #tpu.memory_space<vmem>>, vector<1x96xf32>
      %257 = vector.broadcast %256 : vector<1x96xf32> to vector<8x96xf32>
      %258 = arith.addf %255, %257 : vector<8x96xf32>
      %c0_135 = arith.constant 0 : index
      %c0_136 = arith.constant 0 : index
      %259 = vector.load %arg21[%c0_135, %c0_136] : memref<32x96xf32, #tpu.memory_space<vmem>>, vector<32x96xf32>
      %cst_137 = arith.constant dense<0.000000e+00> : vector<8x96xf32>
      %260 = tpu.matmul %205, %259, %cst_137 {dimension_numbers = #tpu.dot_dimension_numbers<[1], [0], [0], [1], [0, 0, 1, 1], [], []>} : vector<8x32xf32>, vector<32x96xf32>, vector<8x96xf32> -> vector<8x96xf32>
      %c0_138 = arith.constant 0 : index
      %c0_139 = arith.constant 0 : index
      %261 = vector.load %arg22[%c0_138, %c0_139] : memref<1x96xf32, #tpu.memory_space<vmem>>, vector<1x96xf32>
      %262 = vector.broadcast %261 : vector<1x96xf32> to vector<8x96xf32>
      %263 = arith.addf %260, %262 : vector<8x96xf32>
      %264 = vector.extract_strided_slice %258 {offsets = [0, 0], sizes = [8, 32], strides = [1, 1]} : vector<8x96xf32> to vector<8x32xf32>
      %265 = vector.extract_strided_slice %263 {offsets = [0, 0], sizes = [8, 32], strides = [1, 1]} : vector<8x96xf32> to vector<8x32xf32>
      %266 = arith.addf %264, %265 : vector<8x32xf32>
      %267 = arith.negf %266 : vector<8x32xf32>
      %268 = math.exp %267 : vector<8x32xf32>
      %cst_140 = arith.constant 1.000000e+00 : f32
      %269 = vector.broadcast %cst_140 : f32 to vector<8x32xf32>
      %270 = arith.addf %269, %268 : vector<8x32xf32>
      %271 = arith.divf %269, %270 : vector<8x32xf32>
      %272 = vector.extract_strided_slice %258 {offsets = [0, 32], sizes = [8, 32], strides = [1, 1]} : vector<8x96xf32> to vector<8x32xf32>
      %273 = vector.extract_strided_slice %263 {offsets = [0, 32], sizes = [8, 32], strides = [1, 1]} : vector<8x96xf32> to vector<8x32xf32>
      %274 = arith.addf %272, %273 : vector<8x32xf32>
      %275 = arith.negf %274 : vector<8x32xf32>
      %276 = math.exp %275 : vector<8x32xf32>
      %cst_141 = arith.constant 1.000000e+00 : f32
      %277 = vector.broadcast %cst_141 : f32 to vector<8x32xf32>
      %278 = arith.addf %277, %276 : vector<8x32xf32>
      %279 = arith.divf %277, %278 : vector<8x32xf32>
      %280 = vector.extract_strided_slice %258 {offsets = [0, 64], sizes = [8, 32], strides = [1, 1]} : vector<8x96xf32> to vector<8x32xf32>
      %281 = vector.extract_strided_slice %263 {offsets = [0, 64], sizes = [8, 32], strides = [1, 1]} : vector<8x96xf32> to vector<8x32xf32>
      %282 = arith.mulf %271, %281 : vector<8x32xf32>
      %283 = arith.addf %280, %282 : vector<8x32xf32>
      %284 = math.tanh %283 : vector<8x32xf32>
      %cst_142 = arith.constant 1.000000e+00 : f32
      %285 = vector.broadcast %cst_142 : f32 to vector<8x32xf32>
      %286 = arith.subf %285, %279 : vector<8x32xf32>
      %287 = arith.mulf %286, %284 : vector<8x32xf32>
      %288 = arith.mulf %279, %205 : vector<8x32xf32>
      %289 = arith.addf %287, %288 : vector<8x32xf32>
      %c0_143 = arith.constant 0 : index
      %c0_144 = arith.constant 0 : index
      %290 = vector.load %arg23[%c0_143, %c0_144] : memref<1x32xf32, #tpu.memory_space<vmem>>, vector<1x32xf32>
      %c0_145 = arith.constant 0 : index
      %c0_146 = arith.constant 0 : index
      %291 = vector.load %arg24[%c0_145, %c0_146] : memref<1x32xf32, #tpu.memory_space<vmem>>, vector<1x32xf32>
      %cst_147 = arith.constant dense<0.000000e+00> : vector<8xf32>
      %292 = vector.multi_reduction <add>, %289, %cst_147 [1] : vector<8x32xf32> to vector<8xf32>
      %293 = vector.shape_cast %292 : vector<8xf32> to vector<8x1xf32>
      %cst_148 = arith.constant 3.200000e+01 : f32
      %294 = vector.broadcast %cst_148 : f32 to vector<8x1xf32>
      %295 = arith.divf %293, %294 : vector<8x1xf32>
      %296 = vector.broadcast %295 : vector<8x1xf32> to vector<8x32xf32>
      %297 = arith.subf %289, %296 : vector<8x32xf32>
      %298 = arith.mulf %297, %297 : vector<8x32xf32>
      %cst_149 = arith.constant dense<0.000000e+00> : vector<8xf32>
      %299 = vector.multi_reduction <add>, %298, %cst_149 [1] : vector<8x32xf32> to vector<8xf32>
      %300 = vector.shape_cast %299 : vector<8xf32> to vector<8x1xf32>
      %cst_150 = arith.constant 3.200000e+01 : f32
      %301 = vector.broadcast %cst_150 : f32 to vector<8x1xf32>
      %302 = arith.divf %300, %301 : vector<8x1xf32>
      %303 = vector.broadcast %295 : vector<8x1xf32> to vector<8x32xf32>
      %304 = arith.subf %289, %303 : vector<8x32xf32>
      %cst_151 = arith.constant 9.99999974E-6 : f32
      %305 = vector.broadcast %cst_151 : f32 to vector<8x1xf32>
      %306 = arith.addf %302, %305 : vector<8x1xf32>
      %307 = math.rsqrt %306 : vector<8x1xf32>
      %308 = vector.broadcast %307 : vector<8x1xf32> to vector<8x32xf32>
      %309 = arith.mulf %304, %308 : vector<8x32xf32>
      %310 = vector.broadcast %290 : vector<1x32xf32> to vector<8x32xf32>
      %311 = arith.mulf %309, %310 : vector<8x32xf32>
      %312 = vector.broadcast %291 : vector<1x32xf32> to vector<8x32xf32>
      %313 = arith.addf %311, %312 : vector<8x32xf32>
      %c0_152 = arith.constant 0 : index
      %c0_153 = arith.constant 0 : index
      %314 = vector.load %arg25[%c0_152, %c0_153] : memref<32x32xf32, #tpu.memory_space<vmem>>, vector<32x32xf32>
      %cst_154 = arith.constant dense<0.000000e+00> : vector<8x32xf32>
      %315 = tpu.matmul %313, %314, %cst_154 {dimension_numbers = #tpu.dot_dimension_numbers<[1], [0], [0], [1], [0, 0, 1, 1], [], []>} : vector<8x32xf32>, vector<32x32xf32>, vector<8x32xf32> -> vector<8x32xf32>
      %c0_155 = arith.constant 0 : index
      %c0_156 = arith.constant 0 : index
      %316 = vector.load %arg26[%c0_155, %c0_156] : memref<1x32xf32, #tpu.memory_space<vmem>>, vector<1x32xf32>
      %317 = vector.broadcast %316 : vector<1x32xf32> to vector<8x32xf32>
      %318 = arith.addf %315, %317 : vector<8x32xf32>
      %cst_157 = arith.constant 0.000000e+00 : f32
      %319 = vector.broadcast %cst_157 : f32 to vector<8x32xf32>
      %320 = arith.maximumf %318, %319 : vector<8x32xf32>
      %c0_158 = arith.constant 0 : index
      %c0_159 = arith.constant 0 : index
      %321 = vector.load %arg27[%c0_158, %c0_159] : memref<32x32xf32, #tpu.memory_space<vmem>>, vector<32x32xf32>
      %cst_160 = arith.constant dense<0.000000e+00> : vector<8x32xf32>
      %322 = tpu.matmul %320, %321, %cst_160 {dimension_numbers = #tpu.dot_dimension_numbers<[1], [0], [0], [1], [0, 0, 1, 1], [], []>} : vector<8x32xf32>, vector<32x32xf32>, vector<8x32xf32> -> vector<8x32xf32>
      %c0_161 = arith.constant 0 : index
      %c0_162 = arith.constant 0 : index
      %323 = vector.load %arg28[%c0_161, %c0_162] : memref<1x32xf32, #tpu.memory_space<vmem>>, vector<1x32xf32>
      %324 = vector.broadcast %323 : vector<1x32xf32> to vector<8x32xf32>
      %325 = arith.addf %322, %324 : vector<8x32xf32>
      %326 = arith.addf %289, %325 : vector<8x32xf32>
      %c0_163 = arith.constant 0 : index
      %c0_164 = arith.constant 0 : index
      %327 = vector.load %arg31[%c0_163, %c0_164] : memref<8x32xf32, #tpu.memory_space<vmem>>, vector<8x32xf32>
      tpu.vector_store %arg31[%c0_163, %c0_164], %326 {strides = array<i32>} : memref<8x32xf32, #tpu.memory_space<vmem>>, vector<8x32xf32>,
      %cst_165 = arith.constant 0.000000e+00 : f32
      %328 = vector.broadcast %cst_165 : f32 to vector<8x32xf32>
      %c0_166 = arith.constant 0 : index
      %c0_167 = arith.constant 0 : index
      %c0_168 = arith.constant 0 : index
      %329 = vector.load %arg29[%c0_166, %c0_167, %c0_168] : memref<1x8x32xf32, #tpu.memory_space<vmem>>, vector<1x8x32xf32>
      %330 = vector.shape_cast %329 : vector<1x8x32xf32> to vector<8x32xf32>
      %331 = vector.shape_cast %328 : vector<8x32xf32> to vector<1x8x32xf32>
      tpu.vector_store %arg29[%c0_166, %c0_167, %c0_168], %331 {strides = array<i32>} : memref<1x8x32xf32, #tpu.memory_space<vmem>>, vector<1x8x32xf32>,
    } else {
    }
    %c0_39 = arith.constant 0 : index
    %c0_40 = arith.constant 0 : index
    %73 = vector.load %arg31[%c0_39, %c0_40] : memref<8x32xf32, #tpu.memory_space<vmem>>, vector<8x32xf32>
    %c0_41 = arith.constant 0 : index
    %c0_42 = arith.constant 0 : index
    %74 = vector.load %arg15[%c0_41, %c0_42] : memref<1x32xf32, #tpu.memory_space<vmem>>, vector<1x32xf32>
    %c0_43 = arith.constant 0 : index
    %c0_44 = arith.constant 0 : index
    %75 = vector.load %arg16[%c0_43, %c0_44] : memref<1x32xf32, #tpu.memory_space<vmem>>, vector<1x32xf32>
    %cst_45 = arith.constant dense<0.000000e+00> : vector<8xf32>
    %76 = vector.multi_reduction <add>, %73, %cst_45 [1] : vector<8x32xf32> to vector<8xf32>
    %77 = vector.shape_cast %76 : vector<8xf32> to vector<8x1xf32>
    %cst_46 = arith.constant 3.200000e+01 : f32
    %78 = vector.broadcast %cst_46 : f32 to vector<8x1xf32>
    %79 = arith.divf %77, %78 : vector<8x1xf32>
    %80 = vector.broadcast %79 : vector<8x1xf32> to vector<8x32xf32>
    %81 = arith.subf %73, %80 : vector<8x32xf32>
    %82 = arith.mulf %81, %81 : vector<8x32xf32>
    %cst_47 = arith.constant dense<0.000000e+00> : vector<8xf32>
    %83 = vector.multi_reduction <add>, %82, %cst_47 [1] : vector<8x32xf32> to vector<8xf32>
    %84 = vector.shape_cast %83 : vector<8xf32> to vector<8x1xf32>
    %cst_48 = arith.constant 3.200000e+01 : f32
    %85 = vector.broadcast %cst_48 : f32 to vector<8x1xf32>
    %86 = arith.divf %84, %85 : vector<8x1xf32>
    %87 = vector.broadcast %79 : vector<8x1xf32> to vector<8x32xf32>
    %88 = arith.subf %73, %87 : vector<8x32xf32>
    %cst_49 = arith.constant 9.99999974E-6 : f32
    %89 = vector.broadcast %cst_49 : f32 to vector<8x1xf32>
    %90 = arith.addf %86, %89 : vector<8x1xf32>
    %91 = math.rsqrt %90 : vector<8x1xf32>
    %92 = vector.broadcast %91 : vector<8x1xf32> to vector<8x32xf32>
    %93 = arith.mulf %88, %92 : vector<8x32xf32>
    %94 = vector.broadcast %74 : vector<1x32xf32> to vector<8x32xf32>
    %95 = arith.mulf %93, %94 : vector<8x32xf32>
    %96 = vector.broadcast %75 : vector<1x32xf32> to vector<8x32xf32>
    %97 = arith.addf %95, %96 : vector<8x32xf32>
    %c0_50 = arith.constant 0 : index
    %c0_51 = arith.constant 0 : index
    %98 = vector.load %arg17[%c0_50, %c0_51] : memref<32x32xf32, #tpu.memory_space<vmem>>, vector<32x32xf32>
    %cst_52 = arith.constant dense<0.000000e+00> : vector<8x32xf32>
    %99 = tpu.matmul %97, %98, %cst_52 {dimension_numbers = #tpu.dot_dimension_numbers<[1], [0], [0], [1], [0, 0, 1, 1], [], []>} : vector<8x32xf32>, vector<32x32xf32>, vector<8x32xf32> -> vector<8x32xf32>
    %c0_53 = arith.constant 0 : index
    %c0_54 = arith.constant 0 : index
    %100 = vector.load %arg18[%c0_53, %c0_54] : memref<1x32xf32, #tpu.memory_space<vmem>>, vector<1x32xf32>
    %101 = vector.broadcast %100 : vector<1x32xf32> to vector<8x32xf32>
    %102 = arith.addf %99, %101 : vector<8x32xf32>
    %cst_55 = arith.constant dense<0.000000e+00> : vector<8x128xf32>
    %103 = tpu.matmul %102, %68, %cst_55 {dimension_numbers = #tpu.dot_dimension_numbers<[1], [1], [0], [0], [0, 0, 1, 0], [], []>} : vector<8x32xf32>, vector<128x32xf32>, vector<8x128xf32> -> vector<8x128xf32>
    %cst_56 = arith.constant 0.176776692 : f32
    %104 = vector.broadcast %cst_56 : f32 to vector<8x128xf32>
    %105 = arith.mulf %103, %104 : vector<8x128xf32>
    %cst_57 = arith.constant dense<0xFF800000> : vector<128xf32>
    %106 = vector.multi_reduction <maximumf>, %105, %cst_57 [0] : vector<8x128xf32> to vector<128xf32>
    %107 = vector.shape_cast %106 : vector<128xf32> to vector<1x128xf32>
    %108 = vector.broadcast %107 : vector<1x128xf32> to vector<8x128xf32>
    %109 = arith.subf %105, %108 : vector<8x128xf32>
    %110 = math.exp %109 : vector<8x128xf32>
    %cst_58 = arith.constant dense<0.000000e+00> : vector<128xf32>
    %111 = vector.multi_reduction <add>, %110, %cst_58 [0] : vector<8x128xf32> to vector<128xf32>
    %112 = vector.shape_cast %111 : vector<128xf32> to vector<1x128xf32>
    %113 = vector.broadcast %112 : vector<1x128xf32> to vector<8x128xf32>
    %114 = arith.divf %110, %113 : vector<8x128xf32>
    %cst_59 = arith.constant 9.99999993E-9 : f32
    %115 = vector.broadcast %cst_59 : f32 to vector<8x128xf32>
    %116 = arith.addf %114, %115 : vector<8x128xf32>
    %cst_60 = arith.constant dense<0.000000e+00> : vector<8xf32>
    %117 = vector.multi_reduction <add>, %116, %cst_60 [1] : vector<8x128xf32> to vector<8xf32>
    %118 = vector.shape_cast %117 : vector<8xf32> to vector<8x1xf32>
    %119 = vector.broadcast %118 : vector<8x1xf32> to vector<8x128xf32>
    %120 = arith.divf %116, %119 : vector<8x128xf32>
    %cst_61 = arith.constant dense<0.000000e+00> : vector<8x32xf32>
    %121 = tpu.matmul %120, %69, %cst_61 {dimension_numbers = #tpu.dot_dimension_numbers<[1], [0], [0], [1], [0, 0, 1, 1], [], []>} : vector<8x128xf32>, vector<128x32xf32>, vector<8x32xf32> -> vector<8x32xf32>
    %c0_62 = arith.constant 0 : index
    %c0_63 = arith.constant 0 : index
    %122 = vector.load %arg19[%c0_62, %c0_63] : memref<32x96xf32, #tpu.memory_space<vmem>>, vector<32x96xf32>
    %cst_64 = arith.constant dense<0.000000e+00> : vector<8x96xf32>
    %123 = tpu.matmul %121, %122, %cst_64 {dimension_numbers = #tpu.dot_dimension_numbers<[1], [0], [0], [1], [0, 0, 1, 1], [], []>} : vector<8x32xf32>, vector<32x96xf32>, vector<8x96xf32> -> vector<8x96xf32>
    %c0_65 = arith.constant 0 : index
    %c0_66 = arith.constant 0 : index
    %124 = vector.load %arg20[%c0_65, %c0_66] : memref<1x96xf32, #tpu.memory_space<vmem>>, vector<1x96xf32>
    %125 = vector.broadcast %124 : vector<1x96xf32> to vector<8x96xf32>
    %126 = arith.addf %123, %125 : vector<8x96xf32>
    %c0_67 = arith.constant 0 : index
    %c0_68 = arith.constant 0 : index
    %127 = vector.load %arg21[%c0_67, %c0_68] : memref<32x96xf32, #tpu.memory_space<vmem>>, vector<32x96xf32>
    %cst_69 = arith.constant dense<0.000000e+00> : vector<8x96xf32>
    %128 = tpu.matmul %73, %127, %cst_69 {dimension_numbers = #tpu.dot_dimension_numbers<[1], [0], [0], [1], [0, 0, 1, 1], [], []>} : vector<8x32xf32>, vector<32x96xf32>, vector<8x96xf32> -> vector<8x96xf32>
    %c0_70 = arith.constant 0 : index
    %c0_71 = arith.constant 0 : index
    %129 = vector.load %arg22[%c0_70, %c0_71] : memref<1x96xf32, #tpu.memory_space<vmem>>, vector<1x96xf32>
    %130 = vector.broadcast %129 : vector<1x96xf32> to vector<8x96xf32>
    %131 = arith.addf %128, %130 : vector<8x96xf32>
    %132 = vector.extract_strided_slice %126 {offsets = [0, 0], sizes = [8, 32], strides = [1, 1]} : vector<8x96xf32> to vector<8x32xf32>
    %133 = vector.extract_strided_slice %131 {offsets = [0, 0], sizes = [8, 32], strides = [1, 1]} : vector<8x96xf32> to vector<8x32xf32>
    %134 = arith.addf %132, %133 : vector<8x32xf32>
    %135 = arith.negf %134 : vector<8x32xf32>
    %136 = math.exp %135 : vector<8x32xf32>
    %cst_72 = arith.constant 1.000000e+00 : f32
    %137 = vector.broadcast %cst_72 : f32 to vector<8x32xf32>
    %138 = arith.addf %137, %136 : vector<8x32xf32>
    %139 = arith.divf %137, %138 : vector<8x32xf32>
    %140 = vector.extract_strided_slice %126 {offsets = [0, 32], sizes = [8, 32], strides = [1, 1]} : vector<8x96xf32> to vector<8x32xf32>
    %141 = vector.extract_strided_slice %131 {offsets = [0, 32], sizes = [8, 32], strides = [1, 1]} : vector<8x96xf32> to vector<8x32xf32>
    %142 = arith.addf %140, %141 : vector<8x32xf32>
    %143 = arith.negf %142 : vector<8x32xf32>
    %144 = math.exp %143 : vector<8x32xf32>
    %cst_73 = arith.constant 1.000000e+00 : f32
    %145 = vector.broadcast %cst_73 : f32 to vector<8x32xf32>
    %146 = arith.addf %145, %144 : vector<8x32xf32>
    %147 = arith.divf %145, %146 : vector<8x32xf32>
    %148 = vector.extract_strided_slice %126 {offsets = [0, 64], sizes = [8, 32], strides = [1, 1]} : vector<8x96xf32> to vector<8x32xf32>
    %149 = vector.extract_strided_slice %131 {offsets = [0, 64], sizes = [8, 32], strides = [1, 1]} : vector<8x96xf32> to vector<8x32xf32>
    %150 = arith.mulf %139, %149 : vector<8x32xf32>
    %151 = arith.addf %148, %150 : vector<8x32xf32>
    %152 = math.tanh %151 : vector<8x32xf32>
    %cst_74 = arith.constant 1.000000e+00 : f32
    %153 = vector.broadcast %cst_74 : f32 to vector<8x32xf32>
    %154 = arith.subf %153, %147 : vector<8x32xf32>
    %155 = arith.mulf %154, %152 : vector<8x32xf32>
    %156 = arith.mulf %147, %73 : vector<8x32xf32>
    %157 = arith.addf %155, %156 : vector<8x32xf32>
    %c0_75 = arith.constant 0 : index
    %c0_76 = arith.constant 0 : index
    %158 = vector.load %arg23[%c0_75, %c0_76] : memref<1x32xf32, #tpu.memory_space<vmem>>, vector<1x32xf32>
    %c0_77 = arith.constant 0 : index
    %c0_78 = arith.constant 0 : index
    %159 = vector.load %arg24[%c0_77, %c0_78] : memref<1x32xf32, #tpu.memory_space<vmem>>, vector<1x32xf32>
    %cst_79 = arith.constant dense<0.000000e+00> : vector<8xf32>
    %160 = vector.multi_reduction <add>, %157, %cst_79 [1] : vector<8x32xf32> to vector<8xf32>
    %161 = vector.shape_cast %160 : vector<8xf32> to vector<8x1xf32>
    %cst_80 = arith.constant 3.200000e+01 : f32
    %162 = vector.broadcast %cst_80 : f32 to vector<8x1xf32>
    %163 = arith.divf %161, %162 : vector<8x1xf32>
    %164 = vector.broadcast %163 : vector<8x1xf32> to vector<8x32xf32>
    %165 = arith.subf %157, %164 : vector<8x32xf32>
    %166 = arith.mulf %165, %165 : vector<8x32xf32>
    %cst_81 = arith.constant dense<0.000000e+00> : vector<8xf32>
    %167 = vector.multi_reduction <add>, %166, %cst_81 [1] : vector<8x32xf32> to vector<8xf32>
    %168 = vector.shape_cast %167 : vector<8xf32> to vector<8x1xf32>
    %cst_82 = arith.constant 3.200000e+01 : f32
    %169 = vector.broadcast %cst_82 : f32 to vector<8x1xf32>
    %170 = arith.divf %168, %169 : vector<8x1xf32>
    %171 = vector.broadcast %163 : vector<8x1xf32> to vector<8x32xf32>
    %172 = arith.subf %157, %171 : vector<8x32xf32>
    %cst_83 = arith.constant 9.99999974E-6 : f32
    %173 = vector.broadcast %cst_83 : f32 to vector<8x1xf32>
    %174 = arith.addf %170, %173 : vector<8x1xf32>
    %175 = math.rsqrt %174 : vector<8x1xf32>
    %176 = vector.broadcast %175 : vector<8x1xf32> to vector<8x32xf32>
    %177 = arith.mulf %172, %176 : vector<8x32xf32>
    %178 = vector.broadcast %158 : vector<1x32xf32> to vector<8x32xf32>
    %179 = arith.mulf %177, %178 : vector<8x32xf32>
    %180 = vector.broadcast %159 : vector<1x32xf32> to vector<8x32xf32>
    %181 = arith.addf %179, %180 : vector<8x32xf32>
    %c0_84 = arith.constant 0 : index
    %c0_85 = arith.constant 0 : index
    %182 = vector.load %arg25[%c0_84, %c0_85] : memref<32x32xf32, #tpu.memory_space<vmem>>, vector<32x32xf32>
    %cst_86 = arith.constant dense<0.000000e+00> : vector<8x32xf32>
    %183 = tpu.matmul %181, %182, %cst_86 {dimension_numbers = #tpu.dot_dimension_numbers<[1], [0], [0], [1], [0, 0, 1, 1], [], []>} : vector<8x32xf32>, vector<32x32xf32>, vector<8x32xf32> -> vector<8x32xf32>
    %c0_87 = arith.constant 0 : index
    %c0_88 = arith.constant 0 : index
    %184 = vector.load %arg26[%c0_87, %c0_88] : memref<1x32xf32, #tpu.memory_space<vmem>>, vector<1x32xf32>
    %185 = vector.broadcast %184 : vector<1x32xf32> to vector<8x32xf32>
    %186 = arith.addf %183, %185 : vector<8x32xf32>
    %cst_89 = arith.constant 0.000000e+00 : f32
    %187 = vector.broadcast %cst_89 : f32 to vector<8x32xf32>
    %188 = arith.maximumf %186, %187 : vector<8x32xf32>
    %c0_90 = arith.constant 0 : index
    %c0_91 = arith.constant 0 : index
    %189 = vector.load %arg27[%c0_90, %c0_91] : memref<32x32xf32, #tpu.memory_space<vmem>>, vector<32x32xf32>
    %cst_92 = arith.constant dense<0.000000e+00> : vector<8x32xf32>
    %190 = tpu.matmul %188, %189, %cst_92 {dimension_numbers = #tpu.dot_dimension_numbers<[1], [0], [0], [1], [0, 0, 1, 1], [], []>} : vector<8x32xf32>, vector<32x32xf32>, vector<8x32xf32> -> vector<8x32xf32>
    %c0_93 = arith.constant 0 : index
    %c0_94 = arith.constant 0 : index
    %191 = vector.load %arg28[%c0_93, %c0_94] : memref<1x32xf32, #tpu.memory_space<vmem>>, vector<1x32xf32>
    %192 = vector.broadcast %191 : vector<1x32xf32> to vector<8x32xf32>
    %193 = arith.addf %190, %192 : vector<8x32xf32>
    %194 = arith.addf %157, %193 : vector<8x32xf32>
    %c0_95 = arith.constant 0 : index
    %c0_96 = arith.constant 0 : index
    %195 = vector.load %arg31[%c0_95, %c0_96] : memref<8x32xf32, #tpu.memory_space<vmem>>, vector<8x32xf32>
    tpu.vector_store %arg31[%c0_95, %c0_96], %194 {strides = array<i32>} : memref<8x32xf32, #tpu.memory_space<vmem>>, vector<8x32xf32>,
    %c0_97 = arith.constant 0 : index
    %c0_98 = arith.constant 0 : index
    %c0_99 = arith.constant 0 : index
    %196 = vector.load %arg29[%c0_97, %c0_98, %c0_99] : memref<1x8x32xf32, #tpu.memory_space<vmem>>, vector<1x8x32xf32>
    %197 = vector.shape_cast %196 : vector<1x8x32xf32> to vector<8x32xf32>
    %198 = arith.addf %197, %194 : vector<8x32xf32>
    %c0_100 = arith.constant 0 : index
    %c0_101 = arith.constant 0 : index
    %c0_102 = arith.constant 0 : index
    %199 = vector.load %arg29[%c0_100, %c0_101, %c0_102] : memref<1x8x32xf32, #tpu.memory_space<vmem>>, vector<1x8x32xf32>
    %200 = vector.shape_cast %199 : vector<1x8x32xf32> to vector<8x32xf32>
    %201 = vector.shape_cast %198 : vector<8x32xf32> to vector<1x8x32xf32>
    tpu.vector_store %arg29[%c0_100, %c0_101, %c0_102], %201 {strides = array<i32>} : memref<1x8x32xf32, #tpu.memory_space<vmem>>, vector<1x8x32xf32>,
    %c0_103 = arith.constant 0 : index
    %c0_104 = arith.constant 0 : index
    %c0_105 = arith.constant 0 : index
    %c0_106 = arith.constant 0 : index
    %202 = vector.load %arg30[%c0_103, %c0_104, %c0_105, %c0_106] : memref<1x1x8x128xf32, #tpu.memory_space<vmem>>, vector<1x1x8x128xf32>
    %203 = vector.shape_cast %202 : vector<1x1x8x128xf32> to vector<8x128xf32>
    %204 = vector.shape_cast %116 : vector<8x128xf32> to vector<1x1x8x128xf32>
    tpu.vector_store %arg30[%c0_103, %c0_104, %c0_105, %c0_106], %204 {strides = array<i32>} : memref<1x1x8x128xf32, #tpu.memory_space<vmem>>, vector<1x1x8x128xf32>,
    return
  }
  func.func @transform_0(%arg0: i32, %arg1: i32) -> (i32, i32, i32, i32) {
    %c0_i32 = arith.constant 0 : i32
    %c0_i32_0 = arith.constant 0 : i32
    %c0_i32_1 = arith.constant 0 : i32
    return %arg0, %arg1, %c0_i32, %c0_i32_0 : i32, i32, i32, i32
  }
  func.func @transform_1(%arg0: i32, %arg1: i32) -> (i32, i32) {
    %c0_i32 = arith.constant 0 : i32
    %c0_i32_0 = arith.constant 0 : i32
    %c0_i32_1 = arith.constant 0 : i32
    return %c0_i32, %c0_i32_0 : i32, i32
  }
  func.func @transform_2(%arg0: i32, %arg1: i32) -> (i32, i32) {
    %c0_i32 = arith.constant 0 : i32
    %c0_i32_0 = arith.constant 0 : i32
    %c0_i32_1 = arith.constant 0 : i32
    return %c0_i32, %c0_i32_0 : i32, i32
  }
  func.func @transform_3(%arg0: i32, %arg1: i32) -> (i32, i32) {
    %c0_i32 = arith.constant 0 : i32
    %c0_i32_0 = arith.constant 0 : i32
    %c0_i32_1 = arith.constant 0 : i32
    return %c0_i32, %c0_i32_0 : i32, i32
  }
  func.func @transform_4(%arg0: i32, %arg1: i32) -> (i32, i32) {
    %c0_i32 = arith.constant 0 : i32
    %c0_i32_0 = arith.constant 0 : i32
    %c0_i32_1 = arith.constant 0 : i32
    return %c0_i32, %c0_i32_0 : i32, i32
  }
  func.func @transform_5(%arg0: i32, %arg1: i32) -> (i32, i32) {
    %c0_i32 = arith.constant 0 : i32
    %c0_i32_0 = arith.constant 0 : i32
    %c0_i32_1 = arith.constant 0 : i32
    return %c0_i32, %c0_i32_0 : i32, i32
  }
  func.func @transform_6(%arg0: i32, %arg1: i32) -> (i32, i32) {
    %c0_i32 = arith.constant 0 : i32
    %c0_i32_0 = arith.constant 0 : i32
    %c0_i32_1 = arith.constant 0 : i32
    return %c0_i32, %c0_i32_0 : i32, i32
  }
  func.func @transform_7(%arg0: i32, %arg1: i32) -> (i32, i32) {
    %c0_i32 = arith.constant 0 : i32
    %c0_i32_0 = arith.constant 0 : i32
    %c0_i32_1 = arith.constant 0 : i32
    return %c0_i32, %c0_i32_0 : i32, i32
  }
  func.func @transform_8(%arg0: i32, %arg1: i32) -> (i32, i32) {
    %c0_i32 = arith.constant 0 : i32
    %c0_i32_0 = arith.constant 0 : i32
    %c0_i32_1 = arith.constant 0 : i32
    return %c0_i32, %c0_i32_0 : i32, i32
  }
  func.func @transform_9(%arg0: i32, %arg1: i32) -> (i32, i32) {
    %c0_i32 = arith.constant 0 : i32
    %c0_i32_0 = arith.constant 0 : i32
    %c0_i32_1 = arith.constant 0 : i32
    return %c0_i32, %c0_i32_0 : i32, i32
  }
  func.func @transform_10(%arg0: i32, %arg1: i32) -> (i32, i32) {
    %c0_i32 = arith.constant 0 : i32
    %c0_i32_0 = arith.constant 0 : i32
    %c0_i32_1 = arith.constant 0 : i32
    return %c0_i32, %c0_i32_0 : i32, i32
  }
  func.func @transform_11(%arg0: i32, %arg1: i32) -> (i32, i32) {
    %c0_i32 = arith.constant 0 : i32
    %c0_i32_0 = arith.constant 0 : i32
    %c0_i32_1 = arith.constant 0 : i32
    return %c0_i32, %c0_i32_0 : i32, i32
  }
  func.func @transform_12(%arg0: i32, %arg1: i32) -> (i32, i32) {
    %c0_i32 = arith.constant 0 : i32
    %c0_i32_0 = arith.constant 0 : i32
    %c0_i32_1 = arith.constant 0 : i32
    return %c0_i32, %c0_i32_0 : i32, i32
  }
  func.func @transform_13(%arg0: i32, %arg1: i32) -> (i32, i32) {
    %c0_i32 = arith.constant 0 : i32
    %c0_i32_0 = arith.constant 0 : i32
    %c0_i32_1 = arith.constant 0 : i32
    return %c0_i32, %c0_i32_0 : i32, i32
  }
  func.func @transform_14(%arg0: i32, %arg1: i32) -> (i32, i32) {
    %c0_i32 = arith.constant 0 : i32
    %c0_i32_0 = arith.constant 0 : i32
    %c0_i32_1 = arith.constant 0 : i32
    return %c0_i32, %c0_i32_0 : i32, i32
  }
  func.func @transform_15(%arg0: i32, %arg1: i32) -> (i32, i32) {
    %c0_i32 = arith.constant 0 : i32
    %c0_i32_0 = arith.constant 0 : i32
    %c0_i32_1 = arith.constant 0 : i32
    return %c0_i32, %c0_i32_0 : i32, i32
  }
  func.func @transform_16(%arg0: i32, %arg1: i32) -> (i32, i32) {
    %c0_i32 = arith.constant 0 : i32
    %c0_i32_0 = arith.constant 0 : i32
    %c0_i32_1 = arith.constant 0 : i32
    return %c0_i32, %c0_i32_0 : i32, i32
  }
  func.func @transform_17(%arg0: i32, %arg1: i32) -> (i32, i32) {
    %c0_i32 = arith.constant 0 : i32
    %c0_i32_0 = arith.constant 0 : i32
    %c0_i32_1 = arith.constant 0 : i32
    return %c0_i32, %c0_i32_0 : i32, i32
  }
  func.func @transform_18(%arg0: i32, %arg1: i32) -> (i32, i32) {
    %c0_i32 = arith.constant 0 : i32
    %c0_i32_0 = arith.constant 0 : i32
    %c0_i32_1 = arith.constant 0 : i32
    return %c0_i32, %c0_i32_0 : i32, i32
  }
  func.func @transform_19(%arg0: i32, %arg1: i32) -> (i32, i32) {
    %c0_i32 = arith.constant 0 : i32
    %c0_i32_0 = arith.constant 0 : i32
    %c0_i32_1 = arith.constant 0 : i32
    return %c0_i32, %c0_i32_0 : i32, i32
  }
  func.func @transform_20(%arg0: i32, %arg1: i32) -> (i32, i32) {
    %c0_i32 = arith.constant 0 : i32
    %c0_i32_0 = arith.constant 0 : i32
    %c0_i32_1 = arith.constant 0 : i32
    return %c0_i32, %c0_i32_0 : i32, i32
  }
  func.func @transform_21(%arg0: i32, %arg1: i32) -> (i32, i32) {
    %c0_i32 = arith.constant 0 : i32
    %c0_i32_0 = arith.constant 0 : i32
    %c0_i32_1 = arith.constant 0 : i32
    return %c0_i32, %c0_i32_0 : i32, i32
  }
  func.func @transform_22(%arg0: i32, %arg1: i32) -> (i32, i32) {
    %c0_i32 = arith.constant 0 : i32
    %c0_i32_0 = arith.constant 0 : i32
    %c0_i32_1 = arith.constant 0 : i32
    return %c0_i32, %c0_i32_0 : i32, i32
  }
  func.func @transform_23(%arg0: i32, %arg1: i32) -> (i32, i32) {
    %c0_i32 = arith.constant 0 : i32
    %c0_i32_0 = arith.constant 0 : i32
    %c0_i32_1 = arith.constant 0 : i32
    return %c0_i32, %c0_i32_0 : i32, i32
  }
  func.func @transform_24(%arg0: i32, %arg1: i32) -> (i32, i32) {
    %c0_i32 = arith.constant 0 : i32
    %c0_i32_0 = arith.constant 0 : i32
    %c0_i32_1 = arith.constant 0 : i32
    return %c0_i32, %c0_i32_0 : i32, i32
  }
  func.func @transform_25(%arg0: i32, %arg1: i32) -> (i32, i32) {
    %c0_i32 = arith.constant 0 : i32
    %c0_i32_0 = arith.constant 0 : i32
    %c0_i32_1 = arith.constant 0 : i32
    return %c0_i32, %c0_i32_0 : i32, i32
  }
  func.func @transform_26(%arg0: i32, %arg1: i32) -> (i32, i32) {
    %c0_i32 = arith.constant 0 : i32
    %c0_i32_0 = arith.constant 0 : i32
    %c0_i32_1 = arith.constant 0 : i32
    return %c0_i32, %c0_i32_0 : i32, i32
  }
  func.func @transform_27(%arg0: i32, %arg1: i32) -> (i32, i32, i32) {
    %c0_i32 = arith.constant 0 : i32
    %c0_i32_0 = arith.constant 0 : i32
    %c0_i32_1 = arith.constant 0 : i32
    return %arg0, %c0_i32, %c0_i32_0 : i32, i32, i32
  }
  func.func @transform_28(%arg0: i32, %arg1: i32) -> (i32, i32, i32, i32) {
    %c0_i32 = arith.constant 0 : i32
    %c0_i32_0 = arith.constant 0 : i32
    %c0_i32_1 = arith.constant 0 : i32
    return %arg0, %arg1, %c0_i32, %c0_i32_0 : i32, i32, i32, i32
  }
}

</mosaic_0001>

<llo_original>
// kernel: slot_video_forward.1
$region0: #{slot_video_forward.1}
  #allocation0 [shape = 'u32[]', space=smem, size = 0x4, offset = 0x4, fixed_abs, tag = 'smem constant byte address 0x4 - core index']
  #allocation1 [shape = 'u32[144,128]{1,0:T(1,128)}', space=vmem, size = 0x12000, scoped, tag = 'internal scratch']
  #allocation2 [shape = 'f32[8,32]{1,0:T(8,128)}', space=vmem, size = 0x1000, scoped, tag = 'scratch operand']
  %s0 = inlined_call_operand.vmem [shape: f32[2,4,128,32], index: 0, kind: input, shape index: {}]
  %s1 = inlined_call_operand.vmem [shape: f32[128,32], index: 1, kind: input, shape index: {}]
  %s2 = inlined_call_operand.vmem [shape: f32[128,32], index: 2, kind: input, shape index: {}]
  %s3 = inlined_call_operand.vmem [shape: f32[128,32], index: 3, kind: input, shape index: {}]
  %s4 = inlined_call_operand.hbm [shape: f32[32,64], index: 4, kind: input, shape index: {}]
  %s5 = inlined_call_operand.hbm [shape: f32[1,64], index: 5, kind: input, shape index: {}]
  %s6 = inlined_call_operand.vmem [shape: f32[64,32], index: 6, kind: input, shape index: {}]
  %s7 = inlined_call_operand.hbm [shape: f32[1,32], index: 7, kind: input, shape index: {}]
  %s8 = inlined_call_operand.hbm [shape: f32[8,32], index: 8, kind: input, shape index: {}]
  %s9 = inlined_call_operand.hbm [shape: f32[1,32], index: 9, kind: input, shape index: {}]
  %s10 = inlined_call_operand.hbm [shape: f32[1,32], index: 10, kind: input, shape index: {}]
  %s11 = inlined_call_operand.vmem [shape: f32[32,64], index: 11, kind: input, shape index: {}]
  %s12 = inlined_call_operand.vmem [shape: f32[1,64], index: 12, kind: input, shape index: {}]
  %s13 = inlined_call_operand.hbm [shape: f32[1,32], index: 13, kind: input, shape index: {}]
  %s14 = inlined_call_operand.hbm [shape: f32[1,32], index: 14, kind: input, shape index: {}]
  %s15 = inlined_call_operand.vmem [shape: f32[32,32], index: 15, kind: input, shape index: {}]
  %s16 = inlined_call_operand.hbm [shape: f32[1,32], index: 16, kind: input, shape index: {}]
  %s17 = inlined_call_operand.vmem [shape: f32[32,96], index: 17, kind: input, shape index: {}]
  %s18 = inlined_call_operand.vmem [shape: f32[1,96], index: 18, kind: input, shape index: {}]
  %s19 = inlined_call_operand.vmem [shape: f32[32,96], index: 19, kind: input, shape index: {}]
  %s20 = inlined_call_operand.vmem [shape: f32[1,96], index: 20, kind: input, shape index: {}]
  %s21 = inlined_call_operand.hbm [shape: f32[1,32], index: 21, kind: input, shape index: {}]
  %s22 = inlined_call_operand.hbm [shape: f32[1,32], index: 22, kind: input, shape index: {}]
  %s23 = inlined_call_operand.hbm [shape: f32[32,32], index: 23, kind: input, shape index: {}]
  %s24 = inlined_call_operand.hbm [shape: f32[1,32], index: 24, kind: input, shape index: {}]
  %s25 = inlined_call_operand.hbm [shape: f32[32,32], index: 25, kind: input, shape index: {}]
  %s26 = inlined_call_operand.hbm [shape: f32[1,32], index: 26, kind: input, shape index: {}]
  %s27 = inlined_call_operand.hbm [shape: f32[2,8,32], index: 27, kind: output, shape index: {0}]
  %s28 = inlined_call_operand.hbm [shape: f32[2,4,8,128], index: 28, kind: output, shape index: {1}]
  %29 = xla_tuple %s27, %s28
  %s30 = sld [smem:[#allocation0]]
  $region213: #{slot_video_forward.1} parent=0
    _
  %s32 = ssub.s32 1, %s30
  %s33 = scalar_select 0, %s32, %s30
  $region1: #{slot_video_forward.1} parent=0
    #allocation3 [shape = 'u8[16384]{0}', space=vmem, size = 0x4000, scoped, tag = 'input window, operand 4, single buffered']
    #allocation4 [shape = 's32[2]{0}', space=sflag, size = 0x8, scoped, tag = 'scoped memory for slot_video_forward.1']
    #allocation5 [shape = 's32[2]{0}', space=sflag, size = 0x8, scoped, tag = 'scoped memory for slot_video_forward.1']
    #allocation6 [shape = 'u8[512]{0}', space=vmem, size = 0x400, scoped, tag = 'input window, operand 5, single buffered']
    #allocation7 [shape = 's32[1]{0}', space=sflag, size = 0x4, scoped, tag = 'scoped memory for slot_video_forward.1']
    #allocation8 [shape = 'u8[512]{0}', space=vmem, size = 0x400, scoped, tag = 'input window, operand 7, single buffered']
    #allocation9 [shape = 'u8[4096]{0}', space=vmem, size = 0x1000, scoped, tag = 'input window, operand 8, single buffered']
    #allocation10 [shape = 's32[1]{0}', space=sflag, size = 0x4, scoped, tag = 'scoped memory for slot_video_forward.1']
    #allocation11 [shape = 'u8[512]{0}', space=vmem, size = 0x400, scoped, tag = 'input window, operand 9, single buffered']
    #allocation12 [shape = 'u8[512]{0}', space=vmem, size = 0x400, scoped, tag = 'input window, operand 10, single buffered']
    #allocation13 [shape = 's32[1]{0}', space=sflag, size = 0x4, scoped, tag = 'scoped memory for slot_video_forward.1']
    #allocation14 [shape = 'u8[512]{0}', space=vmem, size = 0x400, scoped, tag = 'input window, operand 13, single buffered']
    #allocation15 [shape = 'u8[512]{0}', space=vmem, size = 0x400, scoped, tag = 'input window, operand 14, single buffered']
    #allocation16 [shape = 's32[1]{0}', space=sflag, size = 0x4, scoped, tag = 'scoped memory for slot_video_forward.1']
    #allocation17 [shape = 'u8[512]{0}', space=vmem, size = 0x400, scoped, tag = 'input window, operand 16, single buffered']
    #allocation18 [shape = 'u8[512]{0}', space=vmem, size = 0x400, scoped, tag = 'input window, operand 21, single buffered']
    #allocation19 [shape = 's32[1]{0}', space=sflag, size = 0x4, scoped, tag = 'scoped memory for slot_video_forward.1']
    #allocation20 [shape = 'u8[512]{0}', space=vmem, size = 0x400, scoped, tag = 'input window, operand 22, single buffered']
    #allocation21 [shape = 'u8[16384]{0}', space=vmem, size = 0x4000, scoped, tag = 'input window, operand 23, single buffered']
    #allocation22 [shape = 's32[1]{0}', space=sflag, size = 0x4, scoped, tag = 'scoped memory for slot_video_forward.1']
    #allocation23 [shape = 'u8[512]{0}', space=vmem, size = 0x400, scoped, tag = 'input window, operand 24, single buffered']
    #allocation24 [shape = 'u8[16384]{0}', space=vmem, size = 0x4000, scoped, tag = 'input window, operand 25, single buffered']
    #allocation25 [shape = 's32[1]{0}', space=sflag, size = 0x4, scoped, tag = 'scoped memory for slot_video_forward.1']
    #allocation26 [shape = 'u8[512]{0}', space=vmem, size = 0x400, scoped, tag = 'input window, operand 26, single buffered']
    #allocation27 [shape = 'u8[8192]{0}', space=vmem, size = 0x2000, scoped, tag = 'output window, operand 0']
    #allocation28 [shape = 'u8[8192]{0}', space=vmem, size = 0x2000, scoped, tag = 'output window, operand 1']
    #allocation29 [shape = 's32[2]{0}', space=sflag, size = 0x8, scoped, tag = 'scoped memory for slot_video_forward.1']
    %34 = vsyncpa [#allocation4], 0
    %35 = vsyncpa [#allocation7], 0
    %36 = vsyncpa [#allocation10], 0
    %37 = vsyncpa [#allocation13], 0
    %38 = vsyncpa [#allocation16], 0
    %39 = vsyncpa [#allocation19], 0
    %40 = vsyncpa [#allocation22], 0
    %41 = vsyncpa [#allocation25], 0
    %42 = vsyncpa [#allocation5], 0
    %s43 = scalar_lea.sflag [#allocation5], 1
    %44 = vsyncpa %s43, 0
    %45 = vsyncpa [#allocation29], 0
    %s46 = scalar_lea.sflag [#allocation29], 1
    %47 = vsyncpa %s46, 0
    loop: start=0, step=1, limit=10
    $region2: #{slot_video_forward.1} parent=1 // loop_pre_header
      _
    $region3: #{slot_video_forward.1} parent=1 // loop_header
      %s49 = sphi 0, %s53
      %p50 = scmp.ge.s32.totalorder %s49, 10
      %s56 = sphi 0, %s68
      %s57 = sphi 0, %s64
      %s58 = sphi 0, %s56
      %s59 = sphi 0, %s57
      %s60 = sphi 0, %s58
      %s61 = sphi 0, %s59
      %s73 = sphi 0, %s75
      %s76 = sphi 0, %s73
      %s77 = sphi 0, %s76
      %s93 = sphi 0, %s77
      %s97 = sphi 0, %s97
      %s99 = sphi 0, %s97
      %s100 = sphi 0, %s99
      %s114 = sphi 0, %s100
      %s118 = sphi 0, %s118
      %s120 = sphi 0, %s118
      %s121 = sphi 0, %s120
      %s135 = sphi 0, %s121
      %s139 = sphi 0, %s139
      %s141 = sphi 0, %s139
      %s142 = sphi 0, %s141
      %s156 = sphi 0, %s142
      %s160 = sphi 0, %s160
      %s162 = sphi 0, %s160
      %s163 = sphi 0, %s162
      %s177 = sphi 0, %s163
      %s181 = sphi 0, %s181
      %s183 = sphi 0, %s181
      %s184 = sphi 0, %s183
      %s198 = sphi 0, %s184
      %s202 = sphi 0, %s202
      %s204 = sphi 0, %s202
      %s205 = sphi 0, %s204
      %s219 = sphi 0, %s205
      %s223 = sphi 0, %s223
      %s225 = sphi 0, %s223
      %s226 = sphi 0, %s225
      %s240 = sphi 0, %s226
      %s244 = sphi 0, %s244
      %s246 = sphi 0, %s244
      %s247 = sphi 0, %s246
      %s261 = sphi 0, %s247
      %s265 = sphi 0, %s265
      %s267 = sphi 0, %s265
      %s268 = sphi 0, %s267
      %s282 = sphi 0, %s268
      %s286 = sphi 0, %s286
      %s288 = sphi 0, %s286
      %s289 = sphi 0, %s288
      %s303 = sphi 0, %s289
      %s307 = sphi 0, %s307
      %s309 = sphi 0, %s307
      %s310 = sphi 0, %s309
      %s324 = sphi 0, %s310
      %s328 = sphi 0, %s328
      %s330 = sphi 0, %s328
      %s331 = sphi 0, %s330
      %s345 = sphi 0, %s331
      %s349 = sphi 0, %s349
      %s351 = sphi 0, %s349
      %s352 = sphi 0, %s351
      %s366 = sphi 0, %s352
      %s370 = sphi 0, %s370
      %s372 = sphi 0, %s370
      %s373 = sphi 0, %s372
      %s387 = sphi 0, %s373
      %s391 = sphi 0, %s391
      %s393 = sphi 0, %s391
      %s394 = sphi 0, %s393
      %s408 = sphi 0, %s394
      %s412 = sphi 0, %s412
      %s414 = sphi 0, %s412
      %s415 = sphi 0, %s414
      %s429 = sphi 0, %s415
      %s433 = sphi 0, %s433
      %s435 = sphi 0, %s433
      %s436 = sphi 0, %s435
      %s450 = sphi 0, %s436
      %s454 = sphi 0, %s454
      %s456 = sphi 0, %s454
      %s457 = sphi 0, %s456
      %s471 = sphi 0, %s457
      %s475 = sphi 0, %s475
      %s477 = sphi 0, %s475
      %s478 = sphi 0, %s477
      %s492 = sphi 0, %s478
      %s496 = sphi 0, %s496
      %s498 = sphi 0, %s496
      %s499 = sphi 0, %s498
      %s513 = sphi 0, %s499
      %s517 = sphi 0, %s517
      %s519 = sphi 0, %s517
      %s520 = sphi 0, %s519
      %s534 = sphi 0, %s520
      %s538 = sphi 0, %s538
      %s540 = sphi 0, %s538
      %s541 = sphi 0, %s540
      %s555 = sphi 0, %s541
      %s559 = sphi 0, %s559
      %s561 = sphi 0, %s559
      %s562 = sphi 0, %s561
      %s576 = sphi 0, %s562
      %s580 = sphi 0, %s580
      %s582 = sphi 0, %s580
      %s583 = sphi 0, %s582
      %s597 = sphi 0, %s583
      %s601 = sphi 0, %s601
      %s603 = sphi 0, %s601
      %s604 = sphi 0, %s603
      %s618 = sphi 0, %s604
      %s622 = sphi 0, %s622
      %s624 = sphi 0, %s622
      %s625 = sphi 0, %s624
      %s639 = sphi 0, %s625
      %s645 = sphi 0, %s647
      %s648 = sphi 0, %s645
      %s649 = sphi 0, %s648
      %s665 = sphi 0, %s649
      %s673 = sphi 0, %s675
      %s676 = sphi 0, %s673
      %s677 = sphi 0, %s676
      %s693 = sphi 0, %s677
    $region4: #{slot_video_forward.1} parent=1 // loop_header_branch
      %52 = sbr.rel (%p50) target = $region8
    $region5: #{slot_video_forward.1} parent=1 // loop_body
      %s54 = ssub.s32 %s49, 1
      %s55 = ssub.s32 %s49, 2
      %s62 = sadd.s32 1, %s57
      %p63 = scmp.ge.s32.totalorder %s62, 4
      %s64 = scalar_select %p63, 0, %s62
      %s65 = sadd.s32 1, %s56
      %s66 = scalar_select %p63, %s65, %s56
      %p67 = scmp.ge.s32.totalorder %s66, 2
      %s68 = scalar_select %p67, 0, %s66
      %s69 = ssub.s32 %s56, %s68
      %s70 = ssub.s32 %s57, %s64
      %s71 = sor.u32 %s69, %s70
      %p72 = scmp.eq.s32.totalorder %s71, 0
      %s74 = sadd.s32 %s73, 1
      %s75 = scalar_select %p72, %s73, %s74
      %p78 = pneg %p72
      %p79 = scmp.eq.s32.totalorder %s49, 7
      %p80 = por %p78, %p79
      %p81 = scmp.ne.s32.totalorder %s73, %s76
      %p82 = scmp.eq.s32.totalorder %s49, 0
      %p83 = por %p81, %p82
      %p84 = scmp.ne.s32.totalorder %s73, %s76
      %p85 = scmp.eq.s32.totalorder %s54, 7
      %p86 = por %p84, %p85
      %p87 = scmp.ne.s32.totalorder %s76, %s77
      %p88 = scmp.eq.s32.totalorder %s54, 0
      %p89 = por %p87, %p88
      %p90 = scmp.ne.s32.totalorder %s76, %s77
      %p91 = scmp.eq.s32.totalorder %s55, 7
      %p92 = por %p90, %p91
      %p94 = scmp.ne.s32.totalorder %s77, %s93
      %p95 = scmp.eq.s32.totalorder %s55, 0
      %p96 = por %p94, %p95
      %s98 = sadd.s32 %s97, 1
      %p101 = scmp.eq.s32.totalorder %s49, 7
      %p102 = scmp.ne.s32.totalorder %s97, %s99
      %p103 = scmp.eq.s32.totalorder %s49, 0
      %p104 = por %p102, %p103
      %p105 = scmp.ne.s32.totalorder %s97, %s99
      %p106 = scmp.eq.s32.totalorder %s54, 7
      %p107 = por %p105, %p106
      %p108 = scmp.ne.s32.totalorder %s99, %s100
      %p109 = scmp.eq.s32.totalorder %s54, 0
      %p110 = por %p108, %p109
      %p111 = scmp.ne.s32.totalorder %s99, %s100
      %p112 = scmp.eq.s32.totalorder %s55, 7
      %p113 = por %p111, %p112
      %p115 = scmp.ne.s32.totalorder %s100, %s114
      %p116 = scmp.eq.s32.totalorder %s55, 0
      %p117 = por %p115, %p116
      %s119 = sadd.s32 %s118, 1
      %p122 = scmp.eq.s32.totalorder %s49, 7
      %p123 = scmp.ne.s32.totalorder %s118, %s120
      %p124 = scmp.eq.s32.totalorder %s49, 0
      %p125 = por %p123, %p124
      %p126 = scmp.ne.s32.totalorder %s118, %s120
      %p127 = scmp.eq.s32.totalorder %s54, 7
      %p128 = por %p126, %p127
      %p129 = scmp.ne.s32.totalorder %s120, %s121
      %p130 = scmp.eq.s32.totalorder %s54, 0
      %p131 = por %p129, %p130
      %p132 = scmp.ne.s32.totalorder %s120, %s121
      %p133 = scmp.eq.s32.totalorder %s55, 7
      %p134 = por %p132, %p133
      %p136 = scmp.ne.s32.totalorder %s121, %s135
      %p137 = scmp.eq.s32.totalorder %s55, 0
      %p138 = por %p136, %p137
      %s140 = sadd.s32 %s139, 1
      %p143 = scmp.eq.s32.totalorder %s49, 7
      %p144 = scmp.ne.s32.totalorder %s139, %s141
      %p145 = scmp.eq.s32.totalorder %s49, 0
      %p146 = por %p144, %p145
      %p147 = scmp.ne.s32.totalorder %s139, %s141
      %p148 = scmp.eq.s32.totalorder %s54, 7
      %p149 = por %p147, %p148
      %p150 = scmp.ne.s32.totalorder %s141, %s142
      %p151 = scmp.eq.s32.totalorder %s54, 0
      %p152 = por %p150, %p151
      %p153 = scmp.ne.s32.totalorder %s141, %s142
      %p154 = scmp.eq.s32.totalorder %s55, 7
      %p155 = por %p153, %p154
      %p157 = scmp.ne.s32.totalorder %s142, %s156
      %p158 = scmp.eq.s32.totalorder %s55, 0
      %p159 = por %p157, %p158
      %s161 = sadd.s32 %s160, 1
      %p164 = scmp.eq.s32.totalorder %s49, 7
      %p165 = scmp.ne.s32.totalorder %s160, %s162
      %p166 = scmp.eq.s32.totalorder %s49, 0
      %p167 = por %p165, %p166
      %p168 = scmp.ne.s32.totalorder %s160, %s162
      %p169 = scmp.eq.s32.totalorder %s54, 7
      %p170 = por %p168, %p169
      %p171 = scmp.ne.s32.totalorder %s162, %s163
      %p172 = scmp.eq.s32.totalorder %s54, 0
      %p173 = por %p171, %p172
      %p174 = scmp.ne.s32.totalorder %s162, %s163
      %p175 = scmp.eq.s32.totalorder %s55, 7
      %p176 = por %p174, %p175
      %p178 = scmp.ne.s32.totalorder %s163, %s177
      %p179 = scmp.eq.s32.totalorder %s55, 0
      %p180 = por %p178, %p179
      %s182 = sadd.s32 %s181, 1
      %p185 = scmp.eq.s32.totalorder %s49, 7
      %p186 = scmp.ne.s32.totalorder %s181, %s183
      %p187 = scmp.eq.s32.totalorder %s49, 0
      %p188 = por %p186, %p187
      %p189 = scmp.ne.s32.totalorder %s181, %s183
      %p190 = scmp.eq.s32.totalorder %s54, 7
      %p191 = por %p189, %p190
      %p192 = scmp.ne.s32.totalorder %s183, %s184
      %p193 = scmp.eq.s32.totalorder %s54, 0
      %p194 = por %p192, %p193
      %p195 = scmp.ne.s32.totalorder %s183, %s184
      %p196 = scmp.eq.s32.totalorder %s55, 7
      %p197 = por %p195, %p196
      %p199 = scmp.ne.s32.totalorder %s184, %s198
      %p200 = scmp.eq.s32.totalorder %s55, 0
      %p201 = por %p199, %p200
      %s203 = sadd.s32 %s202, 1
      %p206 = scmp.eq.s32.totalorder %s49, 7
      %p207 = scmp.ne.s32.totalorder %s202, %s204
      %p208 = scmp.eq.s32.totalorder %s49, 0
      %p209 = por %p207, %p208
      %p210 = scmp.ne.s32.totalorder %s202, %s204
      %p211 = scmp.eq.s32.totalorder %s54, 7
      %p212 = por %p210, %p211
      %p213 = scmp.ne.s32.totalorder %s204, %s205
      %p214 = scmp.eq.s32.totalorder %s54, 0
      %p215 = por %p213, %p214
      %p216 = scmp.ne.s32.totalorder %s204, %s205
      %p217 = scmp.eq.s32.totalorder %s55, 7
      %p218 = por %p216, %p217
      %p220 = scmp.ne.s32.totalorder %s205, %s219
      %p221 = scmp.eq.s32.totalorder %s55, 0
      %p222 = por %p220, %p221
      %s224 = sadd.s32 %s223, 1
      %p227 = scmp.eq.s32.totalorder %s49, 7
      %p228 = scmp.ne.s32.totalorder %s223, %s225
      %p229 = scmp.eq.s32.totalorder %s49, 0
      %p230 = por %p228, %p229
      %p231 = scmp.ne.s32.totalorder %s223, %s225
      %p232 = scmp.eq.s32.totalorder %s54, 7
      %p233 = por %p231, %p232
      %p234 = scmp.ne.s32.totalorder %s225, %s226
      %p235 = scmp.eq.s32.totalorder %s54, 0
      %p236 = por %p234, %p235
      %p237 = scmp.ne.s32.totalorder %s225, %s226
      %p238 = scmp.eq.s32.totalorder %s55, 7
      %p239 = por %p237, %p238
      %p241 = scmp.ne.s32.totalorder %s226, %s240
      %p242 = scmp.eq.s32.totalorder %s55, 0
      %p243 = por %p241, %p242
      %s245 = sadd.s32 %s244, 1
      %p248 = scmp.eq.s32.totalorder %s49, 7
      %p249 = scmp.ne.s32.totalorder %s244, %s246
      %p250 = scmp.eq.s32.totalorder %s49, 0
      %p251 = por %p249, %p250
      %p252 = scmp.ne.s32.totalorder %s244, %s246
      %p253 = scmp.eq.s32.totalorder %s54, 7
      %p254 = por %p252, %p253
      %p255 = scmp.ne.s32.totalorder %s246, %s247
      %p256 = scmp.eq.s32.totalorder %s54, 0
      %p257 = por %p255, %p256
      %p258 = scmp.ne.s32.totalorder %s246, %s247
      %p259 = scmp.eq.s32.totalorder %s55, 7
      %p260 = por %p258, %p259
      %p262 = scmp.ne.s32.totalorder %s247, %s261
      %p263 = scmp.eq.s32.totalorder %s55, 0
      %p264 = por %p262, %p263
      %s266 = sadd.s32 %s265, 1
      %p269 = scmp.eq.s32.totalorder %s49, 7
      %p270 = scmp.ne.s32.totalorder %s265, %s267
      %p271 = scmp.eq.s32.totalorder %s49, 0
      %p272 = por %p270, %p271
      %p273 = scmp.ne.s32.totalorder %s265, %s267
      %p274 = scmp.eq.s32.totalorder %s54, 7
      %p275 = por %p273, %p274
      %p276 = scmp.ne.s32.totalorder %s267, %s268
      %p277 = scmp.eq.s32.totalorder %s54, 0
      %p278 = por %p276, %p277
      %p279 = scmp.ne.s32.totalorder %s267, %s268
      %p280 = scmp.eq.s32.totalorder %s55, 7
      %p281 = por %p279, %p280
      %p283 = scmp.ne.s32.totalorder %s268, %s282
      %p284 = scmp.eq.s32.totalorder %s55, 0
      %p285 = por %p283, %p284
      %s287 = sadd.s32 %s286, 1
      %p290 = scmp.eq.s32.totalorder %s49, 7
      %p291 = scmp.ne.s32.totalorder %s286, %s288
      %p292 = scmp.eq.s32.totalorder %s49, 0
      %p293 = por %p291, %p292
      %p294 = scmp.ne.s32.totalorder %s286, %s288
      %p295 = scmp.eq.s32.totalorder %s54, 7
      %p296 = por %p294, %p295
      %p297 = scmp.ne.s32.totalorder %s288, %s289
      %p298 = scmp.eq.s32.totalorder %s54, 0
      %p299 = por %p297, %p298
      %p300 = scmp.ne.s32.totalorder %s288, %s289
      %p301 = scmp.eq.s32.totalorder %s55, 7
      %p302 = por %p300, %p301
      %p304 = scmp.ne.s32.totalorder %s289, %s303
      %p305 = scmp.eq.s32.totalorder %s55, 0
      %p306 = por %p304, %p305
      %s308 = sadd.s32 %s307, 1
      %p311 = scmp.eq.s32.totalorder %s49, 7
      %p312 = scmp.ne.s32.totalorder %s307, %s309
      %p313 = scmp.eq.s32.totalorder %s49, 0
      %p314 = por %p312, %p313
      %p315 = scmp.ne.s32.totalorder %s307, %s309
      %p316 = scmp.eq.s32.totalorder %s54, 7
      %p317 = por %p315, %p316
      %p318 = scmp.ne.s32.totalorder %s309, %s310
      %p319 = scmp.eq.s32.totalorder %s54, 0
      %p320 = por %p318, %p319
      %p321 = scmp.ne.s32.totalorder %s309, %s310
      %p322 = scmp.eq.s32.totalorder %s55, 7
      %p323 = por %p321, %p322
      %p325 = scmp.ne.s32.totalorder %s310, %s324
      %p326 = scmp.eq.s32.totalorder %s55, 0
      %p327 = por %p325, %p326
      %s329 = sadd.s32 %s328, 1
      %p332 = scmp.eq.s32.totalorder %s49, 7
      %p333 = scmp.ne.s32.totalorder %s328, %s330
      %p334 = scmp.eq.s32.totalorder %s49, 0
      %p335 = por %p333, %p334
      %p336 = scmp.ne.s32.totalorder %s328, %s330
      %p337 = scmp.eq.s32.totalorder %s54, 7
      %p338 = por %p336, %p337
      %p339 = scmp.ne.s32.totalorder %s330, %s331
      %p340 = scmp.eq.s32.totalorder %s54, 0
      %p341 = por %p339, %p340
      %p342 = scmp.ne.s32.totalorder %s330, %s331
      %p343 = scmp.eq.s32.totalorder %s55, 7
      %p344 = por %p342, %p343
      %p346 = scmp.ne.s32.totalorder %s331, %s345
      %p347 = scmp.eq.s32.totalorder %s55, 0
      %p348 = por %p346, %p347
      %s350 = sadd.s32 %s349, 1
      %p353 = scmp.eq.s32.totalorder %s49, 7
      %p354 = scmp.ne.s32.totalorder %s349, %s351
      %p355 = scmp.eq.s32.totalorder %s49, 0
      %p356 = por %p354, %p355
      %p357 = scmp.ne.s32.totalorder %s349, %s351
      %p358 = scmp.eq.s32.totalorder %s54, 7
      %p359 = por %p357, %p358
      %p360 = scmp.ne.s32.totalorder %s351, %s352
      %p361 = scmp.eq.s32.totalorder %s54, 0
      %p362 = por %p360, %p361
      %p363 = scmp.ne.s32.totalorder %s351, %s352
      %p364 = scmp.eq.s32.totalorder %s55, 7
      %p365 = por %p363, %p364
      %p367 = scmp.ne.s32.totalorder %s352, %s366
      %p368 = scmp.eq.s32.totalorder %s55, 0
      %p369 = por %p367, %p368
      %s371 = sadd.s32 %s370, 1
      %p374 = scmp.eq.s32.totalorder %s49, 7
      %p375 = scmp.ne.s32.totalorder %s370, %s372
      %p376 = scmp.eq.s32.totalorder %s49, 0
      %p377 = por %p375, %p376
      %p378 = scmp.ne.s32.totalorder %s370, %s372
      %p379 = scmp.eq.s32.totalorder %s54, 7
      %p380 = por %p378, %p379
      %p381 = scmp.ne.s32.totalorder %s372, %s373
      %p382 = scmp.eq.s32.totalorder %s54, 0
      %p383 = por %p381, %p382
      %p384 = scmp.ne.s32.totalorder %s372, %s373
      %p385 = scmp.eq.s32.totalorder %s55, 7
      %p386 = por %p384, %p385
      %p388 = scmp.ne.s32.totalorder %s373, %s387
      %p389 = scmp.eq.s32.totalorder %s55, 0
      %p390 = por %p388, %p389
      %s392 = sadd.s32 %s391, 1
      %p395 = scmp.eq.s32.totalorder %s49, 7
      %p396 = scmp.ne.s32.totalorder %s391, %s393
      %p397 = scmp.eq.s32.totalorder %s49, 0
      %p398 = por %p396, %p397
      %p399 = scmp.ne.s32.totalorder %s391, %s393
      %p400 = scmp.eq.s32.totalorder %s54, 7
      %p401 = por %p399, %p400
      %p402 = scmp.ne.s32.totalorder %s393, %s394
      %p403 = scmp.eq.s32.totalorder %s54, 0
      %p404 = por %p402, %p403
      %p405 = scmp.ne.s32.totalorder %s393, %s394
      %p406 = scmp.eq.s32.totalorder %s55, 7
      %p407 = por %p405, %p406
      %p409 = scmp.ne.s32.totalorder %s394, %s408
      %p410 = scmp.eq.s32.totalorder %s55, 0
      %p411 = por %p409, %p410
      %s413 = sadd.s32 %s412, 1
      %p416 = scmp.eq.s32.totalorder %s49, 7
      %p417 = scmp.ne.s32.totalorder %s412, %s414
      %p418 = scmp.eq.s32.totalorder %s49, 0
      %p419 = por %p417, %p418
      %p420 = scmp.ne.s32.totalorder %s412, %s414
      %p421 = scmp.eq.s32.totalorder %s54, 7
      %p422 = por %p420, %p421
      %p423 = scmp.ne.s32.totalorder %s414, %s415
      %p424 = scmp.eq.s32.totalorder %s54, 0
      %p425 = por %p423, %p424
      %p426 = scmp.ne.s32.totalorder %s414, %s415
      %p427 = scmp.eq.s32.totalorder %s55, 7
      %p428 = por %p426, %p427
      %p430 = scmp.ne.s32.totalorder %s415, %s429
      %p431 = scmp.eq.s32.totalorder %s55, 0
      %p432 = por %p430, %p431
      %s434 = sadd.s32 %s433, 1
      %p437 = scmp.eq.s32.totalorder %s49, 7
      %p438 = scmp.ne.s32.totalorder %s433, %s435
      %p439 = scmp.eq.s32.totalorder %s49, 0
      %p440 = por %p438, %p439
      %p441 = scmp.ne.s32.totalorder %s433, %s435
      %p442 = scmp.eq.s32.totalorder %s54, 7
      %p443 = por %p441, %p442
      %p444 = scmp.ne.s32.totalorder %s435, %s436
      %p445 = scmp.eq.s32.totalorder %s54, 0
      %p446 = por %p444, %p445
      %p447 = scmp.ne.s32.totalorder %s435, %s436
      %p448 = scmp.eq.s32.totalorder %s55, 7
      %p449 = por %p447, %p448
      %p451 = scmp.ne.s32.totalorder %s436, %s450
      %p452 = scmp.eq.s32.totalorder %s55, 0
      %p453 = por %p451, %p452
      %s455 = sadd.s32 %s454, 1
      %p458 = scmp.eq.s32.totalorder %s49, 7
      %p459 = scmp.ne.s32.totalorder %s454, %s456
      %p460 = scmp.eq.s32.totalorder %s49, 0
      %p461 = por %p459, %p460
      %p462 = scmp.ne.s32.totalorder %s454, %s456
      %p463 = scmp.eq.s32.totalorder %s54, 7
      %p464 = por %p462, %p463
      %p465 = scmp.ne.s32.totalorder %s456, %s457
      %p466 = scmp.eq.s32.totalorder %s54, 0
      %p467 = por %p465, %p466
      %p468 = scmp.ne.s32.totalorder %s456, %s457
      %p469 = scmp.eq.s32.totalorder %s55, 7
      %p470 = por %p468, %p469
      %p472 = scmp.ne.s32.totalorder %s457, %s471
      %p473 = scmp.eq.s32.totalorder %s55, 0
      %p474 = por %p472, %p473
      %s476 = sadd.s32 %s475, 1
      %p479 = scmp.eq.s32.totalorder %s49, 7
      %p480 = scmp.ne.s32.totalorder %s475, %s477
      %p481 = scmp.eq.s32.totalorder %s49, 0
      %p482 = por %p480, %p481
      %p483 = scmp.ne.s32.totalorder %s475, %s477
      %p484 = scmp.eq.s32.totalorder %s54, 7
      %p485 = por %p483, %p484
      %p486 = scmp.ne.s32.totalorder %s477, %s478
      %p487 = scmp.eq.s32.totalorder %s54, 0
      %p488 = por %p486, %p487
      %p489 = scmp.ne.s32.totalorder %s477, %s478
      %p490 = scmp.eq.s32.totalorder %s55, 7
      %p491 = por %p489, %p490
      %p493 = scmp.ne.s32.totalorder %s478, %s492
      %p494 = scmp.eq.s32.totalorder %s55, 0
      %p495 = por %p493, %p494
      %s497 = sadd.s32 %s496, 1
      %p500 = scmp.eq.s32.totalorder %s49, 7
      %p501 = scmp.ne.s32.totalorder %s496, %s498
      %p502 = scmp.eq.s32.totalorder %s49, 0
      %p503 = por %p501, %p502
      %p504 = scmp.ne.s32.totalorder %s496, %s498
      %p505 = scmp.eq.s32.totalorder %s54, 7
      %p506 = por %p504, %p505
      %p507 = scmp.ne.s32.totalorder %s498, %s499
      %p508 = scmp.eq.s32.totalorder %s54, 0
      %p509 = por %p507, %p508
      %p510 = scmp.ne.s32.totalorder %s498, %s499
      %p511 = scmp.eq.s32.totalorder %s55, 7
      %p512 = por %p510, %p511
      %p514 = scmp.ne.s32.totalorder %s499, %s513
      %p515 = scmp.eq.s32.totalorder %s55, 0
      %p516 = por %p514, %p515
      %s518 = sadd.s32 %s517, 1
      %p521 = scmp.eq.s32.totalorder %s49, 7
      %p522 = scmp.ne.s32.totalorder %s517, %s519
      %p523 = scmp.eq.s32.totalorder %s49, 0
      %p524 = por %p522, %p523
      %p525 = scmp.ne.s32.totalorder %s517, %s519
      %p526 = scmp.eq.s32.totalorder %s54, 7
      %p527 = por %p525, %p526
      %p528 = scmp.ne.s32.totalorder %s519, %s520
      %p529 = scmp.eq.s32.totalorder %s54, 0
      %p530 = por %p528, %p529
      %p531 = scmp.ne.s32.totalorder %s519, %s520
      %p532 = scmp.eq.s32.totalorder %s55, 7
      %p533 = por %p531, %p532
      %p535 = scmp.ne.s32.totalorder %s520, %s534
      %p536 = scmp.eq.s32.totalorder %s55, 0
      %p537 = por %p535, %p536
      %s539 = sadd.s32 %s538, 1
      %p542 = scmp.eq.s32.totalorder %s49, 7
      %p543 = scmp.ne.s32.totalorder %s538, %s540
      %p544 = scmp.eq.s32.totalorder %s49, 0
      %p545 = por %p543, %p544
      %p546 = scmp.ne.s32.totalorder %s538, %s540
      %p547 = scmp.eq.s32.totalorder %s54, 7
      %p548 = por %p546, %p547
      %p549 = scmp.ne.s32.totalorder %s540, %s541
      %p550 = scmp.eq.s32.totalorder %s54, 0
      %p551 = por %p549, %p550
      %p552 = scmp.ne.s32.totalorder %s540, %s541
      %p553 = scmp.eq.s32.totalorder %s55, 7
      %p554 = por %p552, %p553
      %p556 = scmp.ne.s32.totalorder %s541, %s555
      %p557 = scmp.eq.s32.totalorder %s55, 0
      %p558 = por %p556, %p557
      %s560 = sadd.s32 %s559, 1
      %p563 = scmp.eq.s32.totalorder %s49, 7
      %p564 = scmp.ne.s32.totalorder %s559, %s561
      %p565 = scmp.eq.s32.totalorder %s49, 0
      %p566 = por %p564, %p565
      %p567 = scmp.ne.s32.totalorder %s559, %s561
      %p568 = scmp.eq.s32.totalorder %s54, 7
      %p569 = por %p567, %p568
      %p570 = scmp.ne.s32.totalorder %s561, %s562
      %p571 = scmp.eq.s32.totalorder %s54, 0
      %p572 = por %p570, %p571
      %p573 = scmp.ne.s32.totalorder %s561, %s562
      %p574 = scmp.eq.s32.totalorder %s55, 7
      %p575 = por %p573, %p574
      %p577 = scmp.ne.s32.totalorder %s562, %s576
      %p578 = scmp.eq.s32.totalorder %s55, 0
      %p579 = por %p577, %p578
      %s581 = sadd.s32 %s580, 1
      %p584 = scmp.eq.s32.totalorder %s49, 7
      %p585 = scmp.ne.s32.totalorder %s580, %s582
      %p586 = scmp.eq.s32.totalorder %s49, 0
      %p587 = por %p585, %p586
      %p588 = scmp.ne.s32.totalorder %s580, %s582
      %p589 = scmp.eq.s32.totalorder %s54, 7
      %p590 = por %p588, %p589
      %p591 = scmp.ne.s32.totalorder %s582, %s583
      %p592 = scmp.eq.s32.totalorder %s54, 0
      %p593 = por %p591, %p592
      %p594 = scmp.ne.s32.totalorder %s582, %s583
      %p595 = scmp.eq.s32.totalorder %s55, 7
      %p596 = por %p594, %p595
      %p598 = scmp.ne.s32.totalorder %s583, %s597
      %p599 = scmp.eq.s32.totalorder %s55, 0
      %p600 = por %p598, %p599
      %s602 = sadd.s32 %s601, 1
      %p605 = scmp.eq.s32.totalorder %s49, 7
      %p606 = scmp.ne.s32.totalorder %s601, %s603
      %p607 = scmp.eq.s32.totalorder %s49, 0
      %p608 = por %p606, %p607
      %p609 = scmp.ne.s32.totalorder %s601, %s603
      %p610 = scmp.eq.s32.totalorder %s54, 7
      %p611 = por %p609, %p610
      %p612 = scmp.ne.s32.totalorder %s603, %s604
      %p613 = scmp.eq.s32.totalorder %s54, 0
      %p614 = por %p612, %p613
      %p615 = scmp.ne.s32.totalorder %s603, %s604
      %p616 = scmp.eq.s32.totalorder %s55, 7
      %p617 = por %p615, %p616
      %p619 = scmp.ne.s32.totalorder %s604, %s618
      %p620 = scmp.eq.s32.totalorder %s55, 0
      %p621 = por %p619, %p620
      %s623 = sadd.s32 %s622, 1
      %p626 = scmp.eq.s32.totalorder %s49, 7
      %p627 = scmp.ne.s32.totalorder %s622, %s624
      %p628 = scmp.eq.s32.totalorder %s49, 0
      %p629 = por %p627, %p628
      %p630 = scmp.ne.s32.totalorder %s622, %s624
      %p631 = scmp.eq.s32.totalorder %s54, 7
      %p632 = por %p630, %p631
      %p633 = scmp.ne.s32.totalorder %s624, %s625
      %p634 = scmp.eq.s32.totalorder %s54, 0
      %p635 = por %p633, %p634
      %p636 = scmp.ne.s32.totalorder %s624, %s625
      %p637 = scmp.eq.s32.totalorder %s55, 7
      %p638 = por %p636, %p637
      %p640 = scmp.ne.s32.totalorder %s625, %s639
      %p641 = scmp.eq.s32.totalorder %s55, 0
      %p642 = por %p640, %p641
      %s643 = ssub.s32 %s56, %s68
      %p644 = scmp.eq.s32.totalorder %s643, 0
      %s646 = sadd.s32 %s645, 1
      %s647 = scalar_select %p644, %s645, %s646
      %p650 = pneg %p644
      %p651 = scmp.eq.s32.totalorder %s49, 7
      %p652 = por %p650, %p651
      %p653 = scmp.ne.s32.totalorder %s645, %s648
      %p654 = scmp.eq.s32.totalorder %s49, 0
      %p655 = por %p653, %p654
      %p656 = scmp.ne.s32.totalorder %s645, %s648
      %p657 = scmp.eq.s32.totalorder %s54, 7
      %p658 = por %p656, %p657
      %p659 = scmp.ne.s32.totalorder %s648, %s649
      %p660 = scmp.eq.s32.totalorder %s54, 0
      %p661 = por %p659, %p660
      %p662 = scmp.ne.s32.totalorder %s648, %s649
      %p663 = scmp.eq.s32.totalorder %s55, 7
      %p664 = por %p662, %p663
      %p666 = scmp.ne.s32.totalorder %s649, %s665
      %p667 = scmp.eq.s32.totalorder %s55, 0
      %p668 = por %p666, %p667
      %s669 = ssub.s32 %s56, %s68
      %s670 = ssub.s32 %s57, %s64
      %s671 = sor.u32 %s669, %s670
      %p672 = scmp.eq.s32.totalorder %s671, 0
      %s674 = sadd.s32 %s673, 1
      %s675 = scalar_select %p672, %s673, %s674
      %p678 = pneg %p672
      %p679 = scmp.eq.s32.totalorder %s49, 7
      %p680 = por %p678, %p679
      %p681 = scmp.ne.s32.totalorder %s673, %s676
      %p682 = scmp.eq.s32.totalorder %s49, 0
      %p683 = por %p681, %p682
      %p684 = scmp.ne.s32.totalorder %s673, %s676
      %p685 = scmp.eq.s32.totalorder %s54, 7
      %p686 = por %p684, %p685
      %p687 = scmp.ne.s32.totalorder %s676, %s677
      %p688 = scmp.eq.s32.totalorder %s54, 0
      %p689 = por %p687, %p688
      %p690 = scmp.ne.s32.totalorder %s676, %s677
      %p691 = scmp.eq.s32.totalorder %s55, 7
      %p692 = por %p690, %p691
      %p694 = scmp.ne.s32.totalorder %s677, %s693
      %p695 = scmp.eq.s32.totalorder %s55, 0
      %p696 = por %p694, %p695
      %p697 = scmp.le.s32.totalorder 1, %s49
      %p698 = scmp.lt.s32.totalorder %s49, 9
      %p699 = pnand %p697, %p698
      %p700 = pneg %p699
      // Predicated region
      $region9: #{slot_video_forward.1} parent=5 // pred_check
        _
      $region10: #{slot_video_forward.1} parent=5 // pred_check_branch
        %702 = sbr.rel (%p699) target = $region12
      $region11: #{slot_video_forward.1} parent=5 // pred_region
        %s703 = ssub.s32 %s49, 1
        // Predicated region
        $region13: #{slot_video_forward.1} parent=11 // pred_check
          %p704 = pneg %p110
        $region14: #{slot_video_forward.1} parent=11 // pred_check_branch
          %706 = sbr.rel (%p704) target = $region16
        $region15: #{slot_video_forward.1} parent=11 // pred_region
          _
        $region16: #{slot_video_forward.1} parent=11 // pred_fallthru
          _
        // Predicated region
        $region17: #{slot_video_forward.1} parent=11 // pred_check
          %p707 = pneg %p131
        $region18: #{slot_video_forward.1} parent=11 // pred_check_branch
          %709 = sbr.rel (%p707) target = $region20
        $region19: #{slot_video_forward.1} parent=11 // pred_region
          _
        $region20: #{slot_video_forward.1} parent=11 // pred_fallthru
          _
        // Predicated region
        $region21: #{slot_video_forward.1} parent=11 // pred_check
          %p710 = pneg %p152
        $region22: #{slot_video_forward.1} parent=11 // pred_check_branch
          %712 = sbr.rel (%p710) target = $region24
        $region23: #{slot_video_forward.1} parent=11 // pred_region
          _
        $region24: #{slot_video_forward.1} parent=11 // pred_fallthru
          _
        // Predicated region
        $region25: #{slot_video_forward.1} parent=11 // pred_check
          %p713 = pneg %p173
        $region26: #{slot_video_forward.1} parent=11 // pred_check_branch
          %715 = sbr.rel (%p713) target = $region28
        $region27: #{slot_video_forward.1} parent=11 // pred_region
          %s717 = ssub.s32 512, 512
          %718 = vsyncadd [#allocation4], %s717
          %s719 = sshll.u32 [#allocation3], 4
          %s720 = int_to_ptr.vmem [resolvable:$true] %s719
          %725 = dma.hbm_to_vmem [thread:$0]  %s4, 512, %s720, [#allocation4], 128, 128, 8
        $region28: #{slot_video_forward.1} parent=11 // pred_fallthru
          _
        // Predicated region
        $region29: #{slot_video_forward.1} parent=11 // pred_check
          %p726 = pneg %p194
        $region30: #{slot_video_forward.1} parent=11 // pred_check_branch
          %728 = sbr.rel (%p726) target = $region32
        $region31: #{slot_video_forward.1} parent=11 // pred_region
          %s730 = ssub.s32 16, 16
          %731 = vsyncadd [#allocation7], %s730
          %s733 = sshll.u32 [#allocation6], 4
          %s734 = int_to_ptr.vmem [resolvable:$true] %s733
          %736 = dma.hbm_to_vmem [thread:$0]  %s5, 16, %s734, [#allocation7]
        $region32: #{slot_video_forward.1} parent=11 // pred_fallthru
          _
        // Predicated region
        $region33: #{slot_video_forward.1} parent=11 // pred_check
          %p737 = pneg %p215
        $region34: #{slot_video_forward.1} parent=11 // pred_check_branch
          %739 = sbr.rel (%p737) target = $region36
        $region35: #{slot_video_forward.1} parent=11 // pred_region
          _
        $region36: #{slot_video_forward.1} parent=11 // pred_fallthru
          _
        // Predicated region
        $region37: #{slot_video_forward.1} parent=11 // pred_check
          %p740 = pneg %p236
        $region38: #{slot_video_forward.1} parent=11 // pred_check_branch
          %742 = sbr.rel (%p740) target = $region40
        $region39: #{slot_video_forward.1} parent=11 // pred_region
          %s744 = ssub.s32 16, 16
          %745 = vsyncadd [#allocation7], %s744
          %s747 = sshll.u32 [#allocation8], 4
          %s748 = int_to_ptr.vmem [resolvable:$true] %s747
          %750 = dma.hbm_to_vmem [thread:$0]  %s7, 16, %s748, [#allocation7]
        $region40: #{slot_video_forward.1} parent=11 // pred_fallthru
          _
        // Predicated region
        $region41: #{slot_video_forward.1} parent=11 // pred_check
          %p751 = pneg %p257
        $region42: #{slot_video_forward.1} parent=11 // pred_check_branch
          %753 = sbr.rel (%p751) target = $region44
        $region43: #{slot_video_forward.1} parent=11 // pred_region
          %s755 = ssub.s32 128, 128
          %756 = vsyncadd [#allocation10], %s755
          %s758 = sshll.u32 [#allocation9], 4
          %s759 = int_to_ptr.vmem [resolvable:$true] %s758
          %761 = dma.hbm_to_vmem [thread:$0]  %s8, 128, %s759, [#allocation10]
        $region44: #{slot_video_forward.1} parent=11 // pred_fallthru
          _
        // Predicated region
        $region45: #{slot_video_forward.1} parent=11 // pred_check
          %p762 = pneg %p278
        $region46: #{slot_video_forward.1} parent=11 // pred_check_branch
          %764 = sbr.rel (%p762) target = $region48
        $region47: #{slot_video_forward.1} parent=11 // pred_region
          %s766 = ssub.s32 16, 16
          %767 = vsyncadd [#allocation10], %s766
          %s769 = sshll.u32 [#allocation11], 4
          %s770 = int_to_ptr.vmem [resolvable:$true] %s769
          %772 = dma.hbm_to_vmem [thread:$0]  %s9, 16, %s770, [#allocation10]
        $region48: #{slot_video_forward.1} parent=11 // pred_fallthru
          _
        // Predicated region
        $region49: #{slot_video_forward.1} parent=11 // pred_check
          %p773 = pneg %p299
        $region50: #{slot_video_forward.1} parent=11 // pred_check_branch
          %775 = sbr.rel (%p773) target = $region52
        $region51: #{slot_video_forward.1} parent=11 // pred_region
          %s777 = ssub.s32 16, 16
          %778 = vsyncadd [#allocation13], %s777
          %s780 = sshll.u32 [#allocation12], 4
          %s781 = int_to_ptr.vmem [resolvable:$true] %s780
          %783 = dma.hbm_to_vmem [thread:$0]  %s10, 16, %s781, [#allocation13]
        $region52: #{slot_video_forward.1} parent=11 // pred_fallthru
          _
        // Predicated region
        $region53: #{slot_video_forward.1} parent=11 // pred_check
          %p784 = pneg %p320
        $region54: #{slot_video_forward.1} parent=11 // pred_check_branch
          %786 = sbr.rel (%p784) target = $region56
        $region55: #{slot_video_forward.1} parent=11 // pred_region
          _
        $region56: #{slot_video_forward.1} parent=11 // pred_fallthru
          _
        // Predicated region
        $region57: #{slot_video_forward.1} parent=11 // pred_check
          %p787 = pneg %p341
        $region58: #{slot_video_forward.1} parent=11 // pred_check_branch
          %789 = sbr.rel (%p787) target = $region60
        $region59: #{slot_video_forward.1} parent=11 // pred_region
          _
        $region60: #{slot_video_forward.1} parent=11 // pred_fallthru
          _
        // Predicated region
        $region61: #{slot_video_forward.1} parent=11 // pred_check
          %p790 = pneg %p362
        $region62: #{slot_video_forward.1} parent=11 // pred_check_branch
          %792 = sbr.rel (%p790) target = $region64
        $region63: #{slot_video_forward.1} parent=11 // pred_region
          %s794 = ssub.s32 16, 16
          %795 = vsyncadd [#allocation13], %s794
          %s797 = sshll.u32 [#allocation14], 4
          %s798 = int_to_ptr.vmem [resolvable:$true] %s797
          %800 = dma.hbm_to_vmem [thread:$0]  %s13, 16, %s798, [#allocation13]
        $region64: #{slot_video_forward.1} parent=11 // pred_fallthru
          _
        // Predicated region
        $region65: #{slot_video_forward.1} parent=11 // pred_check
          %p801 = pneg %p383
        $region66: #{slot_video_forward.1} parent=11 // pred_check_branch
          %803 = sbr.rel (%p801) target = $region68
        $region67: #{slot_video_forward.1} parent=11 // pred_region
          %s805 = ssub.s32 16, 16
          %806 = vsyncadd [#allocation16], %s805
          %s808 = sshll.u32 [#allocation15], 4
          %s809 = int_to_ptr.vmem [resolvable:$true] %s808
          %811 = dma.hbm_to_vmem [thread:$0]  %s14, 16, %s809, [#allocation16]
        $region68: #{slot_video_forward.1} parent=11 // pred_fallthru
          _
        // Predicated region
        $region69: #{slot_video_forward.1} parent=11 // pred_check
          %p812 = pneg %p404
        $region70: #{slot_video_forward.1} parent=11 // pred_check_branch
          %814 = sbr.rel (%p812) target = $region72
        $region71: #{slot_video_forward.1} parent=11 // pred_region
          _
        $region72: #{slot_video_forward.1} parent=11 // pred_fallthru
          _
        // Predicated region
        $region73: #{slot_video_forward.1} parent=11 // pred_check
          %p815 = pneg %p425
        $region74: #{slot_video_forward.1} parent=11 // pred_check_branch
          %817 = sbr.rel (%p815) target = $region76
        $region75: #{slot_video_forward.1} parent=11 // pred_region
          %s819 = ssub.s32 16, 16
          %820 = vsyncadd [#allocation16], %s819
          %s822 = sshll.u32 [#allocation17], 4
          %s823 = int_to_ptr.vmem [resolvable:$true] %s822
          %825 = dma.hbm_to_vmem [thread:$0]  %s16, 16, %s823, [#allocation16]
        $region76: #{slot_video_forward.1} parent=11 // pred_fallthru
          _
        // Predicated region
        $region77: #{slot_video_forward.1} parent=11 // pred_check
          %p826 = pneg %p446
        $region78: #{slot_video_forward.1} parent=11 // pred_check_branch
          %828 = sbr.rel (%p826) target = $region80
        $region79: #{slot_video_forward.1} parent=11 // pred_region
          _
        $region80: #{slot_video_forward.1} parent=11 // pred_fallthru
          _
        // Predicated region
        $region81: #{slot_video_forward.1} parent=11 // pred_check
          %p829 = pneg %p467
        $region82: #{slot_video_forward.1} parent=11 // pred_check_branch
          %831 = sbr.rel (%p829) target = $region84
        $region83: #{slot_video_forward.1} parent=11 // pred_region
          _
        $region84: #{slot_video_forward.1} parent=11 // pred_fallthru
          _
        // Predicated region
        $region85: #{slot_video_forward.1} parent=11 // pred_check
          %p832 = pneg %p488
        $region86: #{slot_video_forward.1} parent=11 // pred_check_branch
          %834 = sbr.rel (%p832) target = $region88
        $region87: #{slot_video_forward.1} parent=11 // pred_region
          _
        $region88: #{slot_video_forward.1} parent=11 // pred_fallthru
          _
        // Predicated region
        $region89: #{slot_video_forward.1} parent=11 // pred_check
          %p835 = pneg %p509
        $region90: #{slot_video_forward.1} parent=11 // pred_check_branch
          %837 = sbr.rel (%p835) target = $region92
        $region91: #{slot_video_forward.1} parent=11 // pred_region
          _
        $region92: #{slot_video_forward.1} parent=11 // pred_fallthru
          _
        // Predicated region
        $region93: #{slot_video_forward.1} parent=11 // pred_check
          %p838 = pneg %p530
        $region94: #{slot_video_forward.1} parent=11 // pred_check_branch
          %840 = sbr.rel (%p838) target = $region96
        $region95: #{slot_video_forward.1} parent=11 // pred_region
          %s842 = ssub.s32 16, 16
          %843 = vsyncadd [#allocation19], %s842
          %s845 = sshll.u32 [#allocation18], 4
          %s846 = int_to_ptr.vmem [resolvable:$true] %s845
          %848 = dma.hbm_to_vmem [thread:$0]  %s21, 16, %s846, [#allocation19]
        $region96: #{slot_video_forward.1} parent=11 // pred_fallthru
          _
        // Predicated region
        $region97: #{slot_video_forward.1} parent=11 // pred_check
          %p849 = pneg %p551
        $region98: #{slot_video_forward.1} parent=11 // pred_check_branch
          %851 = sbr.rel (%p849) target = $region100
        $region99: #{slot_video_forward.1} parent=11 // pred_region
          %s853 = ssub.s32 16, 16
          %854 = vsyncadd [#allocation19], %s853
          %s856 = sshll.u32 [#allocation20], 4
          %s857 = int_to_ptr.vmem [resolvable:$true] %s856
          %859 = dma.hbm_to_vmem [thread:$0]  %s22, 16, %s857, [#allocation19]
        $region100: #{slot_video_forward.1} parent=11 // pred_fallthru
          _
        // Predicated region
        $region101: #{slot_video_forward.1} parent=11 // pred_check
          %p860 = pneg %p572
        $region102: #{slot_video_forward.1} parent=11 // pred_check_branch
          %862 = sbr.rel (%p860) target = $region104
        $region103: #{slot_video_forward.1} parent=11 // pred_region
          %s864 = ssub.s32 512, 512
          %865 = vsyncadd [#allocation22], %s864
          %s866 = sshll.u32 [#allocation21], 4
          %s867 = int_to_ptr.vmem [resolvable:$true] %s866
          %872 = dma.hbm_to_vmem [thread:$0]  %s23, 512, %s867, [#allocation22], 128, 128, 8
        $region104: #{slot_video_forward.1} parent=11 // pred_fallthru
          _
        // Predicated region
        $region105: #{slot_video_forward.1} parent=11 // pred_check
          %p873 = pneg %p593
        $region106: #{slot_video_forward.1} parent=11 // pred_check_branch
          %875 = sbr.rel (%p873) target = $region108
        $region107: #{slot_video_forward.1} parent=11 // pred_region
          %s877 = ssub.s32 16, 16
          %878 = vsyncadd [#allocation22], %s877
          %s880 = sshll.u32 [#allocation23], 4
          %s881 = int_to_ptr.vmem [resolvable:$true] %s880
          %883 = dma.hbm_to_vmem [thread:$0]  %s24, 16, %s881, [#allocation22]
        $region108: #{slot_video_forward.1} parent=11 // pred_fallthru
          _
        // Predicated region
        $region109: #{slot_video_forward.1} parent=11 // pred_check
          %p884 = pneg %p614
        $region110: #{slot_video_forward.1} parent=11 // pred_check_branch
          %886 = sbr.rel (%p884) target = $region112
        $region111: #{slot_video_forward.1} parent=11 // pred_region
          %s888 = ssub.s32 512, 512
          %889 = vsyncadd [#allocation25], %s888
          %s890 = sshll.u32 [#allocation24], 4
          %s891 = int_to_ptr.vmem [resolvable:$true] %s890
          %896 = dma.hbm_to_vmem [thread:$0]  %s25, 512, %s891, [#allocation25], 128, 128, 8
        $region112: #{slot_video_forward.1} parent=11 // pred_fallthru
          _
        // Predicated region
        $region113: #{slot_video_forward.1} parent=11 // pred_check
          %p897 = pneg %p635
        $region114: #{slot_video_forward.1} parent=11 // pred_check_branch
          %899 = sbr.rel (%p897) target = $region116
        $region115: #{slot_video_forward.1} parent=11 // pred_region
          %s901 = ssub.s32 16, 16
          %902 = vsyncadd [#allocation25], %s901
          %s904 = sshll.u32 [#allocation26], 4
          %s905 = int_to_ptr.vmem [resolvable:$true] %s904
          %907 = dma.hbm_to_vmem [thread:$0]  %s26, 16, %s905, [#allocation25]
        $region116: #{slot_video_forward.1} parent=11 // pred_fallthru
          _
      $region12: #{slot_video_forward.1} parent=5 // pred_fallthru
        _
      %p908 = scmp.lt.s32.totalorder %s49, 8
      // Predicated region
      $region117: #{slot_video_forward.1} parent=5 // pred_check
        %p909 = pneg %p908
      $region118: #{slot_video_forward.1} parent=5 // pred_check_branch
        %911 = sbr.rel (%p909) target = $region120
      $region119: #{slot_video_forward.1} parent=5 // pred_region
        // Predicated region
        $region121: #{slot_video_forward.1} parent=119 // pred_check
          %p912 = pneg %p83
        $region122: #{slot_video_forward.1} parent=119 // pred_check_branch
          %914 = sbr.rel (%p912) target = $region124
        $region123: #{slot_video_forward.1} parent=119 // pred_region
          %p915 = scmp.lt.s32.totalorder %s56, 1
          %s916 = scalar_select %p915, %s56, 1
          %p917 = scmp.lt.s32.totalorder %s57, 3
          %s918 = scalar_select %p917, %s57, 3
          %s919 = smul.addr %s918, 16
          %s920 = smul.addr %s916, 64
          %s921 = sadd.s32 %s919, %s920
          %s922 = smul.addr %s921, 8
          %s923 = scalar_lea.vmem %s0, %s922
        $region124: #{slot_video_forward.1} parent=119 // pred_fallthru
          _
      $region120: #{slot_video_forward.1} parent=5 // pred_fallthru
        _
      %p924 = scmp.le.s32.totalorder 1, %s49
      %p925 = scmp.lt.s32.totalorder %s49, 9
      %p926 = pnand %p924, %p925
      %p927 = pneg %p926
      // Predicated region
      $region125: #{slot_video_forward.1} parent=5 // pred_check
        _
      $region126: #{slot_video_forward.1} parent=5 // pred_check_branch
        %929 = sbr.rel (%p926) target = $region128
      $region127: #{slot_video_forward.1} parent=5 // pred_region
        %s930 = ssub.s32 %s49, 1
        // Predicated region
        $region129: #{slot_video_forward.1} parent=127 // pred_check
          %p931 = pneg %p173
        $region130: #{slot_video_forward.1} parent=127 // pred_check_branch
          %933 = sbr.rel (%p931) target = $region132
        $region131: #{slot_video_forward.1} parent=127 // pred_region
          %934 = dma.done [#allocation4], 512
        $region132: #{slot_video_forward.1} parent=127 // pred_fallthru
          _
        // Predicated region
        $region133: #{slot_video_forward.1} parent=127 // pred_check
          %p935 = pneg %p194
        $region134: #{slot_video_forward.1} parent=127 // pred_check_branch
          %937 = sbr.rel (%p935) target = $region136
        $region135: #{slot_video_forward.1} parent=127 // pred_region
          %938 = dma.done [#allocation7], 16
        $region136: #{slot_video_forward.1} parent=127 // pred_fallthru
          _
        // Predicated region
        $region137: #{slot_video_forward.1} parent=127 // pred_check
          %p939 = pneg %p236
        $region138: #{slot_video_forward.1} parent=127 // pred_check_branch
          %941 = sbr.rel (%p939) target = $region140
        $region139: #{slot_video_forward.1} parent=127 // pred_region
          %942 = dma.done [#allocation7], 16
        $region140: #{slot_video_forward.1} parent=127 // pred_fallthru
          _
        // Predicated region
        $region141: #{slot_video_forward.1} parent=127 // pred_check
          %p943 = pneg %p257
        $region142: #{slot_video_forward.1} parent=127 // pred_check_branch
          %945 = sbr.rel (%p943) target = $region144
        $region143: #{slot_video_forward.1} parent=127 // pred_region
          %946 = dma.done [#allocation10], 128
        $region144: #{slot_video_forward.1} parent=127 // pred_fallthru
          _
        // Predicated region
        $region145: #{slot_video_forward.1} parent=127 // pred_check
          %p947 = pneg %p278
        $region146: #{slot_video_forward.1} parent=127 // pred_check_branch
          %949 = sbr.rel (%p947) target = $region148
        $region147: #{slot_video_forward.1} parent=127 // pred_region
          %950 = dma.done [#allocation10], 16
        $region148: #{slot_video_forward.1} parent=127 // pred_fallthru
          _
        // Predicated region
        $region149: #{slot_video_forward.1} parent=127 // pred_check
          %p951 = pneg %p299
        $region150: #{slot_video_forward.1} parent=127 // pred_check_branch
          %953 = sbr.rel (%p951) target = $region152
        $region151: #{slot_video_forward.1} parent=127 // pred_region
          %954 = dma.done [#allocation13], 16
        $region152: #{slot_video_forward.1} parent=127 // pred_fallthru
          _
        // Predicated region
        $region153: #{slot_video_forward.1} parent=127 // pred_check
          %p955 = pneg %p362
        $region154: #{slot_video_forward.1} parent=127 // pred_check_branch
          %957 = sbr.rel (%p955) target = $region156
        $region155: #{slot_video_forward.1} parent=127 // pred_region
          %958 = dma.done [#allocation13], 16
        $region156: #{slot_video_forward.1} parent=127 // pred_fallthru
          _
        // Predicated region
        $region157: #{slot_video_forward.1} parent=127 // pred_check
          %p959 = pneg %p383
        $region158: #{slot_video_forward.1} parent=127 // pred_check_branch
          %961 = sbr.rel (%p959) target = $region160
        $region159: #{slot_video_forward.1} parent=127 // pred_region
          %962 = dma.done [#allocation16], 16
        $region160: #{slot_video_forward.1} parent=127 // pred_fallthru
          _
        // Predicated region
        $region161: #{slot_video_forward.1} parent=127 // pred_check
          %p963 = pneg %p425
        $region162: #{slot_video_forward.1} parent=127 // pred_check_branch
          %965 = sbr.rel (%p963) target = $region164
        $region163: #{slot_video_forward.1} parent=127 // pred_region
          %966 = dma.done [#allocation16], 16
        $region164: #{slot_video_forward.1} parent=127 // pred_fallthru
          _
        // Predicated region
        $region165: #{slot_video_forward.1} parent=127 // pred_check
          %p967 = pneg %p530
        $region166: #{slot_video_forward.1} parent=127 // pred_check_branch
          %969 = sbr.rel (%p967) target = $region168
        $region167: #{slot_video_forward.1} parent=127 // pred_region
          %970 = dma.done [#allocation19], 16
        $region168: #{slot_video_forward.1} parent=127 // pred_fallthru
          _
        // Predicated region
        $region169: #{slot_video_forward.1} parent=127 // pred_check
          %p971 = pneg %p551
        $region170: #{slot_video_forward.1} parent=127 // pred_check_branch
          %973 = sbr.rel (%p971) target = $region172
        $region171: #{slot_video_forward.1} parent=127 // pred_region
          %974 = dma.done [#allocation19], 16
        $region172: #{slot_video_forward.1} parent=127 // pred_fallthru
          _
        // Predicated region
        $region173: #{slot_video_forward.1} parent=127 // pred_check
          %p975 = pneg %p572
        $region174: #{slot_video_forward.1} parent=127 // pred_check_branch
          %977 = sbr.rel (%p975) target = $region176
        $region175: #{slot_video_forward.1} parent=127 // pred_region
          %978 = dma.done [#allocation22], 512
        $region176: #{slot_video_forward.1} parent=127 // pred_fallthru
          _
        // Predicated region
        $region177: #{slot_video_forward.1} parent=127 // pred_check
          %p979 = pneg %p593
        $region178: #{slot_video_forward.1} parent=127 // pred_check_branch
          %981 = sbr.rel (%p979) target = $region180
        $region179: #{slot_video_forward.1} parent=127 // pred_region
          %982 = dma.done [#allocation22], 16
        $region180: #{slot_video_forward.1} parent=127 // pred_fallthru
          _
        // Predicated region
        $region181: #{slot_video_forward.1} parent=127 // pred_check
          %p983 = pneg %p614
        $region182: #{slot_video_forward.1} parent=127 // pred_check_branch
          %985 = sbr.rel (%p983) target = $region184
        $region183: #{slot_video_forward.1} parent=127 // pred_region
          %986 = dma.done [#allocation25], 512
        $region184: #{slot_video_forward.1} parent=127 // pred_fallthru
          _
        // Predicated region
        $region185: #{slot_video_forward.1} parent=127 // pred_check
          %p987 = pneg %p635
        $region186: #{slot_video_forward.1} parent=127 // pred_check_branch
          %989 = sbr.rel (%p987) target = $region188
        $region187: #{slot_video_forward.1} parent=127 // pred_region
          %990 = dma.done [#allocation25], 16
        $region188: #{slot_video_forward.1} parent=127 // pred_fallthru
          _
        %p991 = scmp.lt.s32.totalorder %s58, 1
        %s992 = scalar_select %p991, %s58, 1
        %p993 = scmp.lt.s32.totalorder %s59, 3
        %s994 = scalar_select %p993, %s59, 3
        %s995 = smul.addr %s994, 16
        %s996 = smul.addr %s992, 64
        %s997 = sadd.s32 %s995, %s996
        %s998 = smul.addr %s997, 8
        %s999 = scalar_lea.vmem %s0, %s998
        %p1000 = pneg %p89
        %p1001 = pneg %p86
        %p1002 = pneg %p110
        %p1003 = pneg %p107
        %p1004 = pneg %p131
        %p1005 = pneg %p128
        %p1006 = pneg %p152
        %p1007 = pneg %p149
        %p1008 = pneg %p173
        %p1009 = pneg %p170
        %p1010 = pneg %p194
        %p1011 = pneg %p191
        %p1012 = pneg %p215
        %p1013 = pneg %p212
        %p1014 = pneg %p236
        %p1015 = pneg %p233
        %p1016 = pneg %p257
        %p1017 = pneg %p254
        %p1018 = pneg %p278
        %p1019 = pneg %p275
        %p1020 = pneg %p299
        %p1021 = pneg %p296
        %p1022 = pneg %p320
        %p1023 = pneg %p317
        %p1024 = pneg %p341
        %p1025 = pneg %p338
        %p1026 = pneg %p362
        %p1027 = pneg %p359
        %p1028 = pneg %p383
        %p1029 = pneg %p380
        %p1030 = pneg %p404
        %p1031 = pneg %p401
        %p1032 = pneg %p425
        %p1033 = pneg %p422
        %p1034 = pneg %p446
        %p1035 = pneg %p443
        %p1036 = pneg %p467
        %p1037 = pneg %p464
        %p1038 = pneg %p488
        %p1039 = pneg %p485
        %p1040 = pneg %p509
        %p1041 = pneg %p506
        %p1042 = pneg %p530
        %p1043 = pneg %p527
        %p1044 = pneg %p551
        %p1045 = pneg %p548
        %p1046 = pneg %p572
        %p1047 = pneg %p569
        %p1048 = pneg %p593
        %p1049 = pneg %p590
        %p1050 = pneg %p614
        %p1051 = pneg %p611
        %p1052 = pneg %p635
        %p1053 = pneg %p632
        %p1054 = pneg %p661
        %p1055 = pneg %p658
        %s1056 = sand.u32 %s648, 1
        %s1057 = scalar_lea.sflag [#allocation5], %s1056
        %s1058 = sand.u32 %s648, 1
        %s1059 = smul.addr %s1058, 8
        %s1060 = scalar_lea.vmem [#allocation27], %s1059
        %p1061 = pneg %p689
        %p1062 = pneg %p686
        %s1063 = sand.u32 %s676, 1
        %s1064 = scalar_lea.sflag [#allocation29], %s1063
        %s1065 = sand.u32 %s676, 1
        %s1066 = smul.addr %s1065, 8
        %s1067 = scalar_lea.vmem [#allocation28], %s1066
        %p1068 = scmp.lt.s32.totalorder %s58, 1
        %s1069 = scalar_select %p1068, %s58, 1
        %p1070 = scmp.lt.s32.totalorder %s59, 3
        %s1071 = scalar_select %p1070, %s59, 3
        %s1072 = smul.addr %s1071, 16
        %s1073 = smul.addr %s1069, 64
        %s1074 = sadd.s32 %s1072, %s1073
        %s1075 = smul.addr %s1074, 8
        %s1076 = scalar_lea.vmem %s0, %s1075
        %v1077 = vld [vmem:[%s1076] sm:$0xff]
        %v1078 = vld [vmem:[%s1076 + $0x8] sm:$0xff]
        %v1079 = vld [vmem:[%s1076 + $0x10] sm:$0xff]
        %v1080 = vld [vmem:[%s1076 + $0x18] sm:$0xff]
        %v1081 = vld [vmem:[%s1076 + $0x20] sm:$0xff]
        %v1082 = vld [vmem:[%s1076 + $0x28] sm:$0xff]
        %v1083 = vld [vmem:[%s1076 + $0x30] sm:$0xff]
        %v1084 = vld [vmem:[%s1076 + $0x38] sm:$0xff]
        %v1085 = vld [vmem:[%s1076 + $0x40] sm:$0xff]
        %v1086 = vld [vmem:[%s1076 + $0x48] sm:$0xff]
        %v1087 = vld [vmem:[%s1076 + $0x50] sm:$0xff]
        %v1088 = vld [vmem:[%s1076 + $0x58] sm:$0xff]
        %v1089 = vld [vmem:[%s1076 + $0x60] sm:$0xff]
        %v1090 = vld [vmem:[%s1076 + $0x68] sm:$0xff]
        %v1091 = vld [vmem:[%s1076 + $0x70] sm:$0xff]
        %v1092 = vld [vmem:[%s1076 + $0x78] sm:$0xff]
        %v1093 = vld [vmem:[%s1] sm:$0xff]
        %v1094 = vld [vmem:[%s1 + $0x8] sm:$0xff]
        %v1095 = vld [vmem:[%s1 + $0x10] sm:$0xff]
        %v1096 = vld [vmem:[%s1 + $0x18] sm:$0xff]
        %v1097 = vld [vmem:[%s1 + $0x20] sm:$0xff]
        %v1098 = vld [vmem:[%s1 + $0x28] sm:$0xff]
        %v1099 = vld [vmem:[%s1 + $0x30] sm:$0xff]
        %v1100 = vld [vmem:[%s1 + $0x38] sm:$0xff]
        %v1101 = vld [vmem:[%s1 + $0x40] sm:$0xff]
        %v1102 = vld [vmem:[%s1 + $0x48] sm:$0xff]
        %v1103 = vld [vmem:[%s1 + $0x50] sm:$0xff]
        %v1104 = vld [vmem:[%s1 + $0x58] sm:$0xff]
        %v1105 = vld [vmem:[%s1 + $0x60] sm:$0xff]
        %v1106 = vld [vmem:[%s1 + $0x68] sm:$0xff]
        %v1107 = vld [vmem:[%s1 + $0x70] sm:$0xff]
        %v1108 = vld [vmem:[%s1 + $0x78] sm:$0xff]
        %v1109 = vadd.f32 %v1077, %v1093
        %v1110 = vadd.f32 %v1078, %v1094
        %v1111 = vadd.f32 %v1079, %v1095
        %v1112 = vadd.f32 %v1080, %v1096
        %v1113 = vadd.f32 %v1081, %v1097
        %v1114 = vadd.f32 %v1082, %v1098
        %v1115 = vadd.f32 %v1083, %v1099
        %v1116 = vadd.f32 %v1084, %v1100
        %v1117 = vadd.f32 %v1085, %v1101
        %v1118 = vadd.f32 %v1086, %v1102
        %v1119 = vadd.f32 %v1087, %v1103
        %v1120 = vadd.f32 %v1088, %v1104
        %v1121 = vadd.f32 %v1089, %v1105
        %v1122 = vadd.f32 %v1090, %v1106
        %v1123 = vadd.f32 %v1091, %v1107
        %v1124 = vadd.f32 %v1092, %v1108
        %vm1125 = vcmask 261120
        %v1126 = vsel %vm1125, %v1109, 0.0
        %v1127 = vsel %vm1125, %v1110, 0.0
        %v1128 = vadd.f32 %v1126, %v1127
        %v1129 = vsel %vm1125, %v1111, 0.0
        %v1130 = vadd.f32 %v1128, %v1129
        %v1131 = vsel %vm1125, %v1112, 0.0
        %v1132 = vadd.f32 %v1130, %v1131
        %v1133 = vsel %vm1125, %v1113, 0.0
        %v1134 = vadd.f32 %v1132, %v1133
        %v1135 = vsel %vm1125, %v1114, 0.0
        %v1136 = vadd.f32 %v1134, %v1135
        %v1137 = vsel %vm1125, %v1115, 0.0
        %v1138 = vadd.f32 %v1136, %v1137
        %v1139 = vsel %vm1125, %v1116, 0.0
        %v1140 = vadd.f32 %v1138, %v1139
        %v1141 = vsel %vm1125, %v1117, 0.0
        %v1142 = vadd.f32 %v1140, %v1141
        %v1143 = vsel %vm1125, %v1118, 0.0
        %v1144 = vadd.f32 %v1142, %v1143
        %v1145 = vsel %vm1125, %v1119, 0.0
        %v1146 = vadd.f32 %v1144, %v1145
        %v1147 = vsel %vm1125, %v1120, 0.0
        %v1148 = vadd.f32 %v1146, %v1147
        %v1149 = vsel %vm1125, %v1121, 0.0
        %v1150 = vadd.f32 %v1148, %v1149
        %v1151 = vsel %vm1125, %v1122, 0.0
        %v1152 = vadd.f32 %v1150, %v1151
        %v1153 = vsel %vm1125, %v1123, 0.0
        %v1154 = vadd.f32 %v1152, %v1153
        %v1155 = vsel %vm1125, %v1124, 0.0
        %v1156 = vadd.f32 %v1154, %v1155
        %1157 = vadd.xlane.f32.xlu0 %v1156
        %v1158 = vpop.xlane.xlu0 %1157
        %v1159 = vrot.slane %v1158, 4
        %v1160 = vadd.f32 %v1158, %v1159
        %v1161 = vrot.slane %v1160, 2
        %v1162 = vadd.f32 %v1160, %v1161
        %v1163 = vrot.slane %v1162, 1
        %v1164 = vadd.f32 %v1162, %v1163
        %s1165 = vtos %v1164
        %v1166 = vrcp.pop 4096.0
        %s1167 = vtos %v1166
        %s1168 = smul.f32 %s1165, %s1167
        %v1169 = vstv %s1168
        %v1170 = vsub.f32 %v1109, %v1169
        %v1171 = vsub.f32 %v1110, %v1169
        %v1172 = vsub.f32 %v1111, %v1169
        %v1173 = vsub.f32 %v1112, %v1169
        %v1174 = vsub.f32 %v1113, %v1169
        %v1175 = vsub.f32 %v1114, %v1169
        %v1176 = vsub.f32 %v1115, %v1169
        %v1177 = vsub.f32 %v1116, %v1169
        %v1178 = vsub.f32 %v1117, %v1169
        %v1179 = vsub.f32 %v1118, %v1169
        %v1180 = vsub.f32 %v1119, %v1169
        %v1181 = vsub.f32 %v1120, %v1169
        %v1182 = vsub.f32 %v1121, %v1169
        %v1183 = vsub.f32 %v1122, %v1169
        %v1184 = vsub.f32 %v1123, %v1169
        %v1185 = vsub.f32 %v1124, %v1169
        %v1186 = vmul.f32 %v1170, %v1170
        %v1187 = vmul.f32 %v1171, %v1171
        %v1188 = vmul.f32 %v1172, %v1172
        %v1189 = vmul.f32 %v1173, %v1173
        %v1190 = vmul.f32 %v1174, %v1174
        %v1191 = vmul.f32 %v1175, %v1175
        %v1192 = vmul.f32 %v1176, %v1176
        %v1193 = vmul.f32 %v1177, %v1177
        %v1194 = vmul.f32 %v1178, %v1178
        %v1195 = vmul.f32 %v1179, %v1179
        %v1196 = vmul.f32 %v1180, %v1180
        %v1197 = vmul.f32 %v1181, %v1181
        %v1198 = vmul.f32 %v1182, %v1182
        %v1199 = vmul.f32 %v1183, %v1183
        %v1200 = vmul.f32 %v1184, %v1184
        %v1201 = vmul.f32 %v1185, %v1185
        %v1202 = vsel %vm1125, %v1186, 0.0
        %v1203 = vsel %vm1125, %v1187, 0.0
        %v1204 = vadd.f32 %v1202, %v1203
        %v1205 = vsel %vm1125, %v1188, 0.0
        %v1206 = vadd.f32 %v1204, %v1205
        %v1207 = vsel %vm1125, %v1189, 0.0
        %v1208 = vadd.f32 %v1206, %v1207
        %v1209 = vsel %vm1125, %v1190, 0.0
        %v1210 = vadd.f32 %v1208, %v1209
        %v1211 = vsel %vm1125, %v1191, 0.0
        %v1212 = vadd.f32 %v1210, %v1211
        %v1213 = vsel %vm1125, %v1192, 0.0
        %v1214 = vadd.f32 %v1212, %v1213
        %v1215 = vsel %vm1125, %v1193, 0.0
        %v1216 = vadd.f32 %v1214, %v1215
        %v1217 = vsel %vm1125, %v1194, 0.0
        %v1218 = vadd.f32 %v1216, %v1217
        %v1219 = vsel %vm1125, %v1195, 0.0
        %v1220 = vadd.f32 %v1218, %v1219
        %v1221 = vsel %vm1125, %v1196, 0.0
        %v1222 = vadd.f32 %v1220, %v1221
        %v1223 = vsel %vm1125, %v1197, 0.0
        %v1224 = vadd.f32 %v1222, %v1223
        %v1225 = vsel %vm1125, %v1198, 0.0
        %v1226 = vadd.f32 %v1224, %v1225
        %v1227 = vsel %vm1125, %v1199, 0.0
        %v1228 = vadd.f32 %v1226, %v1227
        %v1229 = vsel %vm1125, %v1200, 0.0
        %v1230 = vadd.f32 %v1228, %v1229
        %v1231 = vsel %vm1125, %v1201, 0.0
        %v1232 = vadd.f32 %v1230, %v1231
        %1233 = vadd.xlane.f32.xlu0 %v1232
        %v1234 = vpop.xlane.xlu0 %1233
        %v1235 = vrot.slane %v1234, 4
        %v1236 = vadd.f32 %v1234, %v1235
        %v1237 = vrot.slane %v1236, 2
        %v1238 = vadd.f32 %v1236, %v1237
        %v1239 = vrot.slane %v1238, 1
        %v1240 = vadd.f32 %v1238, %v1239
        %s1241 = vtos %v1240
        %v1242 = vrcp.pop 4096.0
        %s1243 = vtos %v1242
        %s1244 = smul.f32 %s1241, %s1243
        %s1245 = sadd.f32 %s1244, 1e-05
        %v1246 = vstv %s1245
        %v1247 = vrsqrt.pop %v1246
        %s1248 = vtos %v1247
        %v1249 = vstv %s1248
        %v1250 = vmul.f32 %v1170, %v1249
        %v1251 = vmul.f32 %v1171, %v1249
        %v1252 = vmul.f32 %v1172, %v1249
        %v1253 = vmul.f32 %v1173, %v1249
        %v1254 = vmul.f32 %v1174, %v1249
        %v1255 = vmul.f32 %v1175, %v1249
        %v1256 = vmul.f32 %v1176, %v1249
        %v1257 = vmul.f32 %v1177, %v1249
        %v1258 = vmul.f32 %v1178, %v1249
        %v1259 = vmul.f32 %v1179, %v1249
        %v1260 = vmul.f32 %v1180, %v1249
        %v1261 = vmul.f32 %v1181, %v1249
        %v1262 = vmul.f32 %v1182, %v1249
        %v1263 = vmul.f32 %v1183, %v1249
        %v1264 = vmul.f32 %v1184, %v1249
        %v1265 = vmul.f32 %v1185, %v1249
        %v1266 = vld [vmem:[%s2] sm:$0xff]
        %v1267 = vld [vmem:[%s2 + $0x8] sm:$0xff]
        %v1268 = vld [vmem:[%s2 + $0x10] sm:$0xff]
        %v1269 = vld [vmem:[%s2 + $0x18] sm:$0xff]
        %v1270 = vld [vmem:[%s2 + $0x20] sm:$0xff]
        %v1271 = vld [vmem:[%s2 + $0x28] sm:$0xff]
        %v1272 = vld [vmem:[%s2 + $0x30] sm:$0xff]
        %v1273 = vld [vmem:[%s2 + $0x38] sm:$0xff]
        %v1274 = vld [vmem:[%s2 + $0x40] sm:$0xff]
        %v1275 = vld [vmem:[%s2 + $0x48] sm:$0xff]
        %v1276 = vld [vmem:[%s2 + $0x50] sm:$0xff]
        %v1277 = vld [vmem:[%s2 + $0x58] sm:$0xff]
        %v1278 = vld [vmem:[%s2 + $0x60] sm:$0xff]
        %v1279 = vld [vmem:[%s2 + $0x68] sm:$0xff]
        %v1280 = vld [vmem:[%s2 + $0x70] sm:$0xff]
        %v1281 = vld [vmem:[%s2 + $0x78] sm:$0xff]
        %v1282 = vmul.f32 %v1250, %v1266
        %v1283 = vmul.f32 %v1251, %v1267
        %v1284 = vmul.f32 %v1252, %v1268
        %v1285 = vmul.f32 %v1253, %v1269
        %v1286 = vmul.f32 %v1254, %v1270
        %v1287 = vmul.f32 %v1255, %v1271
        %v1288 = vmul.f32 %v1256, %v1272
        %v1289 = vmul.f32 %v1257, %v1273
        %v1290 = vmul.f32 %v1258, %v1274
        %v1291 = vmul.f32 %v1259, %v1275
        %v1292 = vmul.f32 %v1260, %v1276
        %v1293 = vmul.f32 %v1261, %v1277
        %v1294 = vmul.f32 %v1262, %v1278
        %v1295 = vmul.f32 %v1263, %v1279
        %v1296 = vmul.f32 %v1264, %v1280
        %v1297 = vmul.f32 %v1265, %v1281
        %v1298 = vld [vmem:[%s3] sm:$0xff]
        %v1299 = vld [vmem:[%s3 + $0x8] sm:$0xff]
        %v1300 = vld [vmem:[%s3 + $0x10] sm:$0xff]
        %v1301 = vld [vmem:[%s3 + $0x18] sm:$0xff]
        %v1302 = vld [vmem:[%s3 + $0x20] sm:$0xff]
        %v1303 = vld [vmem:[%s3 + $0x28] sm:$0xff]
        %v1304 = vld [vmem:[%s3 + $0x30] sm:$0xff]
        %v1305 = vld [vmem:[%s3 + $0x38] sm:$0xff]
        %v1306 = vld [vmem:[%s3 + $0x40] sm:$0xff]
        %v1307 = vld [vmem:[%s3 + $0x48] sm:$0xff]
        %v1308 = vld [vmem:[%s3 + $0x50] sm:$0xff]
        %v1309 = vld [vmem:[%s3 + $0x58] sm:$0xff]
        %v1310 = vld [vmem:[%s3 + $0x60] sm:$0xff]
        %v1311 = vld [vmem:[%s3 + $0x68] sm:$0xff]
        %v1312 = vld [vmem:[%s3 + $0x70] sm:$0xff]
        %v1313 = vld [vmem:[%s3 + $0x78] sm:$0xff]
        %v1314 = vadd.f32 %v1282, %v1298
        %v1315 = vadd.f32 %v1283, %v1299
        %v1316 = vadd.f32 %v1284, %v1300
        %v1317 = vadd.f32 %v1285, %v1301
        %v1318 = vadd.f32 %v1286, %v1302
        %v1319 = vadd.f32 %v1287, %v1303
        %v1320 = vadd.f32 %v1288, %v1304
        %v1321 = vadd.f32 %v1289, %v1305
        %v1322 = vadd.f32 %v1290, %v1306
        %v1323 = vadd.f32 %v1291, %v1307
        %v1324 = vadd.f32 %v1292, %v1308
        %v1325 = vadd.f32 %v1293, %v1309
        %v1326 = vadd.f32 %v1294, %v1310
        %v1327 = vadd.f32 %v1295, %v1311
        %v1328 = vadd.f32 %v1296, %v1312
        %v1329 = vadd.f32 %v1297, %v1313
        %v1330 = vld [vmem:[#allocation3] sm:$0xff]
        %v1331 = vld [vmem:[#allocation3 + $0x8] sm:$0xff]
        %v1332 = vld [vmem:[#allocation3 + $0x10] sm:$0xff]
        %v1333 = vld [vmem:[#allocation3 + $0x18] sm:$0xff]
        %v1334 = vld [vmem:[#allocation6] sm:$0x1]
        %v1336 = vlaneseq
        %v1337 = vshrl.u32 %v1336, 7
        %v1338 = vsub.s32 0, %v1337
        %v1339 = vrot.slane %v1334, %v1338
        %v1342 = vsel %vm1125, %v1314, 0
        %v1345 = vsel %vm1125, %v1315, 0
        %v1348 = vsel %vm1125, %v1316, 0
        %v1351 = vsel %vm1125, %v1317, 0
        %v1354 = vsel %vm1125, %v1318, 0
        %v1357 = vsel %vm1125, %v1319, 0
        %v1360 = vsel %vm1125, %v1320, 0
        %v1363 = vsel %vm1125, %v1321, 0
        %v1366 = vsel %vm1125, %v1322, 0
        %v1369 = vsel %vm1125, %v1323, 0
        %v1372 = vsel %vm1125, %v1324, 0
        %v1375 = vsel %vm1125, %v1325, 0
        %v1378 = vsel %vm1125, %v1326, 0
        %v1381 = vsel %vm1125, %v1327, 0
        %v1384 = vsel %vm1125, %v1328, 0
        %v1387 = vsel %vm1125, %v1329, 0
        %1389 = vmatprep.subr.mxu0 0.0
        %1390 = vmatpush1.msra.mxu0 %v1330
        %1391 = vmatprep.subr.mxu0 0.0
        %1392 = vmatpush1.msra.mxu0 %v1331
        %1393 = vmatprep.subr.mxu0 0.0
        %1394 = vmatpush1.msra.mxu0 %v1332
        %1395 = vmatprep.subr.mxu0 0.0
        %1396 = vmatpush1.msra.mxu0 %v1333
        %1397 = vmatprep.subr.mxu0 0.0
        %1398 = vmatpush1.msra.mxu0 0.0
        %1399 = vmatprep.subr.mxu0 0.0
        %1400 = vmatpush1.msra.mxu0 0.0
        %1401 = vmatprep.subr.mxu0 0.0
        %1402 = vmatpush1.msra.mxu0 0.0
        %1403 = vmatprep.subr.mxu0 0.0
        %1404 = vmatpush1.msra.mxu0 0.0
        %1405 = vmatprep.subr.mxu0 0.0
        %1406 = vmatpush1.msra.mxu0 0.0
        %1407 = vmatprep.subr.mxu0 0.0
        %1408 = vmatpush1.msra.mxu0 0.0
        %1409 = vmatprep.subr.mxu0 0.0
        %1410 = vmatpush1.msra.mxu0 0.0
        %1411 = vmatprep.subr.mxu0 0.0
        %1412 = vmatpush1.msra.mxu0 0.0
        %1413 = vmatprep.subr.mxu0 0.0
        %1414 = vmatpush1.msra.mxu0 0.0
        %1415 = vmatprep.subr.mxu0 0.0
        %1416 = vmatpush1.msra.mxu0 0.0
        %1417 = vmatprep.subr.mxu0 0.0
        %1418 = vmatpush1.msra.mxu0 0.0
        %1419 = vmatprep.subr.mxu0 0.0
        %1420 = vmatpush1.msra.mxu0 0.0
        %1421 = vmatprep.subr.mxu0 0.0
        %1422 = vmatpush1.msra.mxu0 0.0
        %1423 = vmatprep.subr.mxu0 0.0
        %1424 = vmatpush1.msra.mxu0 0.0
        %1425 = vmatprep.subr.mxu0 0.0
        %1426 = vmatpush1.msra.mxu0 0.0
        %1427 = vmatprep.subr.mxu0 0.0
        %1428 = vmatpush1.msra.mxu0 0.0
        %1429 = vmatprep.subr.mxu0 0.0
        %1430 = vmatpush1.msra.mxu0 0.0
        %1431 = vmatprep.subr.mxu0 0.0
        %1432 = vmatpush1.msra.mxu0 0.0
        %1433 = vmatprep.subr.mxu0 0.0
        %1434 = vmatpush1.msra.mxu0 0.0
        %1435 = vmatprep.subr.mxu0 0.0
        %1436 = vmatpush1.msra.mxu0 0.0
        %1437 = vmatprep.subr.mxu0 0.0
        %1438 = vmatpush1.msra.mxu0 0.0
        %1439 = vmatprep.subr.mxu0 0.0
        %1440 = vmatpush1.msra.mxu0 0.0
        %1441 = vmatprep.subr.mxu0 0.0
        %1442 = vmatpush1.msra.mxu0 0.0
        %1443 = vmatprep.subr.mxu0 0.0
        %1444 = vmatpush1.msra.mxu0 0.0
        %1445 = vmatprep.subr.mxu0 0.0
        %1446 = vmatpush1.msra.mxu0 0.0
        %1447 = vmatprep.subr.mxu0 0.0
        %1448 = vmatpush1.msra.mxu0 0.0
        %1449 = vmatprep.subr.mxu0 0.0
        %1450 = vmatpush1.msra.mxu0 0.0
        %1451 = vmatprep.subr.mxu0 0.0
        %1452 = vmatpush1.msra.mxu0 0.0
        %1453 = vmatprep.mubr.f32.mxu0 0.0
        %1454 = vmatmul.mubr.f32.gmra.mrb[0].mxu0 %v1342
        %v1455 = vpop.f32.mrb[0].mxu0
        %v1456 = vadd.f32 %v1339, %v1455
        %v1457 = vpop.f32.mrb[0].mxu0
        %1458 = vmatprep.mubr.f32.mxu0 0.0
        %1459 = vmatmul.mubr.f32.gmra.mrb[0].mxu0 %v1345
        %v1460 = vpop.f32.mrb[0].mxu0
        %v1461 = vadd.f32 %v1339, %v1460
        %v1462 = vpop.f32.mrb[0].mxu0
        %1463 = vmatprep.mubr.f32.mxu0 0.0
        %1464 = vmatmul.mubr.f32.gmra.mrb[0].mxu0 %v1348
        %v1465 = vpop.f32.mrb[0].mxu0
        %v1466 = vadd.f32 %v1339, %v1465
        %v1467 = vpop.f32.mrb[0].mxu0
        %1468 = vmatprep.mubr.f32.mxu0 0.0
        %1469 = vmatmul.mubr.f32.gmra.mrb[0].mxu0 %v1351
        %v1470 = vpop.f32.mrb[0].mxu0
        %v1471 = vadd.f32 %v1339, %v1470
        %v1472 = vpop.f32.mrb[0].mxu0
        %1473 = vmatprep.mubr.f32.mxu0 0.0
        %1474 = vmatmul.mubr.f32.gmra.mrb[0].mxu0 %v1354
        %v1475 = vpop.f32.mrb[0].mxu0
        %v1476 = vadd.f32 %v1339, %v1475
        %v1477 = vpop.f32.mrb[0].mxu0
        %1478 = vmatprep.mubr.f32.mxu0 0.0
        %1479 = vmatmul.mubr.f32.gmra.mrb[0].mxu0 %v1357
        %v1480 = vpop.f32.mrb[0].mxu0
        %v1481 = vadd.f32 %v1339, %v1480
        %v1482 = vpop.f32.mrb[0].mxu0
        %1483 = vmatprep.mubr.f32.mxu0 0.0
        %1484 = vmatmul.mubr.f32.gmra.mrb[0].mxu0 %v1360
        %v1485 = vpop.f32.mrb[0].mxu0
        %v1486 = vadd.f32 %v1339, %v1485
        %v1487 = vpop.f32.mrb[0].mxu0
        %1488 = vmatprep.mubr.f32.mxu0 0.0
        %1489 = vmatmul.mubr.f32.gmra.mrb[0].mxu0 %v1363
        %v1490 = vpop.f32.mrb[0].mxu0
        %v1491 = vadd.f32 %v1339, %v1490
        %v1492 = vpop.f32.mrb[0].mxu0
        %1493 = vmatprep.mubr.f32.mxu0 0.0
        %1494 = vmatmul.mubr.f32.gmra.mrb[0].mxu0 %v1366
        %v1495 = vpop.f32.mrb[0].mxu0
        %v1496 = vadd.f32 %v1339, %v1495
        %v1497 = vpop.f32.mrb[0].mxu0
        %1498 = vmatprep.mubr.f32.mxu0 0.0
        %1499 = vmatmul.mubr.f32.gmra.mrb[0].mxu0 %v1369
        %v1500 = vpop.f32.mrb[0].mxu0
        %v1501 = vadd.f32 %v1339, %v1500
        %v1502 = vpop.f32.mrb[0].mxu0
        %1503 = vmatprep.mubr.f32.mxu0 0.0
        %1504 = vmatmul.mubr.f32.gmra.mrb[0].mxu0 %v1372
        %v1505 = vpop.f32.mrb[0].mxu0
        %v1506 = vadd.f32 %v1339, %v1505
        %v1507 = vpop.f32.mrb[0].mxu0
        %1508 = vmatprep.mubr.f32.mxu0 0.0
        %1509 = vmatmul.mubr.f32.gmra.mrb[0].mxu0 %v1375
        %v1510 = vpop.f32.mrb[0].mxu0
        %v1511 = vadd.f32 %v1339, %v1510
        %v1512 = vpop.f32.mrb[0].mxu0
        %1513 = vmatprep.mubr.f32.mxu0 0.0
        %1514 = vmatmul.mubr.f32.gmra.mrb[0].mxu0 %v1378
        %v1515 = vpop.f32.mrb[0].mxu0
        %v1516 = vadd.f32 %v1339, %v1515
        %v1517 = vpop.f32.mrb[0].mxu0
        %1518 = vmatprep.mubr.f32.mxu0 0.0
        %1519 = vmatmul.mubr.f32.gmra.mrb[0].mxu0 %v1381
        %v1520 = vpop.f32.mrb[0].mxu0
        %v1521 = vadd.f32 %v1339, %v1520
        %v1522 = vpop.f32.mrb[0].mxu0
        %1523 = vmatprep.mubr.f32.mxu0 0.0
        %1524 = vmatmul.mubr.f32.gmra.mrb[0].mxu0 %v1384
        %v1525 = vpop.f32.mrb[0].mxu0
        %v1526 = vadd.f32 %v1339, %v1525
        %v1527 = vpop.f32.mrb[0].mxu0
        %1528 = vmatprep.mubr.f32.mxu0 0.0
        %1529 = vmatmul.mubr.f32.gmra.mrb[0].mxu0 %v1387
        %v1530 = vpop.f32.mrb[0].mxu0
        %v1531 = vadd.f32 %v1339, %v1530
        %v1532 = vpop.f32.mrb[0].mxu0
        %1533 = vdwg.mxu0
        %v1534 = vmax.f32 %v1456, 0.0
        %v1535 = vmax.f32 %v1461, 0.0
        %v1536 = vmax.f32 %v1466, 0.0
        %v1537 = vmax.f32 %v1471, 0.0
        %v1538 = vmax.f32 %v1476, 0.0
        %v1539 = vmax.f32 %v1481, 0.0
        %v1540 = vmax.f32 %v1486, 0.0
        %v1541 = vmax.f32 %v1491, 0.0
        %v1542 = vmax.f32 %v1496, 0.0
        %v1543 = vmax.f32 %v1501, 0.0
        %v1544 = vmax.f32 %v1506, 0.0
        %v1545 = vmax.f32 %v1511, 0.0
        %v1546 = vmax.f32 %v1516, 0.0
        %v1547 = vmax.f32 %v1521, 0.0
        %v1548 = vmax.f32 %v1526, 0.0
        %v1549 = vmax.f32 %v1531, 0.0
        %v1550 = vld [vmem:[%s6] sm:$0xff]
        %v1551 = vld [vmem:[%s6 + $0x8] sm:$0xff]
        %v1552 = vld [vmem:[%s6 + $0x10] sm:$0xff]
        %v1553 = vld [vmem:[%s6 + $0x18] sm:$0xff]
        %v1554 = vld [vmem:[%s6 + $0x20] sm:$0xff]
        %v1555 = vld [vmem:[%s6 + $0x28] sm:$0xff]
        %v1556 = vld [vmem:[%s6 + $0x30] sm:$0xff]
        %v1557 = vld [vmem:[%s6 + $0x38] sm:$0xff]
        %v1558 = vld [vmem:[#allocation8] sm:$0x1]
        %v1560 = vlaneseq
        %v1561 = vshrl.u32 %v1560, 7
        %v1562 = vsub.s32 0, %v1561
        %v1563 = vrot.slane %v1558, %v1562
        %vm1565 = vcmask 523264
        %v1567 = vsel %vm1565, %v1534, 0
        %v1570 = vsel %vm1565, %v1535, 0
        %v1573 = vsel %vm1565, %v1536, 0
        %v1576 = vsel %vm1565, %v1537, 0
        %v1579 = vsel %vm1565, %v1538, 0
        %v1582 = vsel %vm1565, %v1539, 0
        %v1585 = vsel %vm1565, %v1540, 0
        %v1588 = vsel %vm1565, %v1541, 0
        %v1591 = vsel %vm1565, %v1542, 0
        %v1594 = vsel %vm1565, %v1543, 0
        %v1597 = vsel %vm1565, %v1544, 0
        %v1600 = vsel %vm1565, %v1545, 0
        %v1603 = vsel %vm1565, %v1546, 0
        %v1606 = vsel %vm1565, %v1547, 0
        %v1609 = vsel %vm1565, %v1548, 0
        %v1612 = vsel %vm1565, %v1549, 0
        %1614 = vmatprep.subr.mxu0 0.0
        %1615 = vmatpush1.msra.mxu0 %v1550
        %1616 = vmatprep.subr.mxu0 0.0
        %1617 = vmatpush1.msra.mxu0 %v1551
        %1618 = vmatprep.subr.mxu0 0.0
        %1619 = vmatpush1.msra.mxu0 %v1552
        %1620 = vmatprep.subr.mxu0 0.0
        %1621 = vmatpush1.msra.mxu0 %v1553
        %1622 = vmatprep.subr.mxu0 0.0
        %1623 = vmatpush1.msra.mxu0 %v1554
        %1624 = vmatprep.subr.mxu0 0.0
        %1625 = vmatpush1.msra.mxu0 %v1555
        %1626 = vmatprep.subr.mxu0 0.0
        %1627 = vmatpush1.msra.mxu0 %v1556
        %1628 = vmatprep.subr.mxu0 0.0
        %1629 = vmatpush1.msra.mxu0 %v1557
        %1630 = vmatprep.subr.mxu0 0.0
        %1631 = vmatpush1.msra.mxu0 0.0
        %1632 = vmatprep.subr.mxu0 0.0
        %1633 = vmatpush1.msra.mxu0 0.0
        %1634 = vmatprep.subr.mxu0 0.0
        %1635 = vmatpush1.msra.mxu0 0.0
        %1636 = vmatprep.subr.mxu0 0.0
        %1637 = vmatpush1.msra.mxu0 0.0
        %1638 = vmatprep.subr.mxu0 0.0
        %1639 = vmatpush1.msra.mxu0 0.0
        %1640 = vmatprep.subr.mxu0 0.0
        %1641 = vmatpush1.msra.mxu0 0.0
        %1642 = vmatprep.subr.mxu0 0.0
        %1643 = vmatpush1.msra.mxu0 0.0
        %1644 = vmatprep.subr.mxu0 0.0
        %1645 = vmatpush1.msra.mxu0 0.0
        %1646 = vmatprep.subr.mxu0 0.0
        %1647 = vmatpush1.msra.mxu0 0.0
        %1648 = vmatprep.subr.mxu0 0.0
        %1649 = vmatpush1.msra.mxu0 0.0
        %1650 = vmatprep.subr.mxu0 0.0
        %1651 = vmatpush1.msra.mxu0 0.0
        %1652 = vmatprep.subr.mxu0 0.0
        %1653 = vmatpush1.msra.mxu0 0.0
        %1654 = vmatprep.subr.mxu0 0.0
        %1655 = vmatpush1.msra.mxu0 0.0
        %1656 = vmatprep.subr.mxu0 0.0
        %1657 = vmatpush1.msra.mxu0 0.0
        %1658 = vmatprep.subr.mxu0 0.0
        %1659 = vmatpush1.msra.mxu0 0.0
        %1660 = vmatprep.subr.mxu0 0.0
        %1661 = vmatpush1.msra.mxu0 0.0
        %1662 = vmatprep.subr.mxu0 0.0
        %1663 = vmatpush1.msra.mxu0 0.0
        %1664 = vmatprep.subr.mxu0 0.0
        %1665 = vmatpush1.msra.mxu0 0.0
        %1666 = vmatprep.subr.mxu0 0.0
        %1667 = vmatpush1.msra.mxu0 0.0
        %1668 = vmatprep.subr.mxu0 0.0
        %1669 = vmatpush1.msra.mxu0 0.0
        %1670 = vmatprep.subr.mxu0 0.0
        %1671 = vmatpush1.msra.mxu0 0.0
        %1672 = vmatprep.subr.mxu0 0.0
        %1673 = vmatpush1.msra.mxu0 0.0
        %1674 = vmatprep.subr.mxu0 0.0
        %1675 = vmatpush1.msra.mxu0 0.0
        %1676 = vmatprep.subr.mxu0 0.0
        %1677 = vmatpush1.msra.mxu0 0.0
        %1678 = vmatprep.mubr.f32.mxu0 0.0
        %1679 = vmatmul.mubr.f32.gmra.mrb[0].mxu0 %v1567
        %v1680 = vpop.f32.mrb[0].mxu0
        %v1681 = vadd.f32 %v1563, %v1680
        %v1682 = vpop.f32.mrb[0].mxu0
        %1683 = vmatprep.mubr.f32.mxu0 0.0
        %1684 = vmatmul.mubr.f32.gmra.mrb[0].mxu0 %v1570
        %v1685 = vpop.f32.mrb[0].mxu0
        %v1686 = vadd.f32 %v1563, %v1685
        %v1687 = vpop.f32.mrb[0].mxu0
        %1688 = vmatprep.mubr.f32.mxu0 0.0
        %1689 = vmatmul.mubr.f32.gmra.mrb[0].mxu0 %v1573
        %v1690 = vpop.f32.mrb[0].mxu0
        %v1691 = vadd.f32 %v1563, %v1690
        %v1692 = vpop.f32.mrb[0].mxu0
        %1693 = vmatprep.mubr.f32.mxu0 0.0
        %1694 = vmatmul.mubr.f32.gmra.mrb[0].mxu0 %v1576
        %v1695 = vpop.f32.mrb[0].mxu0
        %v1696 = vadd.f32 %v1563, %v1695
        %v1697 = vpop.f32.mrb[0].mxu0
        %1698 = vmatprep.mubr.f32.mxu0 0.0
        %1699 = vmatmul.mubr.f32.gmra.mrb[0].mxu0 %v1579
        %v1700 = vpop.f32.mrb[0].mxu0
        %v1701 = vadd.f32 %v1563, %v1700
        %v1702 = vpop.f32.mrb[0].mxu0
        %1703 = vmatprep.mubr.f32.mxu0 0.0
        %1704 = vmatmul.mubr.f32.gmra.mrb[0].mxu0 %v1582
        %v1705 = vpop.f32.mrb[0].mxu0
        %v1706 = vadd.f32 %v1563, %v1705
        %v1707 = vpop.f32.mrb[0].mxu0
        %1708 = vmatprep.mubr.f32.mxu0 0.0
        %1709 = vmatmul.mubr.f32.gmra.mrb[0].mxu0 %v1585
        %v1710 = vpop.f32.mrb[0].mxu0
        %v1711 = vadd.f32 %v1563, %v1710
        %v1712 = vpop.f32.mrb[0].mxu0
        %1713 = vmatprep.mubr.f32.mxu0 0.0
        %1714 = vmatmul.mubr.f32.gmra.mrb[0].mxu0 %v1588
        %v1715 = vpop.f32.mrb[0].mxu0
        %v1716 = vadd.f32 %v1563, %v1715
        %v1717 = vpop.f32.mrb[0].mxu0
        %1718 = vmatprep.mubr.f32.mxu0 0.0
        %1719 = vmatmul.mubr.f32.gmra.mrb[0].mxu0 %v1591
        %v1720 = vpop.f32.mrb[0].mxu0
        %v1721 = vadd.f32 %v1563, %v1720
        %v1722 = vpop.f32.mrb[0].mxu0
        %1723 = vmatprep.mubr.f32.mxu0 0.0
        %1724 = vmatmul.mubr.f32.gmra.mrb[0].mxu0 %v1594
        %v1725 = vpop.f32.mrb[0].mxu0
        %v1726 = vadd.f32 %v1563, %v1725
        %v1727 = vpop.f32.mrb[0].mxu0
        %1728 = vmatprep.mubr.f32.mxu0 0.0
        %1729 = vmatmul.mubr.f32.gmra.mrb[0].mxu0 %v1597
        %v1730 = vpop.f32.mrb[0].mxu0
        %v1731 = vadd.f32 %v1563, %v1730
        %v1732 = vpop.f32.mrb[0].mxu0
        %1733 = vmatprep.mubr.f32.mxu0 0.0
        %1734 = vmatmul.mubr.f32.gmra.mrb[0].mxu0 %v1600
        %v1735 = vpop.f32.mrb[0].mxu0
        %v1736 = vadd.f32 %v1563, %v1735
        %v1737 = vpop.f32.mrb[0].mxu0
        %1738 = vmatprep.mubr.f32.mxu0 0.0
        %1739 = vmatmul.mubr.f32.gmra.mrb[0].mxu0 %v1603
        %v1740 = vpop.f32.mrb[0].mxu0
        %v1741 = vadd.f32 %v1563, %v1740
        %v1742 = vpop.f32.mrb[0].mxu0
        %1743 = vmatprep.mubr.f32.mxu0 0.0
        %1744 = vmatmul.mubr.f32.gmra.mrb[0].mxu0 %v1606
        %v1745 = vpop.f32.mrb[0].mxu0
        %v1746 = vadd.f32 %v1563, %v1745
        %v1747 = vpop.f32.mrb[0].mxu0
        %1748 = vmatprep.mubr.f32.mxu0 0.0
        %1749 = vmatmul.mubr.f32.gmra.mrb[0].mxu0 %v1609
        %v1750 = vpop.f32.mrb[0].mxu0
        %v1751 = vadd.f32 %v1563, %v1750
        %v1752 = vpop.f32.mrb[0].mxu0
        %1753 = vmatprep.mubr.f32.mxu0 0.0
        %1754 = vmatmul.mubr.f32.gmra.mrb[0].mxu0 %v1612
        %v1755 = vpop.f32.mrb[0].mxu0
        %v1756 = vadd.f32 %v1563, %v1755
        %v1757 = vpop.f32.mrb[0].mxu0
        %1758 = vdwg.mxu0
        %v1759 = vld [vmem:[#allocation11] sm:$0x1]
        %v1760 = vld [vmem:[#allocation12] sm:$0x1]
        %v1761 = vsel %vm1125, %v1681, 0.0
        %1762 = vadd.xlane.f32.xlu0 %v1761
        %v1763 = vpop.xlane.xlu0 %1762
        %v1764 = vsel %vm1125, %v1686, 0.0
        %1765 = vadd.xlane.f32.xlu0 %v1764
        %v1766 = vpop.xlane.xlu0 %1765
        %v1767 = vsel %vm1125, %v1691, 0.0
        %1768 = vadd.xlane.f32.xlu0 %v1767
        %v1769 = vpop.xlane.xlu0 %1768
        %v1770 = vsel %vm1125, %v1696, 0.0
        %1771 = vadd.xlane.f32.xlu0 %v1770
        %v1772 = vpop.xlane.xlu0 %1771
        %v1773 = vsel %vm1125, %v1701, 0.0
        %1774 = vadd.xlane.f32.xlu0 %v1773
        %v1775 = vpop.xlane.xlu0 %1774
        %v1776 = vsel %vm1125, %v1706, 0.0
        %1777 = vadd.xlane.f32.xlu0 %v1776
        %v1778 = vpop.xlane.xlu0 %1777
        %v1779 = vsel %vm1125, %v1711, 0.0
        %1780 = vadd.xlane.f32.xlu0 %v1779
        %v1781 = vpop.xlane.xlu0 %1780
        %v1782 = vsel %vm1125, %v1716, 0.0
        %1783 = vadd.xlane.f32.xlu0 %v1782
        %v1784 = vpop.xlane.xlu0 %1783
        %v1785 = vsel %vm1125, %v1721, 0.0
        %1786 = vadd.xlane.f32.xlu0 %v1785
        %v1787 = vpop.xlane.xlu0 %1786
        %v1788 = vsel %vm1125, %v1726, 0.0
        %1789 = vadd.xlane.f32.xlu0 %v1788
        %v1790 = vpop.xlane.xlu0 %1789
        %v1791 = vsel %vm1125, %v1731, 0.0
        %1792 = vadd.xlane.f32.xlu0 %v1791
        %v1793 = vpop.xlane.xlu0 %1792
        %v1794 = vsel %vm1125, %v1736, 0.0
        %1795 = vadd.xlane.f32.xlu0 %v1794
        %v1796 = vpop.xlane.xlu0 %1795
        %v1797 = vsel %vm1125, %v1741, 0.0
        %1798 = vadd.xlane.f32.xlu0 %v1797
        %v1799 = vpop.xlane.xlu0 %1798
        %v1800 = vsel %vm1125, %v1746, 0.0
        %1801 = vadd.xlane.f32.xlu0 %v1800
        %v1802 = vpop.xlane.xlu0 %1801
        %v1803 = vsel %vm1125, %v1751, 0.0
        %1804 = vadd.xlane.f32.xlu0 %v1803
        %v1805 = vpop.xlane.xlu0 %1804
        %v1806 = vsel %vm1125, %v1756, 0.0
        %1807 = vadd.xlane.f32.xlu0 %v1806
        %v1808 = vpop.xlane.xlu0 %1807
        %v1809 = vrcp.pop 32.0
        %v1810 = vmul.f32 %v1763, %v1809
        %v1811 = vmul.f32 %v1766, %v1809
        %v1812 = vmul.f32 %v1769, %v1809
        %v1813 = vmul.f32 %v1772, %v1809
        %v1814 = vmul.f32 %v1775, %v1809
        %v1815 = vmul.f32 %v1778, %v1809
        %v1816 = vmul.f32 %v1781, %v1809
        %v1817 = vmul.f32 %v1784, %v1809
        %v1818 = vmul.f32 %v1787, %v1809
        %v1819 = vmul.f32 %v1790, %v1809
        %v1820 = vmul.f32 %v1793, %v1809
        %v1821 = vmul.f32 %v1796, %v1809
        %v1822 = vmul.f32 %v1799, %v1809
        %v1823 = vmul.f32 %v1802, %v1809
        %v1824 = vmul.f32 %v1805, %v1809
        %v1825 = vmul.f32 %v1808, %v1809
        %v1826 = vsub.f32 %v1681, %v1810
        %v1827 = vsub.f32 %v1686, %v1811
        %v1828 = vsub.f32 %v1691, %v1812
        %v1829 = vsub.f32 %v1696, %v1813
        %v1830 = vsub.f32 %v1701, %v1814
        %v1831 = vsub.f32 %v1706, %v1815
        %v1832 = vsub.f32 %v1711, %v1816
        %v1833 = vsub.f32 %v1716, %v1817
        %v1834 = vsub.f32 %v1721, %v1818
        %v1835 = vsub.f32 %v1726, %v1819
        %v1836 = vsub.f32 %v1731, %v1820
        %v1837 = vsub.f32 %v1736, %v1821
        %v1838 = vsub.f32 %v1741, %v1822
        %v1839 = vsub.f32 %v1746, %v1823
        %v1840 = vsub.f32 %v1751, %v1824
        %v1841 = vsub.f32 %v1756, %v1825
        %v1842 = vmul.f32 %v1826, %v1826
        %v1843 = vmul.f32 %v1827, %v1827
        %v1844 = vmul.f32 %v1828, %v1828
        %v1845 = vmul.f32 %v1829, %v1829
        %v1846 = vmul.f32 %v1830, %v1830
        %v1847 = vmul.f32 %v1831, %v1831
        %v1848 = vmul.f32 %v1832, %v1832
        %v1849 = vmul.f32 %v1833, %v1833
        %v1850 = vmul.f32 %v1834, %v1834
        %v1851 = vmul.f32 %v1835, %v1835
        %v1852 = vmul.f32 %v1836, %v1836
        %v1853 = vmul.f32 %v1837, %v1837
        %v1854 = vmul.f32 %v1838, %v1838
        %v1855 = vmul.f32 %v1839, %v1839
        %v1856 = vmul.f32 %v1840, %v1840
        %v1857 = vmul.f32 %v1841, %v1841
        %v1858 = vsel %vm1125, %v1842, 0.0
        %1859 = vadd.xlane.f32.xlu0 %v1858
        %v1860 = vpop.xlane.xlu0 %1859
        %v1861 = vsel %vm1125, %v1843, 0.0
        %1862 = vadd.xlane.f32.xlu0 %v1861
        %v1863 = vpop.xlane.xlu0 %1862
        %v1864 = vsel %vm1125, %v1844, 0.0
        %1865 = vadd.xlane.f32.xlu0 %v1864
        %v1866 = vpop.xlane.xlu0 %1865
        %v1867 = vsel %vm1125, %v1845, 0.0
        %1868 = vadd.xlane.f32.xlu0 %v1867
        %v1869 = vpop.xlane.xlu0 %1868
        %v1870 = vsel %vm1125, %v1846, 0.0
        %1871 = vadd.xlane.f32.xlu0 %v1870
        %v1872 = vpop.xlane.xlu0 %1871
        %v1873 = vsel %vm1125, %v1847, 0.0
        %1874 = vadd.xlane.f32.xlu0 %v1873
        %v1875 = vpop.xlane.xlu0 %1874
        %v1876 = vsel %vm1125, %v1848, 0.0
        %1877 = vadd.xlane.f32.xlu0 %v1876
        %v1878 = vpop.xlane.xlu0 %1877
        %v1879 = vsel %vm1125, %v1849, 0.0
        %1880 = vadd.xlane.f32.xlu0 %v1879
        %v1881 = vpop.xlane.xlu0 %1880
        %v1882 = vsel %vm1125, %v1850, 0.0
        %1883 = vadd.xlane.f32.xlu0 %v1882
        %v1884 = vpop.xlane.xlu0 %1883
        %v1885 = vsel %vm1125, %v1851, 0.0
        %1886 = vadd.xlane.f32.xlu0 %v1885
        %v1887 = vpop.xlane.xlu0 %1886
        %v1888 = vsel %vm1125, %v1852, 0.0
        %1889 = vadd.xlane.f32.xlu0 %v1888
        %v1890 = vpop.xlane.xlu0 %1889
        %v1891 = vsel %vm1125, %v1853, 0.0
        %1892 = vadd.xlane.f32.xlu0 %v1891
        %v1893 = vpop.xlane.xlu0 %1892
        %v1894 = vsel %vm1125, %v1854, 0.0
        %1895 = vadd.xlane.f32.xlu0 %v1894
        %v1896 = vpop.xlane.xlu0 %1895
        %v1897 = vsel %vm1125, %v1855, 0.0
        %1898 = vadd.xlane.f32.xlu0 %v1897
        %v1899 = vpop.xlane.xlu0 %1898
        %v1900 = vsel %vm1125, %v1856, 0.0
        %1901 = vadd.xlane.f32.xlu0 %v1900
        %v1902 = vpop.xlane.xlu0 %1901
        %v1903 = vsel %vm1125, %v1857, 0.0
        %1904 = vadd.xlane.f32.xlu0 %v1903
        %v1905 = vpop.xlane.xlu0 %1904
        %v1906 = vmul.f32 %v1860, %v1809
        %v1907 = vmul.f32 %v1863, %v1809
        %v1908 = vmul.f32 %v1866, %v1809
        %v1909 = vmul.f32 %v1869, %v1809
        %v1910 = vmul.f32 %v1872, %v1809
        %v1911 = vmul.f32 %v1875, %v1809
        %v1912 = vmul.f32 %v1878, %v1809
        %v1913 = vmul.f32 %v1881, %v1809
        %v1914 = vmul.f32 %v1884, %v1809
        %v1915 = vmul.f32 %v1887, %v1809
        %v1916 = vmul.f32 %v1890, %v1809
        %v1917 = vmul.f32 %v1893, %v1809
        %v1918 = vmul.f32 %v1896, %v1809
        %v1919 = vmul.f32 %v1899, %v1809
        %v1920 = vmul.f32 %v1902, %v1809
        %v1921 = vmul.f32 %v1905, %v1809
        %v1922 = vadd.f32 %v1906, 1e-05
        %v1923 = vadd.f32 %v1907, 1e-05
        %v1924 = vadd.f32 %v1908, 1e-05
        %v1925 = vadd.f32 %v1909, 1e-05
        %v1926 = vadd.f32 %v1910, 1e-05
        %v1927 = vadd.f32 %v1911, 1e-05
        %v1928 = vadd.f32 %v1912, 1e-05
        %v1929 = vadd.f32 %v1913, 1e-05
        %v1930 = vadd.f32 %v1914, 1e-05
        %v1931 = vadd.f32 %v1915, 1e-05
        %v1932 = vadd.f32 %v1916, 1e-05
        %v1933 = vadd.f32 %v1917, 1e-05
        %v1934 = vadd.f32 %v1918, 1e-05
        %v1935 = vadd.f32 %v1919, 1e-05
        %v1936 = vadd.f32 %v1920, 1e-05
        %v1937 = vadd.f32 %v1921, 1e-05
        %v1938 = vrsqrt.pop %v1922
        %v1939 = vrsqrt.pop %v1923
        %v1940 = vrsqrt.pop %v1924
        %v1941 = vrsqrt.pop %v1925
        %v1942 = vrsqrt.pop %v1926
        %v1943 = vrsqrt.pop %v1927
        %v1944 = vrsqrt.pop %v1928
        %v1945 = vrsqrt.pop %v1929
        %v1946 = vrsqrt.pop %v1930
        %v1947 = vrsqrt.pop %v1931
        %v1948 = vrsqrt.pop %v1932
        %v1949 = vrsqrt.pop %v1933
        %v1950 = vrsqrt.pop %v1934
        %v1951 = vrsqrt.pop %v1935
        %v1952 = vrsqrt.pop %v1936
        %v1953 = vrsqrt.pop %v1937
        %v1954 = vmul.f32 %v1826, %v1938
        %v1955 = vmul.f32 %v1827, %v1939
        %v1956 = vmul.f32 %v1828, %v1940
        %v1957 = vmul.f32 %v1829, %v1941
        %v1958 = vmul.f32 %v1830, %v1942
        %v1959 = vmul.f32 %v1831, %v1943
        %v1960 = vmul.f32 %v1832, %v1944
        %v1961 = vmul.f32 %v1833, %v1945
        %v1962 = vmul.f32 %v1834, %v1946
        %v1963 = vmul.f32 %v1835, %v1947
        %v1964 = vmul.f32 %v1836, %v1948
        %v1965 = vmul.f32 %v1837, %v1949
        %v1966 = vmul.f32 %v1838, %v1950
        %v1967 = vmul.f32 %v1839, %v1951
        %v1968 = vmul.f32 %v1840, %v1952
        %v1969 = vmul.f32 %v1841, %v1953
        %v1971 = vlaneseq
        %v1972 = vshrl.u32 %v1971, 7
        %v1973 = vsub.s32 0, %v1972
        %v1974 = vrot.slane %v1759, %v1973
        %v1976 = vmul.f32 %v1954, %v1974
        %v1977 = vmul.f32 %v1955, %v1974
        %v1978 = vmul.f32 %v1956, %v1974
        %v1979 = vmul.f32 %v1957, %v1974
        %v1980 = vmul.f32 %v1958, %v1974
        %v1981 = vmul.f32 %v1959, %v1974
        %v1982 = vmul.f32 %v1960, %v1974
        %v1983 = vmul.f32 %v1961, %v1974
        %v1984 = vmul.f32 %v1962, %v1974
        %v1985 = vmul.f32 %v1963, %v1974
        %v1986 = vmul.f32 %v1964, %v1974
        %v1987 = vmul.f32 %v1965, %v1974
        %v1988 = vmul.f32 %v1966, %v1974
        %v1989 = vmul.f32 %v1967, %v1974
        %v1990 = vmul.f32 %v1968, %v1974
        %v1991 = vmul.f32 %v1969, %v1974
        %v1993 = vlaneseq
        %v1994 = vshrl.u32 %v1993, 7
        %v1995 = vsub.s32 0, %v1994
        %v1996 = vrot.slane %v1760, %v1995
        %v1998 = vadd.f32 %v1976, %v1996
        %v1999 = vadd.f32 %v1977, %v1996
        %v2000 = vadd.f32 %v1978, %v1996
        %v2001 = vadd.f32 %v1979, %v1996
        %v2002 = vadd.f32 %v1980, %v1996
        %v2003 = vadd.f32 %v1981, %v1996
        %v2004 = vadd.f32 %v1982, %v1996
        %v2005 = vadd.f32 %v1983, %v1996
        %v2006 = vadd.f32 %v1984, %v1996
        %v2007 = vadd.f32 %v1985, %v1996
        %v2008 = vadd.f32 %v1986, %v1996
        %v2009 = vadd.f32 %v1987, %v1996
        %v2010 = vadd.f32 %v1988, %v1996
        %v2011 = vadd.f32 %v1989, %v1996
        %v2012 = vadd.f32 %v1990, %v1996
        %v2013 = vadd.f32 %v1991, %v1996
        %v2014 = vld [vmem:[%s11] sm:$0xff]
        %v2015 = vld [vmem:[%s11 + $0x8] sm:$0xff]
        %v2016 = vld [vmem:[%s11 + $0x10] sm:$0xff]
        %v2017 = vld [vmem:[%s11 + $0x18] sm:$0xff]
        %v2018 = vld [vmem:[%s12] sm:$0x1]
        %v2020 = vlaneseq
        %v2021 = vshrl.u32 %v2020, 7
        %v2022 = vsub.s32 0, %v2021
        %v2023 = vrot.slane %v2018, %v2022
        %v2026 = vsel %vm1125, %v1998, 0
        %v2029 = vsel %vm1125, %v1999, 0
        %v2032 = vsel %vm1125, %v2000, 0
        %v2035 = vsel %vm1125, %v2001, 0
        %v2038 = vsel %vm1125, %v2002, 0
        %v2041 = vsel %vm1125, %v2003, 0
        %v2044 = vsel %vm1125, %v2004, 0
        %v2047 = vsel %vm1125, %v2005, 0
        %v2050 = vsel %vm1125, %v2006, 0
        %v2053 = vsel %vm1125, %v2007, 0
        %v2056 = vsel %vm1125, %v2008, 0
        %v2059 = vsel %vm1125, %v2009, 0
        %v2062 = vsel %vm1125, %v2010, 0
        %v2065 = vsel %vm1125, %v2011, 0
        %v2068 = vsel %vm1125, %v2012, 0
        %v2071 = vsel %vm1125, %v2013, 0
        %2073 = vmatprep.subr.mxu0 0.0
        %2074 = vmatpush1.msra.mxu0 %v2014
        %2075 = vmatprep.subr.mxu0 0.0
        %2076 = vmatpush1.msra.mxu0 %v2015
        %2077 = vmatprep.subr.mxu0 0.0
        %2078 = vmatpush1.msra.mxu0 %v2016
        %2079 = vmatprep.subr.mxu0 0.0
        %2080 = vmatpush1.msra.mxu0 %v2017
        %2081 = vmatprep.subr.mxu0 0.0
        %2082 = vmatpush1.msra.mxu0 0.0
        %2083 = vmatprep.subr.mxu0 0.0
        %2084 = vmatpush1.msra.mxu0 0.0
        %2085 = vmatprep.subr.mxu0 0.0
        %2086 = vmatpush1.msra.mxu0 0.0
        %2087 = vmatprep.subr.mxu0 0.0
        %2088 = vmatpush1.msra.mxu0 0.0
        %2089 = vmatprep.subr.mxu0 0.0
        %2090 = vmatpush1.msra.mxu0 0.0
        %2091 = vmatprep.subr.mxu0 0.0
        %2092 = vmatpush1.msra.mxu0 0.0
        %2093 = vmatprep.subr.mxu0 0.0
        %2094 = vmatpush1.msra.mxu0 0.0
        %2095 = vmatprep.subr.mxu0 0.0
        %2096 = vmatpush1.msra.mxu0 0.0
        %2097 = vmatprep.subr.mxu0 0.0
        %2098 = vmatpush1.msra.mxu0 0.0
        %2099 = vmatprep.subr.mxu0 0.0
        %2100 = vmatpush1.msra.mxu0 0.0
        %2101 = vmatprep.subr.mxu0 0.0
        %2102 = vmatpush1.msra.mxu0 0.0
        %2103 = vmatprep.subr.mxu0 0.0
        %2104 = vmatpush1.msra.mxu0 0.0
        %2105 = vmatprep.subr.mxu0 0.0
        %2106 = vmatpush1.msra.mxu0 0.0
        %2107 = vmatprep.subr.mxu0 0.0
        %2108 = vmatpush1.msra.mxu0 0.0
        %2109 = vmatprep.subr.mxu0 0.0
        %2110 = vmatpush1.msra.mxu0 0.0
        %2111 = vmatprep.subr.mxu0 0.0
        %2112 = vmatpush1.msra.mxu0 0.0
        %2113 = vmatprep.subr.mxu0 0.0
        %2114 = vmatpush1.msra.mxu0 0.0
        %2115 = vmatprep.subr.mxu0 0.0
        %2116 = vmatpush1.msra.mxu0 0.0
        %2117 = vmatprep.subr.mxu0 0.0
        %2118 = vmatpush1.msra.mxu0 0.0
        %2119 = vmatprep.subr.mxu0 0.0
        %2120 = vmatpush1.msra.mxu0 0.0
        %2121 = vmatprep.subr.mxu0 0.0
        %2122 = vmatpush1.msra.mxu0 0.0
        %2123 = vmatprep.subr.mxu0 0.0
        %2124 = vmatpush1.msra.mxu0 0.0
        %2125 = vmatprep.subr.mxu0 0.0
        %2126 = vmatpush1.msra.mxu0 0.0
        %2127 = vmatprep.subr.mxu0 0.0
        %2128 = vmatpush1.msra.mxu0 0.0
        %2129 = vmatprep.subr.mxu0 0.0
        %2130 = vmatpush1.msra.mxu0 0.0
        %2131 = vmatprep.subr.mxu0 0.0
        %2132 = vmatpush1.msra.mxu0 0.0
        %2133 = vmatprep.subr.mxu0 0.0
        %2134 = vmatpush1.msra.mxu0 0.0
        %2135 = vmatprep.subr.mxu0 0.0
        %2136 = vmatpush1.msra.mxu0 0.0
        %2137 = vmatprep.mubr.f32.mxu0 0.0
        %2138 = vmatmul.mubr.f32.gmra.mrb[0].mxu0 %v2026
        %v2139 = vpop.f32.mrb[0].mxu0
        %v2140 = vadd.f32 %v2023, %v2139
        %v2141 = vpop.f32.mrb[0].mxu0
        %2142 = vmatprep.mubr.f32.mxu0 0.0
        %2143 = vmatmul.mubr.f32.gmra.mrb[0].mxu0 %v2029
        %v2144 = vpop.f32.mrb[0].mxu0
        %v2145 = vadd.f32 %v2023, %v2144
        %v2146 = vpop.f32.mrb[0].mxu0
        %2147 = vmatprep.mubr.f32.mxu0 0.0
        %2148 = vmatmul.mubr.f32.gmra.mrb[0].mxu0 %v2032
        %v2149 = vpop.f32.mrb[0].mxu0
        %v2150 = vadd.f32 %v2023, %v2149
        %v2151 = vpop.f32.mrb[0].mxu0
        %2152 = vmatprep.mubr.f32.mxu0 0.0
        %2153 = vmatmul.mubr.f32.gmra.mrb[0].mxu0 %v2035
        %v2154 = vpop.f32.mrb[0].mxu0
        %v2155 = vadd.f32 %v2023, %v2154
        %v2156 = vpop.f32.mrb[0].mxu0
        %2157 = vmatprep.mubr.f32.mxu0 0.0
        %2158 = vmatmul.mubr.f32.gmra.mrb[0].mxu0 %v2038
        %v2159 = vpop.f32.mrb[0].mxu0
        %v2160 = vadd.f32 %v2023, %v2159
        %v2161 = vpop.f32.mrb[0].mxu0
        %2162 = vmatprep.mubr.f32.mxu0 0.0
        %2163 = vmatmul.mubr.f32.gmra.mrb[0].mxu0 %v2041
        %v2164 = vpop.f32.mrb[0].mxu0
        %v2165 = vadd.f32 %v2023, %v2164
        %v2166 = vpop.f32.mrb[0].mxu0
        %2167 = vmatprep.mubr.f32.mxu0 0.0
        %2168 = vmatmul.mubr.f32.gmra.mrb[0].mxu0 %v2044
        %v2169 = vpop.f32.mrb[0].mxu0
        %v2170 = vadd.f32 %v2023, %v2169
        %v2171 = vpop.f32.mrb[0].mxu0
        %2172 = vmatprep.mubr.f32.mxu0 0.0
        %2173 = vmatmul.mubr.f32.gmra.mrb[0].mxu0 %v2047
        %v2174 = vpop.f32.mrb[0].mxu0
        %v2175 = vadd.f32 %v2023, %v2174
        %v2176 = vpop.f32.mrb[0].mxu0
        %2177 = vmatprep.mubr.f32.mxu0 0.0
        %2178 = vmatmul.mubr.f32.gmra.mrb[0].mxu0 %v2050
        %v2179 = vpop.f32.mrb[0].mxu0
        %v2180 = vadd.f32 %v2023, %v2179
        %v2181 = vpop.f32.mrb[0].mxu0
        %2182 = vmatprep.mubr.f32.mxu0 0.0
        %2183 = vmatmul.mubr.f32.gmra.mrb[0].mxu0 %v2053
        %v2184 = vpop.f32.mrb[0].mxu0
        %v2185 = vadd.f32 %v2023, %v2184
        %v2186 = vpop.f32.mrb[0].mxu0
        %2187 = vmatprep.mubr.f32.mxu0 0.0
        %2188 = vmatmul.mubr.f32.gmra.mrb[0].mxu0 %v2056
        %v2189 = vpop.f32.mrb[0].mxu0
        %v2190 = vadd.f32 %v2023, %v2189
        %v2191 = vpop.f32.mrb[0].mxu0
        %2192 = vmatprep.mubr.f32.mxu0 0.0
        %2193 = vmatmul.mubr.f32.gmra.mrb[0].mxu0 %v2059
        %v2194 = vpop.f32.mrb[0].mxu0
        %v2195 = vadd.f32 %v2023, %v2194
        %v2196 = vpop.f32.mrb[0].mxu0
        %2197 = vmatprep.mubr.f32.mxu0 0.0
        %2198 = vmatmul.mubr.f32.gmra.mrb[0].mxu0 %v2062
        %v2199 = vpop.f32.mrb[0].mxu0
        %v2200 = vadd.f32 %v2023, %v2199
        %v2201 = vpop.f32.mrb[0].mxu0
        %2202 = vmatprep.mubr.f32.mxu0 0.0
        %2203 = vmatmul.mubr.f32.gmra.mrb[0].mxu0 %v2065
        %v2204 = vpop.f32.mrb[0].mxu0
        %v2205 = vadd.f32 %v2023, %v2204
        %v2206 = vpop.f32.mrb[0].mxu0
        %2207 = vmatprep.mubr.f32.mxu0 0.0
        %2208 = vmatmul.mubr.f32.gmra.mrb[0].mxu0 %v2068
        %v2209 = vpop.f32.mrb[0].mxu0
        %v2210 = vadd.f32 %v2023, %v2209
        %v2211 = vpop.f32.mrb[0].mxu0
        %2212 = vmatprep.mubr.f32.mxu0 0.0
        %2213 = vmatmul.mubr.f32.gmra.mrb[0].mxu0 %v2071
        %v2214 = vpop.f32.mrb[0].mxu0
        %v2215 = vadd.f32 %v2023, %v2214
        %v2216 = vpop.f32.mrb[0].mxu0
        %2217 = vdwg.mxu0
        %p2218 = scmp.eq.s32.totalorder %s59, 0
        // Predicated region
        $region189: #{slot_video_forward.1} parent=127 // pred_check
          %p2219 = pneg %p2218
        $region190: #{slot_video_forward.1} parent=127 // pred_check_branch
          %2221 = sbr.rel (%p2219) target = $region192
        $region191: #{slot_video_forward.1} parent=127 // pred_region
          %v2222 = vld [vmem:[#allocation9] sm:$0xff]
          %v2223 = vld [vmem:[#allocation14] sm:$0x1]
          %v2224 = vld [vmem:[#allocation15] sm:$0x1]
          %v2225 = vsel %vm1125, %v2222, 0.0
          %2226 = vadd.xlane.f32.xlu0 %v2225
          %v2227 = vpop.xlane.xlu0 %2226
          %v2228 = vmul.f32 %v2227, %v1809
          %v2229 = vsub.f32 %v2222, %v2228
          %v2230 = vmul.f32 %v2229, %v2229
          %v2231 = vsel %vm1125, %v2230, 0.0
          %2232 = vadd.xlane.f32.xlu0 %v2231
          %v2233 = vpop.xlane.xlu0 %2232
          %v2234 = vmul.f32 %v2233, %v1809
          %v2235 = vadd.f32 %v2234, 1e-05
          %v2236 = vrsqrt.pop %v2235
          %v2237 = vmul.f32 %v2229, %v2236
          %v2239 = vlaneseq
          %v2240 = vshrl.u32 %v2239, 7
          %v2241 = vsub.s32 0, %v2240
          %v2242 = vrot.slane %v2223, %v2241
          %v2244 = vmul.f32 %v2237, %v2242
          %v2246 = vlaneseq
          %v2247 = vshrl.u32 %v2246, 7
          %v2248 = vsub.s32 0, %v2247
          %v2249 = vrot.slane %v2224, %v2248
          %v2251 = vadd.f32 %v2244, %v2249
          %v2252 = vld [vmem:[%s15] sm:$0xff]
          %v2253 = vld [vmem:[%s15 + $0x8] sm:$0xff]
          %v2254 = vld [vmem:[%s15 + $0x10] sm:$0xff]
          %v2255 = vld [vmem:[%s15 + $0x18] sm:$0xff]
          %v2256 = vld [vmem:[#allocation17] sm:$0x1]
          %v2258 = vlaneseq
          %v2259 = vshrl.u32 %v2258, 7
          %v2260 = vsub.s32 0, %v2259
          %v2261 = vrot.slane %v2256, %v2260
          %v2264 = vsel %vm1125, %v2251, 0
          %2266 = vmatprep.subr.mxu0 0.0
          %2267 = vmatpush1.msra.mxu0 %v2252
          %2268 = vmatprep.subr.mxu0 0.0
          %2269 = vmatpush1.msra.mxu0 %v2253
          %2270 = vmatprep.subr.mxu0 0.0
          %2271 = vmatpush1.msra.mxu0 %v2254
          %2272 = vmatprep.subr.mxu0 0.0
          %2273 = vmatpush1.msra.mxu0 %v2255
          %2274 = vmatprep.subr.mxu0 0.0
          %2275 = vmatpush1.msra.mxu0 0.0
          %2276 = vmatprep.subr.mxu0 0.0
          %2277 = vmatpush1.msra.mxu0 0.0
          %2278 = vmatprep.subr.mxu0 0.0
          %2279 = vmatpush1.msra.mxu0 0.0
          %2280 = vmatprep.subr.mxu0 0.0
          %2281 = vmatpush1.msra.mxu0 0.0
          %2282 = vmatprep.subr.mxu0 0.0
          %2283 = vmatpush1.msra.mxu0 0.0
          %2284 = vmatprep.subr.mxu0 0.0
          %2285 = vmatpush1.msra.mxu0 0.0
          %2286 = vmatprep.subr.mxu0 0.0
          %2287 = vmatpush1.msra.mxu0 0.0
          %2288 = vmatprep.subr.mxu0 0.0
          %2289 = vmatpush1.msra.mxu0 0.0
          %2290 = vmatprep.subr.mxu0 0.0
          %2291 = vmatpush1.msra.mxu0 0.0
          %2292 = vmatprep.subr.mxu0 0.0
          %2293 = vmatpush1.msra.mxu0 0.0
          %2294 = vmatprep.subr.mxu0 0.0
          %2295 = vmatpush1.msra.mxu0 0.0
          %2296 = vmatprep.subr.mxu0 0.0
          %2297 = vmatpush1.msra.mxu0 0.0
          %2298 = vmatprep.subr.mxu0 0.0
          %2299 = vmatpush1.msra.mxu0 0.0
          %2300 = vmatprep.subr.mxu0 0.0
          %2301 = vmatpush1.msra.mxu0 0.0
          %2302 = vmatprep.subr.mxu0 0.0
          %2303 = vmatpush1.msra.mxu0 0.0
          %2304 = vmatprep.subr.mxu0 0.0
          %2305 = vmatpush1.msra.mxu0 0.0
          %2306 = vmatprep.subr.mxu0 0.0
          %2307 = vmatpush1.msra.mxu0 0.0
          %2308 = vmatprep.subr.mxu0 0.0
          %2309 = vmatpush1.msra.mxu0 0.0
          %2310 = vmatprep.subr.mxu0 0.0
          %2311 = vmatpush1.msra.mxu0 0.0
          %2312 = vmatprep.subr.mxu0 0.0
          %2313 = vmatpush1.msra.mxu0 0.0
          %2314 = vmatprep.subr.mxu0 0.0
          %2315 = vmatpush1.msra.mxu0 0.0
          %2316 = vmatprep.subr.mxu0 0.0
          %2317 = vmatpush1.msra.mxu0 0.0
          %2318 = vmatprep.subr.mxu0 0.0
          %2319 = vmatpush1.msra.mxu0 0.0
          %2320 = vmatprep.subr.mxu0 0.0
          %2321 = vmatpush1.msra.mxu0 0.0
          %2322 = vmatprep.subr.mxu0 0.0
          %2323 = vmatpush1.msra.mxu0 0.0
          %2324 = vmatprep.subr.mxu0 0.0
          %2325 = vmatpush1.msra.mxu0 0.0
          %2326 = vmatprep.subr.mxu0 0.0
          %2327 = vmatpush1.msra.mxu0 0.0
          %2328 = vmatprep.subr.mxu0 0.0
          %2329 = vmatpush1.msra.mxu0 0.0
          %2330 = vmatprep.mubr.f32.mxu0 0.0
          %2331 = vmatmul.mubr.f32.gmra.mrb[0].mxu0 %v2264
          %v2332 = vpop.f32.mrb[0].mxu0
          %v2333 = vadd.f32 %v2261, %v2332
          %v2334 = vpop.f32.mrb[0].mxu0
          %2335 = vdwg.mxu0
          %v2337 = vsel %vm1125, %v2333, 0
          %v2340 = vsel %vm1125, %v2140, 0
          %v2343 = vsel %vm1125, %v2145, 0
          %v2346 = vsel %vm1125, %v2150, 0
          %v2349 = vsel %vm1125, %v2155, 0
          %v2352 = vsel %vm1125, %v2160, 0
          %v2355 = vsel %vm1125, %v2165, 0
          %v2358 = vsel %vm1125, %v2170, 0
          %v2361 = vsel %vm1125, %v2175, 0
          %v2364 = vsel %vm1125, %v2180, 0
          %v2367 = vsel %vm1125, %v2185, 0
          %v2370 = vsel %vm1125, %v2190, 0
          %v2373 = vsel %vm1125, %v2195, 0
          %v2376 = vsel %vm1125, %v2200, 0
          %v2379 = vsel %vm1125, %v2205, 0
          %v2382 = vsel %vm1125, %v2210, 0
          %v2385 = vsel %vm1125, %v2215, 0
          %2387 = vmatprep.subr.mxu0 0.0
          %2388 = vmatpush1.xpose.msra.mxu0 %v2340
          %2389 = vmatprep.subr.mxu0 0.0
          %2390 = vmatpush1.xpose.msra.mxu0 %v2343
          %2391 = vmatprep.subr.mxu0 0.0
          %2392 = vmatpush1.xpose.msra.mxu0 %v2346
          %2393 = vmatprep.subr.mxu0 0.0
          %2394 = vmatpush1.xpose.msra.mxu0 %v2349
          %2395 = vmatprep.subr.mxu0 0.0
          %2396 = vmatpush1.xpose.msra.mxu0 %v2352
          %2397 = vmatprep.subr.mxu0 0.0
          %2398 = vmatpush1.xpose.msra.mxu0 %v2355
          %2399 = vmatprep.subr.mxu0 0.0
          %2400 = vmatpush1.xpose.msra.mxu0 %v2358
          %2401 = vmatprep.subr.mxu0 0.0
          %2402 = vmatpush1.xpose.msra.mxu0 %v2361
          %2403 = vmatprep.subr.mxu0 0.0
          %2404 = vmatpush1.xpose.msra.mxu0 %v2364
          %2405 = vmatprep.subr.mxu0 0.0
          %2406 = vmatpush1.xpose.msra.mxu0 %v2367
          %2407 = vmatprep.subr.mxu0 0.0
          %2408 = vmatpush1.xpose.msra.mxu0 %v2370
          %2409 = vmatprep.subr.mxu0 0.0
          %2410 = vmatpush1.xpose.msra.mxu0 %v2373
          %2411 = vmatprep.subr.mxu0 0.0
          %2412 = vmatpush1.xpose.msra.mxu0 %v2376
          %2413 = vmatprep.subr.mxu0 0.0
          %2414 = vmatpush1.xpose.msra.mxu0 %v2379
          %2415 = vmatprep.subr.mxu0 0.0
          %2416 = vmatpush1.xpose.msra.mxu0 %v2382
          %2417 = vmatprep.subr.mxu0 0.0
          %2418 = vmatpush1.xpose.msra.mxu0 %v2385
          %2419 = vmatprep.subr.mxu0 0.0
          %2420 = vmatpush1.xpose.msra.mxu0 0.0
          %2421 = vmatprep.subr.mxu0 0.0
          %2422 = vmatpush1.xpose.msra.mxu0 0.0
          %2423 = vmatprep.subr.mxu0 0.0
          %2424 = vmatpush1.xpose.msra.mxu0 0.0
          %2425 = vmatprep.subr.mxu0 0.0
          %2426 = vmatpush1.xpose.msra.mxu0 0.0
          %2427 = vmatprep.subr.mxu0 0.0
          %2428 = vmatpush1.xpose.msra.mxu0 0.0
          %2429 = vmatprep.subr.mxu0 0.0
          %2430 = vmatpush1.xpose.msra.mxu0 0.0
          %2431 = vmatprep.subr.mxu0 0.0
          %2432 = vmatpush1.xpose.msra.mxu0 0.0
          %2433 = vmatprep.subr.mxu0 0.0
          %2434 = vmatpush1.xpose.msra.mxu0 0.0
          %2435 = vmatprep.subr.mxu0 0.0
          %2436 = vmatpush1.xpose.msra.mxu0 0.0
          %2437 = vmatprep.subr.mxu0 0.0
          %2438 = vmatpush1.xpose.msra.mxu0 0.0
          %2439 = vmatprep.subr.mxu0 0.0
          %2440 = vmatpush1.xpose.msra.mxu0 0.0
          %2441 = vmatprep.subr.mxu0 0.0
          %2442 = vmatpush1.xpose.msra.mxu0 0.0
          %2443 = vmatprep.subr.mxu0 0.0
          %2444 = vmatpush1.xpose.msra.mxu0 0.0
          %2445 = vmatprep.subr.mxu0 0.0
          %2446 = vmatpush1.xpose.msra.mxu0 0.0
          %2447 = vmatprep.subr.mxu0 0.0
          %2448 = vmatpush1.xpose.msra.mxu0 0.0
          %2449 = vmatprep.subr.mxu0 0.0
          %2450 = vmatpush1.xpose.msra.mxu0 0.0
          %2451 = vmatprep.mubr.f32.mxu0 0.0
          %2452 = vmatmul.mubr.f32.gmra.mrb[0].mxu0 %v2337
          %v2453 = vpop.f32.mrb[0].mxu0
          %v2454 = vadd.f32 0.0, %v2453
          %v2455 = vpop.f32.mrb[0].mxu0
          %2456 = vdwg.mxu0
          %v2457 = vmul.f32 %v2454, 0.17677669
          %v2458 = vrot.slane %v2457, 4
          %v2459 = vmax.f32 %v2457, %v2458
          %v2460 = vrot.slane %v2459, 2
          %v2461 = vmax.f32 %v2459, %v2460
          %v2462 = vrot.slane %v2461, 1
          %v2463 = vmax.f32 %v2461, %v2462
          %v2464 = vsub.f32 %v2457, %v2463
          %v2465 = vmul.f32 %v2464, 1.442695
          %v2466 = vpow.pop %v2465
          %v2467 = vrot.slane %v2466, 4
          %v2468 = vadd.f32 %v2466, %v2467
          %v2469 = vrot.slane %v2468, 2
          %v2470 = vadd.f32 %v2468, %v2469
          %v2471 = vrot.slane %v2470, 1
          %v2472 = vadd.f32 %v2470, %v2471
          %v2473 = vrcp.pop %v2472
          %v2474 = vmul.f32 %v2466, %v2473
          %v2475 = vadd.f32 %v2474, 1e-08
          %2476 = vadd.xlane.f32.xlu0 %v2475
          %v2477 = vpop.xlane.xlu0 %2476
          %v2478 = vrcp.pop %v2477
          %v2479 = vmul.f32 %v2475, %v2478
          %2480 = vrot.lane.b32.xlu0 %v2140, 96
          %v2481 = vpop.permute.xlu0 %2480
          %2482 = vrot.lane.b32.xlu0 %v2145, 96
          %v2483 = vpop.permute.xlu0 %2482
          %2484 = vrot.lane.b32.xlu0 %v2150, 96
          %v2485 = vpop.permute.xlu0 %2484
          %2486 = vrot.lane.b32.xlu0 %v2155, 96
          %v2487 = vpop.permute.xlu0 %2486
          %2488 = vrot.lane.b32.xlu0 %v2160, 96
          %v2489 = vpop.permute.xlu0 %2488
          %2490 = vrot.lane.b32.xlu0 %v2165, 96
          %v2491 = vpop.permute.xlu0 %2490
          %2492 = vrot.lane.b32.xlu0 %v2170, 96
          %v2493 = vpop.permute.xlu0 %2492
          %2494 = vrot.lane.b32.xlu0 %v2175, 96
          %v2495 = vpop.permute.xlu0 %2494
          %2496 = vrot.lane.b32.xlu0 %v2180, 96
          %v2497 = vpop.permute.xlu0 %2496
          %2498 = vrot.lane.b32.xlu0 %v2185, 96
          %v2499 = vpop.permute.xlu0 %2498
          %2500 = vrot.lane.b32.xlu0 %v2190, 96
          %v2501 = vpop.permute.xlu0 %2500
          %2502 = vrot.lane.b32.xlu0 %v2195, 96
          %v2503 = vpop.permute.xlu0 %2502
          %2504 = vrot.lane.b32.xlu0 %v2200, 96
          %v2505 = vpop.permute.xlu0 %2504
          %2506 = vrot.lane.b32.xlu0 %v2205, 96
          %v2507 = vpop.permute.xlu0 %2506
          %2508 = vrot.lane.b32.xlu0 %v2210, 96
          %v2509 = vpop.permute.xlu0 %2508
          %2510 = vrot.lane.b32.xlu0 %v2215, 96
          %v2511 = vpop.permute.xlu0 %2510
          %2528 = vmatprep.subr.mxu0 0.0
          %2529 = vmatpush1.msra.mxu0 %v2481
          %2530 = vmatprep.subr.mxu0 0.0
          %2531 = vmatpush1.msra.mxu0 %v2483
          %2532 = vmatprep.subr.mxu0 0.0
          %2533 = vmatpush1.msra.mxu0 %v2485
          %2534 = vmatprep.subr.mxu0 0.0
          %2535 = vmatpush1.msra.mxu0 %v2487
          %2536 = vmatprep.subr.mxu0 0.0
          %2537 = vmatpush1.msra.mxu0 %v2489
          %2538 = vmatprep.subr.mxu0 0.0
          %2539 = vmatpush1.msra.mxu0 %v2491
          %2540 = vmatprep.subr.mxu0 0.0
          %2541 = vmatpush1.msra.mxu0 %v2493
          %2542 = vmatprep.subr.mxu0 0.0
          %2543 = vmatpush1.msra.mxu0 %v2495
          %2544 = vmatprep.subr.mxu0 0.0
          %2545 = vmatpush1.msra.mxu0 %v2497
          %2546 = vmatprep.subr.mxu0 0.0
          %2547 = vmatpush1.msra.mxu0 %v2499
          %2548 = vmatprep.subr.mxu0 0.0
          %2549 = vmatpush1.msra.mxu0 %v2501
          %2550 = vmatprep.subr.mxu0 0.0
          %2551 = vmatpush1.msra.mxu0 %v2503
          %2552 = vmatprep.subr.mxu0 0.0
          %2553 = vmatpush1.msra.mxu0 %v2505
          %2554 = vmatprep.subr.mxu0 0.0
          %2555 = vmatpush1.msra.mxu0 %v2507
          %2556 = vmatprep.subr.mxu0 0.0
          %2557 = vmatpush1.msra.mxu0 %v2509
          %2558 = vmatprep.subr.mxu0 0.0
          %2559 = vmatpush1.msra.mxu0 %v2511
          %2560 = vmatprep.subr.mxu0 0.0
          %2561 = vmatpush1.msra.mxu0 0.0
          %2562 = vmatprep.subr.mxu0 0.0
          %2563 = vmatpush1.msra.mxu0 0.0
          %2564 = vmatprep.subr.mxu0 0.0
          %2565 = vmatpush1.msra.mxu0 0.0
          %2566 = vmatprep.subr.mxu0 0.0
          %2567 = vmatpush1.msra.mxu0 0.0
          %2568 = vmatprep.subr.mxu0 0.0
          %2569 = vmatpush1.msra.mxu0 0.0
          %2570 = vmatprep.subr.mxu0 0.0
          %2571 = vmatpush1.msra.mxu0 0.0
          %2572 = vmatprep.subr.mxu0 0.0
          %2573 = vmatpush1.msra.mxu0 0.0
          %2574 = vmatprep.subr.mxu0 0.0
          %2575 = vmatpush1.msra.mxu0 0.0
          %2576 = vmatprep.subr.mxu0 0.0
          %2577 = vmatpush1.msra.mxu0 0.0
          %2578 = vmatprep.subr.mxu0 0.0
          %2579 = vmatpush1.msra.mxu0 0.0
          %2580 = vmatprep.subr.mxu0 0.0
          %2581 = vmatpush1.msra.mxu0 0.0
          %2582 = vmatprep.subr.mxu0 0.0
          %2583 = vmatpush1.msra.mxu0 0.0
          %2584 = vmatprep.subr.mxu0 0.0
          %2585 = vmatpush1.msra.mxu0 0.0
          %2586 = vmatprep.subr.mxu0 0.0
          %2587 = vmatpush1.msra.mxu0 0.0
          %2588 = vmatprep.subr.mxu0 0.0
          %2589 = vmatpush1.msra.mxu0 0.0
          %2590 = vmatprep.subr.mxu0 0.0
          %2591 = vmatpush1.msra.mxu0 0.0
          %2592 = vmatprep.mubr.f32.mxu0 0.0
          %2593 = vmatmul.mubr.f32.gmra.mrb[0].mxu0 %v2479
          %v2594 = vpop.f32.mrb[0].mxu0
          %v2595 = vadd.f32 0.0, %v2594
          %v2596 = vpop.f32.mrb[0].mxu0
          %2597 = vdwg.mxu0
          %v2598 = vld [vmem:[%s17] sm:$0xff]
          %v2599 = vld [vmem:[%s17 + $0x8] sm:$0xff]
          %v2600 = vld [vmem:[%s17 + $0x10] sm:$0xff]
          %v2601 = vld [vmem:[%s17 + $0x18] sm:$0xff]
          %v2602 = vld [vmem:[%s18] sm:$0x1]
          %v2604 = vlaneseq
          %v2605 = vshrl.u32 %v2604, 7
          %v2606 = vsub.s32 0, %v2605
          %v2607 = vrot.slane %v2602, %v2606
          %v2610 = vsel %vm1125, %v2595, 0
          %2612 = vmatprep.subr.mxu0 0.0
          %2613 = vmatpush1.msra.mxu0 %v2598
          %2614 = vmatprep.subr.mxu0 0.0
          %2615 = vmatpush1.msra.mxu0 %v2599
          %2616 = vmatprep.subr.mxu0 0.0
          %2617 = vmatpush1.msra.mxu0 %v2600
          %2618 = vmatprep.subr.mxu0 0.0
          %2619 = vmatpush1.msra.mxu0 %v2601
          %2620 = vmatprep.subr.mxu0 0.0
          %2621 = vmatpush1.msra.mxu0 0.0
          %2622 = vmatprep.subr.mxu0 0.0
          %2623 = vmatpush1.msra.mxu0 0.0
          %2624 = vmatprep.subr.mxu0 0.0
          %2625 = vmatpush1.msra.mxu0 0.0
          %2626 = vmatprep.subr.mxu0 0.0
          %2627 = vmatpush1.msra.mxu0 0.0
          %2628 = vmatprep.subr.mxu0 0.0
          %2629 = vmatpush1.msra.mxu0 0.0
          %2630 = vmatprep.subr.mxu0 0.0
          %2631 = vmatpush1.msra.mxu0 0.0
          %2632 = vmatprep.subr.mxu0 0.0
          %2633 = vmatpush1.msra.mxu0 0.0
          %2634 = vmatprep.subr.mxu0 0.0
          %2635 = vmatpush1.msra.mxu0 0.0
          %2636 = vmatprep.subr.mxu0 0.0
          %2637 = vmatpush1.msra.mxu0 0.0
          %2638 = vmatprep.subr.mxu0 0.0
          %2639 = vmatpush1.msra.mxu0 0.0
          %2640 = vmatprep.subr.mxu0 0.0
          %2641 = vmatpush1.msra.mxu0 0.0
          %2642 = vmatprep.subr.mxu0 0.0
          %2643 = vmatpush1.msra.mxu0 0.0
          %2644 = vmatprep.subr.mxu0 0.0
          %2645 = vmatpush1.msra.mxu0 0.0
          %2646 = vmatprep.subr.mxu0 0.0
          %2647 = vmatpush1.msra.mxu0 0.0
          %2648 = vmatprep.subr.mxu0 0.0
          %2649 = vmatpush1.msra.mxu0 0.0
          %2650 = vmatprep.subr.mxu0 0.0
          %2651 = vmatpush1.msra.mxu0 0.0
          %2652 = vmatprep.subr.mxu0 0.0
          %2653 = vmatpush1.msra.mxu0 0.0
          %2654 = vmatprep.subr.mxu0 0.0
          %2655 = vmatpush1.msra.mxu0 0.0
          %2656 = vmatprep.subr.mxu0 0.0
          %2657 = vmatpush1.msra.mxu0 0.0
          %2658 = vmatprep.subr.mxu0 0.0
          %2659 = vmatpush1.msra.mxu0 0.0
          %2660 = vmatprep.subr.mxu0 0.0
          %2661 = vmatpush1.msra.mxu0 0.0
          %2662 = vmatprep.subr.mxu0 0.0
          %2663 = vmatpush1.msra.mxu0 0.0
          %2664 = vmatprep.subr.mxu0 0.0
          %2665 = vmatpush1.msra.mxu0 0.0
          %2666 = vmatprep.subr.mxu0 0.0
          %2667 = vmatpush1.msra.mxu0 0.0
          %2668 = vmatprep.subr.mxu0 0.0
          %2669 = vmatpush1.msra.mxu0 0.0
          %2670 = vmatprep.subr.mxu0 0.0
          %2671 = vmatpush1.msra.mxu0 0.0
          %2672 = vmatprep.subr.mxu0 0.0
          %2673 = vmatpush1.msra.mxu0 0.0
          %2674 = vmatprep.subr.mxu0 0.0
          %2675 = vmatpush1.msra.mxu0 0.0
          %2676 = vmatprep.mubr.f32.mxu0 0.0
          %2677 = vmatmul.mubr.f32.gmra.mrb[0].mxu0 %v2610
          %v2678 = vpop.f32.mrb[0].mxu0
          %v2679 = vadd.f32 %v2607, %v2678
          %v2680 = vpop.f32.mrb[0].mxu0
          %2681 = vdwg.mxu0
          %v2682 = vld [vmem:[%s19] sm:$0xff]
          %v2683 = vld [vmem:[%s19 + $0x8] sm:$0xff]
          %v2684 = vld [vmem:[%s19 + $0x10] sm:$0xff]
          %v2685 = vld [vmem:[%s19 + $0x18] sm:$0xff]
          %v2686 = vld [vmem:[%s20] sm:$0x1]
          %v2688 = vlaneseq
          %v2689 = vshrl.u32 %v2688, 7
          %v2690 = vsub.s32 0, %v2689
          %v2691 = vrot.slane %v2686, %v2690
          %v2694 = vsel %vm1125, %v2222, 0
          %2696 = vmatprep.subr.mxu0 0.0
          %2697 = vmatpush1.msra.mxu0 %v2682
          %2698 = vmatprep.subr.mxu0 0.0
          %2699 = vmatpush1.msra.mxu0 %v2683
          %2700 = vmatprep.subr.mxu0 0.0
          %2701 = vmatpush1.msra.mxu0 %v2684
          %2702 = vmatprep.subr.mxu0 0.0
          %2703 = vmatpush1.msra.mxu0 %v2685
          %2704 = vmatprep.subr.mxu0 0.0
          %2705 = vmatpush1.msra.mxu0 0.0
          %2706 = vmatprep.subr.mxu0 0.0
          %2707 = vmatpush1.msra.mxu0 0.0
          %2708 = vmatprep.subr.mxu0 0.0
          %2709 = vmatpush1.msra.mxu0 0.0
          %2710 = vmatprep.subr.mxu0 0.0
          %2711 = vmatpush1.msra.mxu0 0.0
          %2712 = vmatprep.subr.mxu0 0.0
          %2713 = vmatpush1.msra.mxu0 0.0
          %2714 = vmatprep.subr.mxu0 0.0
          %2715 = vmatpush1.msra.mxu0 0.0
          %2716 = vmatprep.subr.mxu0 0.0
          %2717 = vmatpush1.msra.mxu0 0.0
          %2718 = vmatprep.subr.mxu0 0.0
          %2719 = vmatpush1.msra.mxu0 0.0
          %2720 = vmatprep.subr.mxu0 0.0
          %2721 = vmatpush1.msra.mxu0 0.0
          %2722 = vmatprep.subr.mxu0 0.0
          %2723 = vmatpush1.msra.mxu0 0.0
          %2724 = vmatprep.subr.mxu0 0.0
          %2725 = vmatpush1.msra.mxu0 0.0
          %2726 = vmatprep.subr.mxu0 0.0
          %2727 = vmatpush1.msra.mxu0 0.0
          %2728 = vmatprep.subr.mxu0 0.0
          %2729 = vmatpush1.msra.mxu0 0.0
          %2730 = vmatprep.subr.mxu0 0.0
          %2731 = vmatpush1.msra.mxu0 0.0
          %2732 = vmatprep.subr.mxu0 0.0
          %2733 = vmatpush1.msra.mxu0 0.0
          %2734 = vmatprep.subr.mxu0 0.0
          %2735 = vmatpush1.msra.mxu0 0.0
          %2736 = vmatprep.subr.mxu0 0.0
          %2737 = vmatpush1.msra.mxu0 0.0
          %2738 = vmatprep.subr.mxu0 0.0
          %2739 = vmatpush1.msra.mxu0 0.0
          %2740 = vmatprep.subr.mxu0 0.0
          %2741 = vmatpush1.msra.mxu0 0.0
          %2742 = vmatprep.subr.mxu0 0.0
          %2743 = vmatpush1.msra.mxu0 0.0
          %2744 = vmatprep.subr.mxu0 0.0
          %2745 = vmatpush1.msra.mxu0 0.0
          %2746 = vmatprep.subr.mxu0 0.0
          %2747 = vmatpush1.msra.mxu0 0.0
          %2748 = vmatprep.subr.mxu0 0.0
          %2749 = vmatpush1.msra.mxu0 0.0
          %2750 = vmatprep.subr.mxu0 0.0
          %2751 = vmatpush1.msra.mxu0 0.0
          %2752 = vmatprep.subr.mxu0 0.0
          %2753 = vmatpush1.msra.mxu0 0.0
          %2754 = vmatprep.subr.mxu0 0.0
          %2755 = vmatpush1.msra.mxu0 0.0
          %2756 = vmatprep.subr.mxu0 0.0
          %2757 = vmatpush1.msra.mxu0 0.0
          %2758 = vmatprep.subr.mxu0 0.0
          %2759 = vmatpush1.msra.mxu0 0.0
          %2760 = vmatprep.mubr.f32.mxu0 0.0
          %2761 = vmatmul.mubr.f32.gmra.mrb[0].mxu0 %v2694
          %v2762 = vpop.f32.mrb[0].mxu0
          %v2763 = vadd.f32 %v2691, %v2762
          %v2764 = vpop.f32.mrb[0].mxu0
          %2765 = vdwg.mxu0
          %v2766 = vadd.f32 %v2679, %v2763
          %v2767 = vxor.u32 %v2766, 2147483648
          %v2768 = vmul.f32 %v2767, 1.442695
          %v2769 = vpow.pop %v2768
          %v2770 = vadd.f32 %v2769, 1.0
          %v2771 = vrcp.pop %v2770
          %v2772 = vmul.f32 1.0, %v2771
          %2774 = vrot.lane.b32.xlu0 %v2763, 64
          %v2775 = vpop.permute.xlu0 %2774
          %v2777 = vmul.f32 %v2772, %v2775
          %2779 = vrot.lane.b32.xlu0 %v2777, 64
          %v2780 = vpop.permute.xlu0 %2779
          %v2782 = vadd.f32 %v2679, %v2780
          %v2783 = vtanh.pop %v2782
          %v2784 = vsub.f32 1.0, %v2772
          %2786 = vrot.lane.b32.xlu0 %v2783, 96
          %v2787 = vpop.permute.xlu0 %2786
          %v2789 = vmul.f32 %v2784, %v2787
          %2790 = vrot.lane.b32.xlu0 %v2222, 32
          %v2791 = vpop.permute.xlu0 %2790
          %v2793 = vmul.f32 %v2772, %v2791
          %v2794 = vadd.f32 %v2789, %v2793
          %v2795 = vld [vmem:[#allocation18] sm:$0x1]
          %v2796 = vld [vmem:[#allocation20] sm:$0x1]
          %2798 = vrot.lane.b32.xlu0 %v2794, 96
          %v2799 = vpop.permute.xlu0 %2798
          %v2801 = vsel %vm1125, %v2799, 0.0
          %2802 = vadd.xlane.f32.xlu0 %v2801
          %v2803 = vpop.xlane.xlu0 %2802
          %v2804 = vmul.f32 %v2803, %v1809
          %v2805 = vsub.f32 %v2794, %v2804
          %v2806 = vmul.f32 %v2805, %v2805
          %2808 = vrot.lane.b32.xlu0 %v2806, 96
          %v2809 = vpop.permute.xlu0 %2808
          %v2811 = vsel %vm1125, %v2809, 0.0
          %2812 = vadd.xlane.f32.xlu0 %v2811
          %v2813 = vpop.xlane.xlu0 %2812
          %v2814 = vmul.f32 %v2813, %v1809
          %v2815 = vadd.f32 %v2814, 1e-05
          %v2816 = vrsqrt.pop %v2815
          %v2817 = vmul.f32 %v2805, %v2816
          %v2819 = vlaneseq
          %v2820 = vshrl.u32 %v2819, 7
          %v2821 = vsub.s32 0, %v2820
          %v2822 = vrot.slane %v2795, %v2821
          %2823 = vrot.lane.b32.xlu0 %v2822, 32
          %v2824 = vpop.permute.xlu0 %2823
          %v2826 = vmul.f32 %v2817, %v2824
          %v2828 = vlaneseq
          %v2829 = vshrl.u32 %v2828, 7
          %v2830 = vsub.s32 0, %v2829
          %v2831 = vrot.slane %v2796, %v2830
          %2832 = vrot.lane.b32.xlu0 %v2831, 32
          %v2833 = vpop.permute.xlu0 %2832
          %v2835 = vadd.f32 %v2826, %v2833
          %v2836 = vld [vmem:[#allocation21] sm:$0xff]
          %v2837 = vld [vmem:[#allocation21 + $0x8] sm:$0xff]
          %v2838 = vld [vmem:[#allocation21 + $0x10] sm:$0xff]
          %v2839 = vld [vmem:[#allocation21 + $0x18] sm:$0xff]
          %v2840 = vld [vmem:[#allocation23] sm:$0x1]
          %v2842 = vlaneseq
          %v2843 = vshrl.u32 %v2842, 7
          %v2844 = vsub.s32 0, %v2843
          %v2845 = vrot.slane %v2840, %v2844
          %2848 = vrot.lane.b32.xlu0 %v2835, 96
          %v2849 = vpop.permute.xlu0 %2848
          %v2850 = vsel %vm1125, %v2849, 0
          %2852 = vmatprep.subr.mxu0 0.0
          %2853 = vmatpush1.msra.mxu0 %v2836
          %2854 = vmatprep.subr.mxu0 0.0
          %2855 = vmatpush1.msra.mxu0 %v2837
          %2856 = vmatprep.subr.mxu0 0.0
          %2857 = vmatpush1.msra.mxu0 %v2838
          %2858 = vmatprep.subr.mxu0 0.0
          %2859 = vmatpush1.msra.mxu0 %v2839
          %2860 = vmatprep.subr.mxu0 0.0
          %2861 = vmatpush1.msra.mxu0 0.0
          %2862 = vmatprep.subr.mxu0 0.0
          %2863 = vmatpush1.msra.mxu0 0.0
          %2864 = vmatprep.subr.mxu0 0.0
          %2865 = vmatpush1.msra.mxu0 0.0
          %2866 = vmatprep.subr.mxu0 0.0
          %2867 = vmatpush1.msra.mxu0 0.0
          %2868 = vmatprep.subr.mxu0 0.0
          %2869 = vmatpush1.msra.mxu0 0.0
          %2870 = vmatprep.subr.mxu0 0.0
          %2871 = vmatpush1.msra.mxu0 0.0
          %2872 = vmatprep.subr.mxu0 0.0
          %2873 = vmatpush1.msra.mxu0 0.0
          %2874 = vmatprep.subr.mxu0 0.0
          %2875 = vmatpush1.msra.mxu0 0.0
          %2876 = vmatprep.subr.mxu0 0.0
          %2877 = vmatpush1.msra.mxu0 0.0
          %2878 = vmatprep.subr.mxu0 0.0
          %2879 = vmatpush1.msra.mxu0 0.0
          %2880 = vmatprep.subr.mxu0 0.0
          %2881 = vmatpush1.msra.mxu0 0.0
          %2882 = vmatprep.subr.mxu0 0.0
          %2883 = vmatpush1.msra.mxu0 0.0
          %2884 = vmatprep.subr.mxu0 0.0
          %2885 = vmatpush1.msra.mxu0 0.0
          %2886 = vmatprep.subr.mxu0 0.0
          %2887 = vmatpush1.msra.mxu0 0.0
          %2888 = vmatprep.subr.mxu0 0.0
          %2889 = vmatpush1.msra.mxu0 0.0
          %2890 = vmatprep.subr.mxu0 0.0
          %2891 = vmatpush1.msra.mxu0 0.0
          %2892 = vmatprep.subr.mxu0 0.0
          %2893 = vmatpush1.msra.mxu0 0.0
          %2894 = vmatprep.subr.mxu0 0.0
          %2895 = vmatpush1.msra.mxu0 0.0
          %2896 = vmatprep.subr.mxu0 0.0
          %2897 = vmatpush1.msra.mxu0 0.0
          %2898 = vmatprep.subr.mxu0 0.0
          %2899 = vmatpush1.msra.mxu0 0.0
          %2900 = vmatprep.subr.mxu0 0.0
          %2901 = vmatpush1.msra.mxu0 0.0
          %2902 = vmatprep.subr.mxu0 0.0
          %2903 = vmatpush1.msra.mxu0 0.0
          %2904 = vmatprep.subr.mxu0 0.0
          %2905 = vmatpush1.msra.mxu0 0.0
          %2906 = vmatprep.subr.mxu0 0.0
          %2907 = vmatpush1.msra.mxu0 0.0
          %2908 = vmatprep.subr.mxu0 0.0
          %2909 = vmatpush1.msra.mxu0 0.0
          %2910 = vmatprep.subr.mxu0 0.0
          %2911 = vmatpush1.msra.mxu0 0.0
          %2912 = vmatprep.subr.mxu0 0.0
          %2913 = vmatpush1.msra.mxu0 0.0
          %2914 = vmatprep.subr.mxu0 0.0
          %2915 = vmatpush1.msra.mxu0 0.0
          %2916 = vmatprep.mubr.f32.mxu0 0.0
          %2917 = vmatmul.mubr.f32.gmra.mrb[0].mxu0 %v2850
          %v2918 = vpop.f32.mrb[0].mxu0
          %v2919 = vadd.f32 %v2845, %v2918
          %v2920 = vpop.f32.mrb[0].mxu0
          %2921 = vdwg.mxu0
          %v2922 = vmax.f32 %v2919, 0.0
          %v2923 = vld [vmem:[#allocation24] sm:$0xff]
          %v2924 = vld [vmem:[#allocation24 + $0x8] sm:$0xff]
          %v2925 = vld [vmem:[#allocation24 + $0x10] sm:$0xff]
          %v2926 = vld [vmem:[#allocation24 + $0x18] sm:$0xff]
          %v2927 = vld [vmem:[#allocation26] sm:$0x1]
          %v2929 = vlaneseq
          %v2930 = vshrl.u32 %v2929, 7
          %v2931 = vsub.s32 0, %v2930
          %v2932 = vrot.slane %v2927, %v2931
          %v2935 = vsel %vm1125, %v2922, 0
          %2937 = vmatprep.subr.mxu0 0.0
          %2938 = vmatpush1.msra.mxu0 %v2923
          %2939 = vmatprep.subr.mxu0 0.0
          %2940 = vmatpush1.msra.mxu0 %v2924
          %2941 = vmatprep.subr.mxu0 0.0
          %2942 = vmatpush1.msra.mxu0 %v2925
          %2943 = vmatprep.subr.mxu0 0.0
          %2944 = vmatpush1.msra.mxu0 %v2926
          %2945 = vmatprep.subr.mxu0 0.0
          %2946 = vmatpush1.msra.mxu0 0.0
          %2947 = vmatprep.subr.mxu0 0.0
          %2948 = vmatpush1.msra.mxu0 0.0
          %2949 = vmatprep.subr.mxu0 0.0
          %2950 = vmatpush1.msra.mxu0 0.0
          %2951 = vmatprep.subr.mxu0 0.0
          %2952 = vmatpush1.msra.mxu0 0.0
          %2953 = vmatprep.subr.mxu0 0.0
          %2954 = vmatpush1.msra.mxu0 0.0
          %2955 = vmatprep.subr.mxu0 0.0
          %2956 = vmatpush1.msra.mxu0 0.0
          %2957 = vmatprep.subr.mxu0 0.0
          %2958 = vmatpush1.msra.mxu0 0.0
          %2959 = vmatprep.subr.mxu0 0.0
          %2960 = vmatpush1.msra.mxu0 0.0
          %2961 = vmatprep.subr.mxu0 0.0
          %2962 = vmatpush1.msra.mxu0 0.0
          %2963 = vmatprep.subr.mxu0 0.0
          %2964 = vmatpush1.msra.mxu0 0.0
          %2965 = vmatprep.subr.mxu0 0.0
          %2966 = vmatpush1.msra.mxu0 0.0
          %2967 = vmatprep.subr.mxu0 0.0
          %2968 = vmatpush1.msra.mxu0 0.0
          %2969 = vmatprep.subr.mxu0 0.0
          %2970 = vmatpush1.msra.mxu0 0.0
          %2971 = vmatprep.subr.mxu0 0.0
          %2972 = vmatpush1.msra.mxu0 0.0
          %2973 = vmatprep.subr.mxu0 0.0
          %2974 = vmatpush1.msra.mxu0 0.0
          %2975 = vmatprep.subr.mxu0 0.0
          %2976 = vmatpush1.msra.mxu0 0.0
          %2977 = vmatprep.subr.mxu0 0.0
          %2978 = vmatpush1.msra.mxu0 0.0
          %2979 = vmatprep.subr.mxu0 0.0
          %2980 = vmatpush1.msra.mxu0 0.0
          %2981 = vmatprep.subr.mxu0 0.0
          %2982 = vmatpush1.msra.mxu0 0.0
          %2983 = vmatprep.subr.mxu0 0.0
          %2984 = vmatpush1.msra.mxu0 0.0
          %2985 = vmatprep.subr.mxu0 0.0
          %2986 = vmatpush1.msra.mxu0 0.0
          %2987 = vmatprep.subr.mxu0 0.0
          %2988 = vmatpush1.msra.mxu0 0.0
          %2989 = vmatprep.subr.mxu0 0.0
          %2990 = vmatpush1.msra.mxu0 0.0
          %2991 = vmatprep.subr.mxu0 0.0
          %2992 = vmatpush1.msra.mxu0 0.0
          %2993 = vmatprep.subr.mxu0 0.0
          %2994 = vmatpush1.msra.mxu0 0.0
          %2995 = vmatprep.subr.mxu0 0.0
          %2996 = vmatpush1.msra.mxu0 0.0
          %2997 = vmatprep.subr.mxu0 0.0
          %2998 = vmatpush1.msra.mxu0 0.0
          %2999 = vmatprep.subr.mxu0 0.0
          %3000 = vmatpush1.msra.mxu0 0.0
          %3001 = vmatprep.mubr.f32.mxu0 0.0
          %3002 = vmatmul.mubr.f32.gmra.mrb[0].mxu0 %v2935
          %v3003 = vpop.f32.mrb[0].mxu0
          %v3004 = vadd.f32 %v2932, %v3003
          %v3005 = vpop.f32.mrb[0].mxu0
          %3006 = vdwg.mxu0
          %3008 = vrot.lane.b32.xlu0 %v3004, 32
          %v3009 = vpop.permute.xlu0 %3008
          %v3011 = vadd.f32 %v2794, %v3009
          %3013 = vrot.lane.b32.xlu0 %v3011, 96
          %v3014 = vpop.permute.xlu0 %3013
          %3016 = vst.msk [vmem:[#allocation2] sm:$0xff] %vm1125, %v3014
          %3017 = vst.msk [vmem:[%s1060] sm:$0xff] %vm1125, 0.0
        $region192: #{slot_video_forward.1} parent=127 // pred_fallthru
          _
        %v3018 = vld [vmem:[#allocation2] sm:$0xff]
        %v3019 = vld [vmem:[#allocation14] sm:$0x1]
        %v3020 = vld [vmem:[#allocation15] sm:$0x1]
        %v3021 = vsel %vm1125, %v3018, 0.0
        %3022 = vadd.xlane.f32.xlu0 %v3021
        %v3023 = vpop.xlane.xlu0 %3022
        %v3024 = vmul.f32 %v3023, %v1809
        %v3025 = vsub.f32 %v3018, %v3024
        %v3026 = vmul.f32 %v3025, %v3025
        %v3027 = vsel %vm1125, %v3026, 0.0
        %3028 = vadd.xlane.f32.xlu0 %v3027
        %v3029 = vpop.xlane.xlu0 %3028
        %v3030 = vmul.f32 %v3029, %v1809
        %v3031 = vadd.f32 %v3030, 1e-05
        %v3032 = vrsqrt.pop %v3031
        %v3033 = vmul.f32 %v3025, %v3032
        %v3035 = vlaneseq
        %v3036 = vshrl.u32 %v3035, 7
        %v3037 = vsub.s32 0, %v3036
        %v3038 = vrot.slane %v3019, %v3037
        %v3040 = vmul.f32 %v3033, %v3038
        %v3042 = vlaneseq
        %v3043 = vshrl.u32 %v3042, 7
        %v3044 = vsub.s32 0, %v3043
        %v3045 = vrot.slane %v3020, %v3044
        %v3047 = vadd.f32 %v3040, %v3045
        %v3048 = vld [vmem:[%s15] sm:$0xff]
        %v3049 = vld [vmem:[%s15 + $0x8] sm:$0xff]
        %v3050 = vld [vmem:[%s15 + $0x10] sm:$0xff]
        %v3051 = vld [vmem:[%s15 + $0x18] sm:$0xff]
        %v3052 = vld [vmem:[#allocation17] sm:$0x1]
        %v3054 = vlaneseq
        %v3055 = vshrl.u32 %v3054, 7
        %v3056 = vsub.s32 0, %v3055
        %v3057 = vrot.slane %v3052, %v3056
        %v3060 = vsel %vm1125, %v3047, 0
        %3062 = vmatprep.subr.mxu0 0.0
        %3063 = vmatpush1.msra.mxu0 %v3048
        %3064 = vmatprep.subr.mxu0 0.0
        %3065 = vmatpush1.msra.mxu0 %v3049
        %3066 = vmatprep.subr.mxu0 0.0
        %3067 = vmatpush1.msra.mxu0 %v3050
        %3068 = vmatprep.subr.mxu0 0.0
        %3069 = vmatpush1.msra.mxu0 %v3051
        %3070 = vmatprep.subr.mxu0 0.0
        %3071 = vmatpush1.msra.mxu0 0.0
        %3072 = vmatprep.subr.mxu0 0.0
        %3073 = vmatpush1.msra.mxu0 0.0
        %3074 = vmatprep.subr.mxu0 0.0
        %3075 = vmatpush1.msra.mxu0 0.0
        %3076 = vmatprep.subr.mxu0 0.0
        %3077 = vmatpush1.msra.mxu0 0.0
        %3078 = vmatprep.subr.mxu0 0.0
        %3079 = vmatpush1.msra.mxu0 0.0
        %3080 = vmatprep.subr.mxu0 0.0
        %3081 = vmatpush1.msra.mxu0 0.0
        %3082 = vmatprep.subr.mxu0 0.0
        %3083 = vmatpush1.msra.mxu0 0.0
        %3084 = vmatprep.subr.mxu0 0.0
        %3085 = vmatpush1.msra.mxu0 0.0
        %3086 = vmatprep.subr.mxu0 0.0
        %3087 = vmatpush1.msra.mxu0 0.0
        %3088 = vmatprep.subr.mxu0 0.0
        %3089 = vmatpush1.msra.mxu0 0.0
        %3090 = vmatprep.subr.mxu0 0.0
        %3091 = vmatpush1.msra.mxu0 0.0
        %3092 = vmatprep.subr.mxu0 0.0
        %3093 = vmatpush1.msra.mxu0 0.0
        %3094 = vmatprep.subr.mxu0 0.0
        %3095 = vmatpush1.msra.mxu0 0.0
        %3096 = vmatprep.subr.mxu0 0.0
        %3097 = vmatpush1.msra.mxu0 0.0
        %3098 = vmatprep.subr.mxu0 0.0
        %3099 = vmatpush1.msra.mxu0 0.0
        %3100 = vmatprep.subr.mxu0 0.0
        %3101 = vmatpush1.msra.mxu0 0.0
        %3102 = vmatprep.subr.mxu0 0.0
        %3103 = vmatpush1.msra.mxu0 0.0
        %3104 = vmatprep.subr.mxu0 0.0
        %3105 = vmatpush1.msra.mxu0 0.0
        %3106 = vmatprep.subr.mxu0 0.0
        %3107 = vmatpush1.msra.mxu0 0.0
        %3108 = vmatprep.subr.mxu0 0.0
        %3109 = vmatpush1.msra.mxu0 0.0
        %3110 = vmatprep.subr.mxu0 0.0
        %3111 = vmatpush1.msra.mxu0 0.0
        %3112 = vmatprep.subr.mxu0 0.0
        %3113 = vmatpush1.msra.mxu0 0.0
        %3114 = vmatprep.subr.mxu0 0.0
        %3115 = vmatpush1.msra.mxu0 0.0
        %3116 = vmatprep.subr.mxu0 0.0
        %3117 = vmatpush1.msra.mxu0 0.0
        %3118 = vmatprep.subr.mxu0 0.0
        %3119 = vmatpush1.msra.mxu0 0.0
        %3120 = vmatprep.subr.mxu0 0.0
        %3121 = vmatpush1.msra.mxu0 0.0
        %3122 = vmatprep.subr.mxu0 0.0
        %3123 = vmatpush1.msra.mxu0 0.0
        %3124 = vmatprep.subr.mxu0 0.0
        %3125 = vmatpush1.msra.mxu0 0.0
        %3126 = vmatprep.mubr.f32.mxu0 0.0
        %3127 = vmatmul.mubr.f32.gmra.mrb[0].mxu0 %v3060
        %v3128 = vpop.f32.mrb[0].mxu0
        %v3129 = vadd.f32 %v3057, %v3128
        %v3130 = vpop.f32.mrb[0].mxu0
        %3131 = vdwg.mxu0
        %v3133 = vsel %vm1125, %v3129, 0
        %v3136 = vsel %vm1125, %v2140, 0
        %v3139 = vsel %vm1125, %v2145, 0
        %v3142 = vsel %vm1125, %v2150, 0
        %v3145 = vsel %vm1125, %v2155, 0
        %v3148 = vsel %vm1125, %v2160, 0
        %v3151 = vsel %vm1125, %v2165, 0
        %v3154 = vsel %vm1125, %v2170, 0
        %v3157 = vsel %vm1125, %v2175, 0
        %v3160 = vsel %vm1125, %v2180, 0
        %v3163 = vsel %vm1125, %v2185, 0
        %v3166 = vsel %vm1125, %v2190, 0
        %v3169 = vsel %vm1125, %v2195, 0
        %v3172 = vsel %vm1125, %v2200, 0
        %v3175 = vsel %vm1125, %v2205, 0
        %v3178 = vsel %vm1125, %v2210, 0
        %v3181 = vsel %vm1125, %v2215, 0
        %3183 = vmatprep.subr.mxu0 0.0
        %3184 = vmatpush1.xpose.msra.mxu0 %v3136
        %3185 = vmatprep.subr.mxu0 0.0
        %3186 = vmatpush1.xpose.msra.mxu0 %v3139
        %3187 = vmatprep.subr.mxu0 0.0
        %3188 = vmatpush1.xpose.msra.mxu0 %v3142
        %3189 = vmatprep.subr.mxu0 0.0
        %3190 = vmatpush1.xpose.msra.mxu0 %v3145
        %3191 = vmatprep.subr.mxu0 0.0
        %3192 = vmatpush1.xpose.msra.mxu0 %v3148
        %3193 = vmatprep.subr.mxu0 0.0
        %3194 = vmatpush1.xpose.msra.mxu0 %v3151
        %3195 = vmatprep.subr.mxu0 0.0
        %3196 = vmatpush1.xpose.msra.mxu0 %v3154
        %3197 = vmatprep.subr.mxu0 0.0
        %3198 = vmatpush1.xpose.msra.mxu0 %v3157
        %3199 = vmatprep.subr.mxu0 0.0
        %3200 = vmatpush1.xpose.msra.mxu0 %v3160
        %3201 = vmatprep.subr.mxu0 0.0
        %3202 = vmatpush1.xpose.msra.mxu0 %v3163
        %3203 = vmatprep.subr.mxu0 0.0
        %3204 = vmatpush1.xpose.msra.mxu0 %v3166
        %3205 = vmatprep.subr.mxu0 0.0
        %3206 = vmatpush1.xpose.msra.mxu0 %v3169
        %3207 = vmatprep.subr.mxu0 0.0
        %3208 = vmatpush1.xpose.msra.mxu0 %v3172
        %3209 = vmatprep.subr.mxu0 0.0
        %3210 = vmatpush1.xpose.msra.mxu0 %v3175
        %3211 = vmatprep.subr.mxu0 0.0
        %3212 = vmatpush1.xpose.msra.mxu0 %v3178
        %3213 = vmatprep.subr.mxu0 0.0
        %3214 = vmatpush1.xpose.msra.mxu0 %v3181
        %3215 = vmatprep.subr.mxu0 0.0
        %3216 = vmatpush1.xpose.msra.mxu0 0.0
        %3217 = vmatprep.subr.mxu0 0.0
        %3218 = vmatpush1.xpose.msra.mxu0 0.0
        %3219 = vmatprep.subr.mxu0 0.0
        %3220 = vmatpush1.xpose.msra.mxu0 0.0
        %3221 = vmatprep.subr.mxu0 0.0
        %3222 = vmatpush1.xpose.msra.mxu0 0.0
        %3223 = vmatprep.subr.mxu0 0.0
        %3224 = vmatpush1.xpose.msra.mxu0 0.0
        %3225 = vmatprep.subr.mxu0 0.0
        %3226 = vmatpush1.xpose.msra.mxu0 0.0
        %3227 = vmatprep.subr.mxu0 0.0
        %3228 = vmatpush1.xpose.msra.mxu0 0.0
        %3229 = vmatprep.subr.mxu0 0.0
        %3230 = vmatpush1.xpose.msra.mxu0 0.0
        %3231 = vmatprep.subr.mxu0 0.0
        %3232 = vmatpush1.xpose.msra.mxu0 0.0
        %3233 = vmatprep.subr.mxu0 0.0
        %3234 = vmatpush1.xpose.msra.mxu0 0.0
        %3235 = vmatprep.subr.mxu0 0.0
        %3236 = vmatpush1.xpose.msra.mxu0 0.0
        %3237 = vmatprep.subr.mxu0 0.0
        %3238 = vmatpush1.xpose.msra.mxu0 0.0
        %3239 = vmatprep.subr.mxu0 0.0
        %3240 = vmatpush1.xpose.msra.mxu0 0.0
        %3241 = vmatprep.subr.mxu0 0.0
        %3242 = vmatpush1.xpose.msra.mxu0 0.0
        %3243 = vmatprep.subr.mxu0 0.0
        %3244 = vmatpush1.xpose.msra.mxu0 0.0
        %3245 = vmatprep.subr.mxu0 0.0
        %3246 = vmatpush1.xpose.msra.mxu0 0.0
        %3247 = vmatprep.mubr.f32.mxu0 0.0
        %3248 = vmatmul.mubr.f32.gmra.mrb[0].mxu0 %v3133
        %v3249 = vpop.f32.mrb[0].mxu0
        %v3250 = vadd.f32 0.0, %v3249
        %v3251 = vpop.f32.mrb[0].mxu0
        %3252 = vdwg.mxu0
        %v3253 = vmul.f32 %v3250, 0.17677669
        %v3254 = vrot.slane %v3253, 4
        %v3255 = vmax.f32 %v3253, %v3254
        %v3256 = vrot.slane %v3255, 2
        %v3257 = vmax.f32 %v3255, %v3256
        %v3258 = vrot.slane %v3257, 1
        %v3259 = vmax.f32 %v3257, %v3258
        %v3260 = vsub.f32 %v3253, %v3259
        %v3261 = vmul.f32 %v3260, 1.442695
        %v3262 = vpow.pop %v3261
        %v3263 = vrot.slane %v3262, 4
        %v3264 = vadd.f32 %v3262, %v3263
        %v3265 = vrot.slane %v3264, 2
        %v3266 = vadd.f32 %v3264, %v3265
        %v3267 = vrot.slane %v3266, 1
        %v3268 = vadd.f32 %v3266, %v3267
        %v3269 = vrcp.pop %v3268
        %v3270 = vmul.f32 %v3262, %v3269
        %v3271 = vadd.f32 %v3270, 1e-08
        %3272 = vadd.xlane.f32.xlu0 %v3271
        %v3273 = vpop.xlane.xlu0 %3272
        %v3274 = vrcp.pop %v3273
        %v3275 = vmul.f32 %v3271, %v3274
        %3276 = vrot.lane.b32.xlu0 %v2140, 96
        %v3277 = vpop.permute.xlu0 %3276
        %3278 = vrot.lane.b32.xlu0 %v2145, 96
        %v3279 = vpop.permute.xlu0 %3278
        %3280 = vrot.lane.b32.xlu0 %v2150, 96
        %v3281 = vpop.permute.xlu0 %3280
        %3282 = vrot.lane.b32.xlu0 %v2155, 96
        %v3283 = vpop.permute.xlu0 %3282
        %3284 = vrot.lane.b32.xlu0 %v2160, 96
        %v3285 = vpop.permute.xlu0 %3284
        %3286 = vrot.lane.b32.xlu0 %v2165, 96
        %v3287 = vpop.permute.xlu0 %3286
        %3288 = vrot.lane.b32.xlu0 %v2170, 96
        %v3289 = vpop.permute.xlu0 %3288
        %3290 = vrot.lane.b32.xlu0 %v2175, 96
        %v3291 = vpop.permute.xlu0 %3290
        %3292 = vrot.lane.b32.xlu0 %v2180, 96
        %v3293 = vpop.permute.xlu0 %3292
        %3294 = vrot.lane.b32.xlu0 %v2185, 96
        %v3295 = vpop.permute.xlu0 %3294
        %3296 = vrot.lane.b32.xlu0 %v2190, 96
        %v3297 = vpop.permute.xlu0 %3296
        %3298 = vrot.lane.b32.xlu0 %v2195, 96
        %v3299 = vpop.permute.xlu0 %3298
        %3300 = vrot.lane.b32.xlu0 %v2200, 96
        %v3301 = vpop.permute.xlu0 %3300
        %3302 = vrot.lane.b32.xlu0 %v2205, 96
        %v3303 = vpop.permute.xlu0 %3302
        %3304 = vrot.lane.b32.xlu0 %v2210, 96
        %v3305 = vpop.permute.xlu0 %3304
        %3306 = vrot.lane.b32.xlu0 %v2215, 96
        %v3307 = vpop.permute.xlu0 %3306
        %3324 = vmatprep.subr.mxu0 0.0
        %3325 = vmatpush1.msra.mxu0 %v3277
        %3326 = vmatprep.subr.mxu0 0.0
        %3327 = vmatpush1.msra.mxu0 %v3279
        %3328 = vmatprep.subr.mxu0 0.0
        %3329 = vmatpush1.msra.mxu0 %v3281
        %3330 = vmatprep.subr.mxu0 0.0
        %3331 = vmatpush1.msra.mxu0 %v3283
        %3332 = vmatprep.subr.mxu0 0.0
        %3333 = vmatpush1.msra.mxu0 %v3285
        %3334 = vmatprep.subr.mxu0 0.0
        %3335 = vmatpush1.msra.mxu0 %v3287
        %3336 = vmatprep.subr.mxu0 0.0
        %3337 = vmatpush1.msra.mxu0 %v3289
        %3338 = vmatprep.subr.mxu0 0.0
        %3339 = vmatpush1.msra.mxu0 %v3291
        %3340 = vmatprep.subr.mxu0 0.0
        %3341 = vmatpush1.msra.mxu0 %v3293
        %3342 = vmatprep.subr.mxu0 0.0
        %3343 = vmatpush1.msra.mxu0 %v3295
        %3344 = vmatprep.subr.mxu0 0.0
        %3345 = vmatpush1.msra.mxu0 %v3297
        %3346 = vmatprep.subr.mxu0 0.0
        %3347 = vmatpush1.msra.mxu0 %v3299
        %3348 = vmatprep.subr.mxu0 0.0
        %3349 = vmatpush1.msra.mxu0 %v3301
        %3350 = vmatprep.subr.mxu0 0.0
        %3351 = vmatpush1.msra.mxu0 %v3303
        %3352 = vmatprep.subr.mxu0 0.0
        %3353 = vmatpush1.msra.mxu0 %v3305
        %3354 = vmatprep.subr.mxu0 0.0
        %3355 = vmatpush1.msra.mxu0 %v3307
        %3356 = vmatprep.subr.mxu0 0.0
        %3357 = vmatpush1.msra.mxu0 0.0
        %3358 = vmatprep.subr.mxu0 0.0
        %3359 = vmatpush1.msra.mxu0 0.0
        %3360 = vmatprep.subr.mxu0 0.0
        %3361 = vmatpush1.msra.mxu0 0.0
        %3362 = vmatprep.subr.mxu0 0.0
        %3363 = vmatpush1.msra.mxu0 0.0
        %3364 = vmatprep.subr.mxu0 0.0
        %3365 = vmatpush1.msra.mxu0 0.0
        %3366 = vmatprep.subr.mxu0 0.0
        %3367 = vmatpush1.msra.mxu0 0.0
        %3368 = vmatprep.subr.mxu0 0.0
        %3369 = vmatpush1.msra.mxu0 0.0
        %3370 = vmatprep.subr.mxu0 0.0
        %3371 = vmatpush1.msra.mxu0 0.0
        %3372 = vmatprep.subr.mxu0 0.0
        %3373 = vmatpush1.msra.mxu0 0.0
        %3374 = vmatprep.subr.mxu0 0.0
        %3375 = vmatpush1.msra.mxu0 0.0
        %3376 = vmatprep.subr.mxu0 0.0
        %3377 = vmatpush1.msra.mxu0 0.0
        %3378 = vmatprep.subr.mxu0 0.0
        %3379 = vmatpush1.msra.mxu0 0.0
        %3380 = vmatprep.subr.mxu0 0.0
        %3381 = vmatpush1.msra.mxu0 0.0
        %3382 = vmatprep.subr.mxu0 0.0
        %3383 = vmatpush1.msra.mxu0 0.0
        %3384 = vmatprep.subr.mxu0 0.0
        %3385 = vmatpush1.msra.mxu0 0.0
        %3386 = vmatprep.subr.mxu0 0.0
        %3387 = vmatpush1.msra.mxu0 0.0
        %3388 = vmatprep.mubr.f32.mxu0 0.0
        %3389 = vmatmul.mubr.f32.gmra.mrb[0].mxu0 %v3275
        %v3390 = vpop.f32.mrb[0].mxu0
        %v3391 = vadd.f32 0.0, %v3390
        %v3392 = vpop.f32.mrb[0].mxu0
        %3393 = vdwg.mxu0
        %v3394 = vld [vmem:[%s17] sm:$0xff]
        %v3395 = vld [vmem:[%s17 + $0x8] sm:$0xff]
        %v3396 = vld [vmem:[%s17 + $0x10] sm:$0xff]
        %v3397 = vld [vmem:[%s17 + $0x18] sm:$0xff]
        %v3398 = vld [vmem:[%s18] sm:$0x1]
        %v3400 = vlaneseq
        %v3401 = vshrl.u32 %v3400, 7
        %v3402 = vsub.s32 0, %v3401
        %v3403 = vrot.slane %v3398, %v3402
        %v3406 = vsel %vm1125, %v3391, 0
        %3408 = vmatprep.subr.mxu0 0.0
        %3409 = vmatpush1.msra.mxu0 %v3394
        %3410 = vmatprep.subr.mxu0 0.0
        %3411 = vmatpush1.msra.mxu0 %v3395
        %3412 = vmatprep.subr.mxu0 0.0
        %3413 = vmatpush1.msra.mxu0 %v3396
        %3414 = vmatprep.subr.mxu0 0.0
        %3415 = vmatpush1.msra.mxu0 %v3397
        %3416 = vmatprep.subr.mxu0 0.0
        %3417 = vmatpush1.msra.mxu0 0.0
        %3418 = vmatprep.subr.mxu0 0.0
        %3419 = vmatpush1.msra.mxu0 0.0
        %3420 = vmatprep.subr.mxu0 0.0
        %3421 = vmatpush1.msra.mxu0 0.0
        %3422 = vmatprep.subr.mxu0 0.0
        %3423 = vmatpush1.msra.mxu0 0.0
        %3424 = vmatprep.subr.mxu0 0.0
        %3425 = vmatpush1.msra.mxu0 0.0
        %3426 = vmatprep.subr.mxu0 0.0
        %3427 = vmatpush1.msra.mxu0 0.0
        %3428 = vmatprep.subr.mxu0 0.0
        %3429 = vmatpush1.msra.mxu0 0.0
        %3430 = vmatprep.subr.mxu0 0.0
        %3431 = vmatpush1.msra.mxu0 0.0
        %3432 = vmatprep.subr.mxu0 0.0
        %3433 = vmatpush1.msra.mxu0 0.0
        %3434 = vmatprep.subr.mxu0 0.0
        %3435 = vmatpush1.msra.mxu0 0.0
        %3436 = vmatprep.subr.mxu0 0.0
        %3437 = vmatpush1.msra.mxu0 0.0
        %3438 = vmatprep.subr.mxu0 0.0
        %3439 = vmatpush1.msra.mxu0 0.0
        %3440 = vmatprep.subr.mxu0 0.0
        %3441 = vmatpush1.msra.mxu0 0.0
        %3442 = vmatprep.subr.mxu0 0.0
        %3443 = vmatpush1.msra.mxu0 0.0
        %3444 = vmatprep.subr.mxu0 0.0
        %3445 = vmatpush1.msra.mxu0 0.0
        %3446 = vmatprep.subr.mxu0 0.0
        %3447 = vmatpush1.msra.mxu0 0.0
        %3448 = vmatprep.subr.mxu0 0.0
        %3449 = vmatpush1.msra.mxu0 0.0
        %3450 = vmatprep.subr.mxu0 0.0
        %3451 = vmatpush1.msra.mxu0 0.0
        %3452 = vmatprep.subr.mxu0 0.0
        %3453 = vmatpush1.msra.mxu0 0.0
        %3454 = vmatprep.subr.mxu0 0.0
        %3455 = vmatpush1.msra.mxu0 0.0
        %3456 = vmatprep.subr.mxu0 0.0
        %3457 = vmatpush1.msra.mxu0 0.0
        %3458 = vmatprep.subr.mxu0 0.0
        %3459 = vmatpush1.msra.mxu0 0.0
        %3460 = vmatprep.subr.mxu0 0.0
        %3461 = vmatpush1.msra.mxu0 0.0
        %3462 = vmatprep.subr.mxu0 0.0
        %3463 = vmatpush1.msra.mxu0 0.0
        %3464 = vmatprep.subr.mxu0 0.0
        %3465 = vmatpush1.msra.mxu0 0.0
        %3466 = vmatprep.subr.mxu0 0.0
        %3467 = vmatpush1.msra.mxu0 0.0
        %3468 = vmatprep.subr.mxu0 0.0
        %3469 = vmatpush1.msra.mxu0 0.0
        %3470 = vmatprep.subr.mxu0 0.0
        %3471 = vmatpush1.msra.mxu0 0.0
        %3472 = vmatprep.mubr.f32.mxu0 0.0
        %3473 = vmatmul.mubr.f32.gmra.mrb[0].mxu0 %v3406
        %v3474 = vpop.f32.mrb[0].mxu0
        %v3475 = vadd.f32 %v3403, %v3474
        %v3476 = vpop.f32.mrb[0].mxu0
        %3477 = vdwg.mxu0
        %v3478 = vld [vmem:[%s19] sm:$0xff]
        %v3479 = vld [vmem:[%s19 + $0x8] sm:$0xff]
        %v3480 = vld [vmem:[%s19 + $0x10] sm:$0xff]
        %v3481 = vld [vmem:[%s19 + $0x18] sm:$0xff]
        %v3482 = vld [vmem:[%s20] sm:$0x1]
        %v3484 = vlaneseq
        %v3485 = vshrl.u32 %v3484, 7
        %v3486 = vsub.s32 0, %v3485
        %v3487 = vrot.slane %v3482, %v3486
        %v3490 = vsel %vm1125, %v3018, 0
        %3492 = vmatprep.subr.mxu0 0.0
        %3493 = vmatpush1.msra.mxu0 %v3478
        %3494 = vmatprep.subr.mxu0 0.0
        %3495 = vmatpush1.msra.mxu0 %v3479
        %3496 = vmatprep.subr.mxu0 0.0
        %3497 = vmatpush1.msra.mxu0 %v3480
        %3498 = vmatprep.subr.mxu0 0.0
        %3499 = vmatpush1.msra.mxu0 %v3481
        %3500 = vmatprep.subr.mxu0 0.0
        %3501 = vmatpush1.msra.mxu0 0.0
        %3502 = vmatprep.subr.mxu0 0.0
        %3503 = vmatpush1.msra.mxu0 0.0
        %3504 = vmatprep.subr.mxu0 0.0
        %3505 = vmatpush1.msra.mxu0 0.0
        %3506 = vmatprep.subr.mxu0 0.0
        %3507 = vmatpush1.msra.mxu0 0.0
        %3508 = vmatprep.subr.mxu0 0.0
        %3509 = vmatpush1.msra.mxu0 0.0
        %3510 = vmatprep.subr.mxu0 0.0
        %3511 = vmatpush1.msra.mxu0 0.0
        %3512 = vmatprep.subr.mxu0 0.0
        %3513 = vmatpush1.msra.mxu0 0.0
        %3514 = vmatprep.subr.mxu0 0.0
        %3515 = vmatpush1.msra.mxu0 0.0
        %3516 = vmatprep.subr.mxu0 0.0
        %3517 = vmatpush1.msra.mxu0 0.0
        %3518 = vmatprep.subr.mxu0 0.0
        %3519 = vmatpush1.msra.mxu0 0.0
        %3520 = vmatprep.subr.mxu0 0.0
        %3521 = vmatpush1.msra.mxu0 0.0
        %3522 = vmatprep.subr.mxu0 0.0
        %3523 = vmatpush1.msra.mxu0 0.0
        %3524 = vmatprep.subr.mxu0 0.0
        %3525 = vmatpush1.msra.mxu0 0.0
        %3526 = vmatprep.subr.mxu0 0.0
        %3527 = vmatpush1.msra.mxu0 0.0
        %3528 = vmatprep.subr.mxu0 0.0
        %3529 = vmatpush1.msra.mxu0 0.0
        %3530 = vmatprep.subr.mxu0 0.0
        %3531 = vmatpush1.msra.mxu0 0.0
        %3532 = vmatprep.subr.mxu0 0.0
        %3533 = vmatpush1.msra.mxu0 0.0
        %3534 = vmatprep.subr.mxu0 0.0
        %3535 = vmatpush1.msra.mxu0 0.0
        %3536 = vmatprep.subr.mxu0 0.0
        %3537 = vmatpush1.msra.mxu0 0.0
        %3538 = vmatprep.subr.mxu0 0.0
        %3539 = vmatpush1.msra.mxu0 0.0
        %3540 = vmatprep.subr.mxu0 0.0
        %3541 = vmatpush1.msra.mxu0 0.0
        %3542 = vmatprep.subr.mxu0 0.0
        %3543 = vmatpush1.msra.mxu0 0.0
        %3544 = vmatprep.subr.mxu0 0.0
        %3545 = vmatpush1.msra.mxu0 0.0
        %3546 = vmatprep.subr.mxu0 0.0
        %3547 = vmatpush1.msra.mxu0 0.0
        %3548 = vmatprep.subr.mxu0 0.0
        %3549 = vmatpush1.msra.mxu0 0.0
        %3550 = vmatprep.subr.mxu0 0.0
        %3551 = vmatpush1.msra.mxu0 0.0
        %3552 = vmatprep.subr.mxu0 0.0
        %3553 = vmatpush1.msra.mxu0 0.0
        %3554 = vmatprep.subr.mxu0 0.0
        %3555 = vmatpush1.msra.mxu0 0.0
        %3556 = vmatprep.mubr.f32.mxu0 0.0
        %3557 = vmatmul.mubr.f32.gmra.mrb[0].mxu0 %v3490
        %v3558 = vpop.f32.mrb[0].mxu0
        %v3559 = vadd.f32 %v3487, %v3558
        %v3560 = vpop.f32.mrb[0].mxu0
        %3561 = vdwg.mxu0
        %v3562 = vadd.f32 %v3475, %v3559
        %v3563 = vxor.u32 %v3562, 2147483648
        %v3564 = vmul.f32 %v3563, 1.442695
        %v3565 = vpow.pop %v3564
        %v3566 = vadd.f32 %v3565, 1.0
        %v3567 = vrcp.pop %v3566
        %v3568 = vmul.f32 1.0, %v3567
        %3570 = vrot.lane.b32.xlu0 %v3559, 64
        %v3571 = vpop.permute.xlu0 %3570
        %v3573 = vmul.f32 %v3568, %v3571
        %3575 = vrot.lane.b32.xlu0 %v3573, 64
        %v3576 = vpop.permute.xlu0 %3575
        %v3578 = vadd.f32 %v3475, %v3576
        %v3579 = vtanh.pop %v3578
        %v3580 = vsub.f32 1.0, %v3568
        %3582 = vrot.lane.b32.xlu0 %v3579, 96
        %v3583 = vpop.permute.xlu0 %3582
        %v3585 = vmul.f32 %v3580, %v3583
        %3586 = vrot.lane.b32.xlu0 %v3018, 32
        %v3587 = vpop.permute.xlu0 %3586
        %v3589 = vmul.f32 %v3568, %v3587
        %v3590 = vadd.f32 %v3585, %v3589
        %v3591 = vld [vmem:[#allocation18] sm:$0x1]
        %v3592 = vld [vmem:[#allocation20] sm:$0x1]
        %3594 = vrot.lane.b32.xlu0 %v3590, 96
        %v3595 = vpop.permute.xlu0 %3594
        %v3597 = vsel %vm1125, %v3595, 0.0
        %3598 = vadd.xlane.f32.xlu0 %v3597
        %v3599 = vpop.xlane.xlu0 %3598
        %v3600 = vmul.f32 %v3599, %v1809
        %v3601 = vsub.f32 %v3590, %v3600
        %v3602 = vmul.f32 %v3601, %v3601
        %3604 = vrot.lane.b32.xlu0 %v3602, 96
        %v3605 = vpop.permute.xlu0 %3604
        %v3607 = vsel %vm1125, %v3605, 0.0
        %3608 = vadd.xlane.f32.xlu0 %v3607
        %v3609 = vpop.xlane.xlu0 %3608
        %v3610 = vmul.f32 %v3609, %v1809
        %v3611 = vadd.f32 %v3610, 1e-05
        %v3612 = vrsqrt.pop %v3611
        %v3613 = vmul.f32 %v3601, %v3612
        %v3615 = vlaneseq
        %v3616 = vshrl.u32 %v3615, 7
        %v3617 = vsub.s32 0, %v3616
        %v3618 = vrot.slane %v3591, %v3617
        %3619 = vrot.lane.b32.xlu0 %v3618, 32
        %v3620 = vpop.permute.xlu0 %3619
        %v3622 = vmul.f32 %v3613, %v3620
        %v3624 = vlaneseq
        %v3625 = vshrl.u32 %v3624, 7
        %v3626 = vsub.s32 0, %v3625
        %v3627 = vrot.slane %v3592, %v3626
        %3628 = vrot.lane.b32.xlu0 %v3627, 32
        %v3629 = vpop.permute.xlu0 %3628
        %v3631 = vadd.f32 %v3622, %v3629
        %v3632 = vld [vmem:[#allocation21] sm:$0xff]
        %v3633 = vld [vmem:[#allocation21 + $0x8] sm:$0xff]
        %v3634 = vld [vmem:[#allocation21 + $0x10] sm:$0xff]
        %v3635 = vld [vmem:[#allocation21 + $0x18] sm:$0xff]
        %v3636 = vld [vmem:[#allocation23] sm:$0x1]
        %v3638 = vlaneseq
        %v3639 = vshrl.u32 %v3638, 7
        %v3640 = vsub.s32 0, %v3639
        %v3641 = vrot.slane %v3636, %v3640
        %3644 = vrot.lane.b32.xlu0 %v3631, 96
        %v3645 = vpop.permute.xlu0 %3644
        %v3646 = vsel %vm1125, %v3645, 0
        %3648 = vmatprep.subr.mxu0 0.0
        %3649 = vmatpush1.msra.mxu0 %v3632
        %3650 = vmatprep.subr.mxu0 0.0
        %3651 = vmatpush1.msra.mxu0 %v3633
        %3652 = vmatprep.subr.mxu0 0.0
        %3653 = vmatpush1.msra.mxu0 %v3634
        %3654 = vmatprep.subr.mxu0 0.0
        %3655 = vmatpush1.msra.mxu0 %v3635
        %3656 = vmatprep.subr.mxu0 0.0
        %3657 = vmatpush1.msra.mxu0 0.0
        %3658 = vmatprep.subr.mxu0 0.0
        %3659 = vmatpush1.msra.mxu0 0.0
        %3660 = vmatprep.subr.mxu0 0.0
        %3661 = vmatpush1.msra.mxu0 0.0
        %3662 = vmatprep.subr.mxu0 0.0
        %3663 = vmatpush1.msra.mxu0 0.0
        %3664 = vmatprep.subr.mxu0 0.0
        %3665 = vmatpush1.msra.mxu0 0.0
        %3666 = vmatprep.subr.mxu0 0.0
        %3667 = vmatpush1.msra.mxu0 0.0
        %3668 = vmatprep.subr.mxu0 0.0
        %3669 = vmatpush1.msra.mxu0 0.0
        %3670 = vmatprep.subr.mxu0 0.0
        %3671 = vmatpush1.msra.mxu0 0.0
        %3672 = vmatprep.subr.mxu0 0.0
        %3673 = vmatpush1.msra.mxu0 0.0
        %3674 = vmatprep.subr.mxu0 0.0
        %3675 = vmatpush1.msra.mxu0 0.0
        %3676 = vmatprep.subr.mxu0 0.0
        %3677 = vmatpush1.msra.mxu0 0.0
        %3678 = vmatprep.subr.mxu0 0.0
        %3679 = vmatpush1.msra.mxu0 0.0
        %3680 = vmatprep.subr.mxu0 0.0
        %3681 = vmatpush1.msra.mxu0 0.0
        %3682 = vmatprep.subr.mxu0 0.0
        %3683 = vmatpush1.msra.mxu0 0.0
        %3684 = vmatprep.subr.mxu0 0.0
        %3685 = vmatpush1.msra.mxu0 0.0
        %3686 = vmatprep.subr.mxu0 0.0
        %3687 = vmatpush1.msra.mxu0 0.0
        %3688 = vmatprep.subr.mxu0 0.0
        %3689 = vmatpush1.msra.mxu0 0.0
        %3690 = vmatprep.subr.mxu0 0.0
        %3691 = vmatpush1.msra.mxu0 0.0
        %3692 = vmatprep.subr.mxu0 0.0
        %3693 = vmatpush1.msra.mxu0 0.0
        %3694 = vmatprep.subr.mxu0 0.0
        %3695 = vmatpush1.msra.mxu0 0.0
        %3696 = vmatprep.subr.mxu0 0.0
        %3697 = vmatpush1.msra.mxu0 0.0
        %3698 = vmatprep.subr.mxu0 0.0
        %3699 = vmatpush1.msra.mxu0 0.0
        %3700 = vmatprep.subr.mxu0 0.0
        %3701 = vmatpush1.msra.mxu0 0.0
        %3702 = vmatprep.subr.mxu0 0.0
        %3703 = vmatpush1.msra.mxu0 0.0
        %3704 = vmatprep.subr.mxu0 0.0
        %3705 = vmatpush1.msra.mxu0 0.0
        %3706 = vmatprep.subr.mxu0 0.0
        %3707 = vmatpush1.msra.mxu0 0.0
        %3708 = vmatprep.subr.mxu0 0.0
        %3709 = vmatpush1.msra.mxu0 0.0
        %3710 = vmatprep.subr.mxu0 0.0
        %3711 = vmatpush1.msra.mxu0 0.0
        %3712 = vmatprep.mubr.f32.mxu0 0.0
        %3713 = vmatmul.mubr.f32.gmra.mrb[0].mxu0 %v3646
        %v3714 = vpop.f32.mrb[0].mxu0
        %v3715 = vadd.f32 %v3641, %v3714
        %v3716 = vpop.f32.mrb[0].mxu0
        %3717 = vdwg.mxu0
        %v3718 = vmax.f32 %v3715, 0.0
        %v3719 = vld [vmem:[#allocation24] sm:$0xff]
        %v3720 = vld [vmem:[#allocation24 + $0x8] sm:$0xff]
        %v3721 = vld [vmem:[#allocation24 + $0x10] sm:$0xff]
        %v3722 = vld [vmem:[#allocation24 + $0x18] sm:$0xff]
        %v3723 = vld [vmem:[#allocation26] sm:$0x1]
        %v3725 = vlaneseq
        %v3726 = vshrl.u32 %v3725, 7
        %v3727 = vsub.s32 0, %v3726
        %v3728 = vrot.slane %v3723, %v3727
        %v3731 = vsel %vm1125, %v3718, 0
        %3733 = vmatprep.subr.mxu0 0.0
        %3734 = vmatpush1.msra.mxu0 %v3719
        %3735 = vmatprep.subr.mxu0 0.0
        %3736 = vmatpush1.msra.mxu0 %v3720
        %3737 = vmatprep.subr.mxu0 0.0
        %3738 = vmatpush1.msra.mxu0 %v3721
        %3739 = vmatprep.subr.mxu0 0.0
        %3740 = vmatpush1.msra.mxu0 %v3722
        %3741 = vmatprep.subr.mxu0 0.0
        %3742 = vmatpush1.msra.mxu0 0.0
        %3743 = vmatprep.subr.mxu0 0.0
        %3744 = vmatpush1.msra.mxu0 0.0
        %3745 = vmatprep.subr.mxu0 0.0
        %3746 = vmatpush1.msra.mxu0 0.0
        %3747 = vmatprep.subr.mxu0 0.0
        %3748 = vmatpush1.msra.mxu0 0.0
        %3749 = vmatprep.subr.mxu0 0.0
        %3750 = vmatpush1.msra.mxu0 0.0
        %3751 = vmatprep.subr.mxu0 0.0
        %3752 = vmatpush1.msra.mxu0 0.0
        %3753 = vmatprep.subr.mxu0 0.0
        %3754 = vmatpush1.msra.mxu0 0.0
        %3755 = vmatprep.subr.mxu0 0.0
        %3756 = vmatpush1.msra.mxu0 0.0
        %3757 = vmatprep.subr.mxu0 0.0
        %3758 = vmatpush1.msra.mxu0 0.0
        %3759 = vmatprep.subr.mxu0 0.0
        %3760 = vmatpush1.msra.mxu0 0.0
        %3761 = vmatprep.subr.mxu0 0.0
        %3762 = vmatpush1.msra.mxu0 0.0
        %3763 = vmatprep.subr.mxu0 0.0
        %3764 = vmatpush1.msra.mxu0 0.0
        %3765 = vmatprep.subr.mxu0 0.0
        %3766 = vmatpush1.msra.mxu0 0.0
        %3767 = vmatprep.subr.mxu0 0.0
        %3768 = vmatpush1.msra.mxu0 0.0
        %3769 = vmatprep.subr.mxu0 0.0
        %3770 = vmatpush1.msra.mxu0 0.0
        %3771 = vmatprep.subr.mxu0 0.0
        %3772 = vmatpush1.msra.mxu0 0.0
        %3773 = vmatprep.subr.mxu0 0.0
        %3774 = vmatpush1.msra.mxu0 0.0
        %3775 = vmatprep.subr.mxu0 0.0
        %3776 = vmatpush1.msra.mxu0 0.0
        %3777 = vmatprep.subr.mxu0 0.0
        %3778 = vmatpush1.msra.mxu0 0.0
        %3779 = vmatprep.subr.mxu0 0.0
        %3780 = vmatpush1.msra.mxu0 0.0
        %3781 = vmatprep.subr.mxu0 0.0
        %3782 = vmatpush1.msra.mxu0 0.0
        %3783 = vmatprep.subr.mxu0 0.0
        %3784 = vmatpush1.msra.mxu0 0.0
        %3785 = vmatprep.subr.mxu0 0.0
        %3786 = vmatpush1.msra.mxu0 0.0
        %3787 = vmatprep.subr.mxu0 0.0
        %3788 = vmatpush1.msra.mxu0 0.0
        %3789 = vmatprep.subr.mxu0 0.0
        %3790 = vmatpush1.msra.mxu0 0.0
        %3791 = vmatprep.subr.mxu0 0.0
        %3792 = vmatpush1.msra.mxu0 0.0
        %3793 = vmatprep.subr.mxu0 0.0
        %3794 = vmatpush1.msra.mxu0 0.0
        %3795 = vmatprep.subr.mxu0 0.0
        %3796 = vmatpush1.msra.mxu0 0.0
        %3797 = vmatprep.mubr.f32.mxu0 0.0
        %3798 = vmatmul.mubr.f32.gmra.mrb[0].mxu0 %v3731
        %v3799 = vpop.f32.mrb[0].mxu0
        %v3800 = vadd.f32 %v3728, %v3799
        %v3801 = vpop.f32.mrb[0].mxu0
        %3802 = vdwg.mxu0
        %3804 = vrot.lane.b32.xlu0 %v3800, 32
        %v3805 = vpop.permute.xlu0 %3804
        %v3807 = vadd.f32 %v3590, %v3805
        %3809 = vrot.lane.b32.xlu0 %v3807, 96
        %v3810 = vpop.permute.xlu0 %3809
        %3812 = vst.msk [vmem:[#allocation2] sm:$0xff] %vm1125, %v3810
        %v3813 = vld [vmem:[%s1060] sm:$0xff]
        %v3814 = vadd.f32 %v3813, %v3810
        %3815 = vst.msk [vmem:[%s1060] sm:$0xff] %vm1125, %v3814
        %3816 = vst [vmem:[%s1067] sm:$0xff] %v3271
        %s3817 = sand.u32 %s648, 1
        %s3818 = scalar_lea.sflag [#allocation5], %s3817
        %s3819 = sand.u32 %s648, 1
        %s3820 = smul.addr %s3819, 8
        %s3821 = scalar_lea.vmem [#allocation27], %s3820
        %s3822 = sand.u32 %s676, 1
        %s3823 = scalar_lea.sflag [#allocation29], %s3822
        %s3824 = sand.u32 %s676, 1
        %s3825 = smul.addr %s3824, 8
        %s3826 = scalar_lea.vmem [#allocation28], %s3825
        // Predicated region
        $region193: #{slot_video_forward.1} parent=127 // pred_check
          %p3827 = pneg %p658
        $region194: #{slot_video_forward.1} parent=127 // pred_check_branch
          %3829 = sbr.rel (%p3827) target = $region196
        $region195: #{slot_video_forward.1} parent=127 // pred_region
          %s3831 = ssub.s32 128, 128
          %3832 = vsyncadd %s3818, %s3831
          %s3833 = smul.addr %s58, 128
          %s3834 = scalar_lea.hbm %s27, %s3833
          %s3836 = sshll.u32 %s3821, 4
          %s3837 = int_to_ptr.vmem [resolvable:$true] %s3836
          %3839 = dma.vmem_to_hbm [thread:$0]  %s3837, 128, %s3834, %s3818
        $region196: #{slot_video_forward.1} parent=127 // pred_fallthru
          _
        // Predicated region
        $region197: #{slot_video_forward.1} parent=127 // pred_check
          %p3840 = pneg %p686
        $region198: #{slot_video_forward.1} parent=127 // pred_check_branch
          %3842 = sbr.rel (%p3840) target = $region200
        $region199: #{slot_video_forward.1} parent=127 // pred_region
          %s3844 = ssub.s32 128, 128
          %3845 = vsyncadd %s3823, %s3844
          %s3846 = smul.addr %s58, 4
          %s3847 = sadd.s32 %s59, %s3846
          %s3848 = smul.addr %s3847, 128
          %s3849 = scalar_lea.hbm %s28, %s3848
          %s3851 = sshll.u32 %s3826, 4
          %s3852 = int_to_ptr.vmem [resolvable:$true] %s3851
          %3854 = dma.vmem_to_hbm [thread:$0]  %s3852, 128, %s3849, %s3823
        $region200: #{slot_video_forward.1} parent=127 // pred_fallthru
          _
      $region128: #{slot_video_forward.1} parent=5 // pred_fallthru
        _
      %p3855 = scmp.le.s32.totalorder 2, %s49
      // Predicated region
      $region201: #{slot_video_forward.1} parent=5 // pred_check
        %p3856 = pneg %p3855
      $region202: #{slot_video_forward.1} parent=5 // pred_check_branch
        %3858 = sbr.rel (%p3856) target = $region204
      $region203: #{slot_video_forward.1} parent=5 // pred_region
        %s3859 = ssub.s32 %s49, 2
        // Predicated region
        $region205: #{slot_video_forward.1} parent=203 // pred_check
          %p3860 = pneg %p664
        $region206: #{slot_video_forward.1} parent=203 // pred_check_branch
          %3862 = sbr.rel (%p3860) target = $region208
        $region207: #{slot_video_forward.1} parent=203 // pred_region
          %s3863 = sand.u32 %s649, 1
          %s3864 = scalar_lea.sflag [#allocation5], %s3863
          %s3865 = sand.u32 %s649, 1
          %s3866 = smul.addr %s3865, 8
          %s3867 = scalar_lea.vmem [#allocation27], %s3866
          %3868 = dma.done %s3864, 128
        $region208: #{slot_video_forward.1} parent=203 // pred_fallthru
          _
        // Predicated region
        $region209: #{slot_video_forward.1} parent=203 // pred_check
          %p3869 = pneg %p692
        $region210: #{slot_video_forward.1} parent=203 // pred_check_branch
          %3871 = sbr.rel (%p3869) target = $region212
        $region211: #{slot_video_forward.1} parent=203 // pred_region
          %s3872 = sand.u32 %s677, 1
          %s3873 = scalar_lea.sflag [#allocation29], %s3872
          %s3874 = sand.u32 %s677, 1
          %s3875 = smul.addr %s3874, 8
          %s3876 = scalar_lea.vmem [#allocation28], %s3875
          %3877 = dma.done %s3873, 128
        $region212: #{slot_video_forward.1} parent=203 // pred_fallthru
          _
      $region204: #{slot_video_forward.1} parent=5 // pred_fallthru
        _
    $region6: #{slot_video_forward.1} parent=1 // loop_footer
      %s53 = sadd.s32 1, %s49
    $region7: #{slot_video_forward.1} parent=1 // loop_footer_branch
      %48 = sbr.rel target = $region3
    $region8: #{slot_video_forward.1} parent=1 // loop_exit
      _
    %3878 = vsyncpa [#allocation4], 1
    %s3879 = scalar_lea.sflag [#allocation4], 1
    %3880 = vsyncpa %s3879, 1
    %3881 = vsyncpa [#allocation7], 1
    %3882 = vsyncpa [#allocation10], 1
    %3883 = vsyncpa [#allocation13], 1
    %3884 = vsyncpa [#allocation16], 1
    %3885 = vsyncpa [#allocation19], 1
    %3886 = vsyncpa [#allocation22], 1
    %3887 = vsyncpa [#allocation25], 1
    %3888 = vsyncpa [#allocation5], 1
    %s3889 = scalar_lea.sflag [#allocation5], 1
    %3890 = vsyncpa %s3889, 1
    %3891 = vsyncpa [#allocation29], 1
    %s3892 = scalar_lea.sflag [#allocation29], 1
    %3893 = vsyncpa %s3892, 1

</llo_original>
